<compile_context>
chip_gen: v7x
topology: tpu7x:2x2x1
jax: 0.10.0
libtpu: 0.0.40
codegen_flags: <defaults>
</compile_context>

<pallas_src>
import functools

import jax
import jax.numpy as jnp
from jax import lax
from jax.experimental import pallas as pl
from jax.experimental.pallas import tpu as pltpu

TAU = 2.0
V_TH = 1.0
V_TH_ATTN = 0.5
SCALE = 0.125
BN_EPS = 1e-5


def _lif_step(v_ref, x_pre, v_th):
    """One LIF step (tau=2, decay_input=True, hard reset to v_reset=0).

    Elementwise math in f32; returns spikes as bf16 (exact 0/1) ready for the MXU.
    """
    v = v_ref[...]
    h = v + (x_pre - v) * (1.0 / TAU)
    spike = h >= v_th
    v_ref[...] = jnp.where(spike, 0.0, h)
    return spike.astype(jnp.bfloat16)


def block_kernel(x_ref,
                 wqkv_ref, bqkv_ref, wp_ref, bp_ref,
                 w1_ref, b1_ref, w2_ref, b2_ref,
                 o_ref,
                 qv, kv, vv, av, pv, h1v, h2v,
                 *, TB, N, C, H):
    t = pl.program_id(1)

    # Reset membrane potentials at t == 0 (start of every batch tile).
    @pl.when(t == 0)
    def _():
        for ref in (qv, kv, vv, av, pv, h1v, h2v):
            ref[...] = jnp.zeros_like(ref)

    M = TB * N
    x = x_ref[...].reshape(M, C)                    # f32 activations
    xb = x.astype(jnp.bfloat16)

    # ------------------------- SSA -------------------------
    # Fused Q/K/V projection: one bf16 MXU matmul, f32 accumulation, folded-BN bias.
    qkv = jnp.dot(xb, wqkv_ref[...],
                  preferred_element_type=jnp.float32) + bqkv_ref[...]
    q_s = _lif_step(qv, qkv[:, :C], V_TH)           # (M, C) bf16 spikes
    k_s = _lif_step(kv, qkv[:, C:2 * C], V_TH)
    v_s = _lif_step(vv, qkv[:, 2 * C:], V_TH)

    # Channel layout is head-major (h * Ch + d), matching
    # reshape(T,B,N,H,Ch).permute(0,1,3,2,4) / .transpose(2,3).reshape(T,B,N,C).
    # Attention is batched over the batch tile via 3-D dot_general; only the fixed
    # per-head loop (num_heads = 8 in the model) remains.
    Ch = C // H
    q3 = q_s.reshape(TB, N, C)
    k3 = k_s.reshape(TB, N, C)
    v3 = v_s.reshape(TB, N, C)
    head_outs = []
    for h in range(H):
        sl = slice(h * Ch, (h + 1) * Ch)
        qh = q3[:, :, sl]                           # (TB, N, Ch) bf16
        kh = k3[:, :, sl]
        vh = v3[:, :, sl]
        attn = lax.dot_general(                     # (TB, N, N) f32
            qh, kh, (((2,), (2,)), ((0,), (0,))),
            preferred_element_type=jnp.float32) * SCALE
        head_outs.append(
            lax.dot_general(                        # (TB, N, Ch) f32
                attn.astype(jnp.bfloat16), vh,
                (((2,), (1,)), ((0,), (0,))),
                preferred_element_type=jnp.float32))
    attn_out = jnp.concatenate(head_outs, axis=-1).reshape(M, C)

    a_s = _lif_step(av, attn_out, V_TH_ATTN)
    p_pre = jnp.dot(a_s, wp_ref[...],
                    preferred_element_type=jnp.float32) + bp_ref[...]
    p_s = _lif_step(pv, p_pre, V_TH)

    x1 = x + p_s                                    # residual 1 (f32)

    # ------------------------- MLP -------------------------
    h_pre = jnp.dot(x1.astype(jnp.bfloat16), w1_ref[...],
                    preferred_element_type=jnp.float32) + b1_ref[...]
    h_s = _lif_step(h1v, h_pre, V_TH)
    y_pre = jnp.dot(h_s, w2_ref[...],
                    preferred_element_type=jnp.float32) + b2_ref[...]
    y_s = _lif_step(h2v, y_pre, V_TH)

    o_ref[...] = (x1 + y_s).reshape(1, TB, N, C)    # residual 2


def block_forward(x, params, *, batch_tile=None):
    T, B, N, C = x.shape
    H = params["num_heads"]
    HID = params["w1"].shape[1]
    TB = batch_tile or B
    assert B % TB == 0

    bf16 = jnp.bfloat16
    # Fuse Q/K/V weights into one (C, 3C) matrix; cast weights to bf16 (spike/MXU
    # operands); keep biases (added post-matmul) in f32.
    wqkv = jnp.concatenate(
        [params["wq"], params["wk"], params["wv"]], axis=1).astype(bf16)
    bqkv = jnp.concatenate([params["bq"], params["bk"], params["bv"]], axis=1)
    weights = [wqkv, bqkv,
               params["wp"].astype(bf16), params["bp"],
               params["w1"].astype(bf16), params["b1"],
               params["w2"].astype(bf16), params["b2"]]

    def w_spec(arr):
        nd = arr.ndim
        return pl.BlockSpec(arr.shape, lambda bt, t, _nd=nd: (0,) * _nd)

    in_specs = [pl.BlockSpec((1, TB, N, C), lambda bt, t: (t, bt, 0, 0))]
    in_specs += [w_spec(w) for w in weights]

    kern = functools.partial(block_kernel, TB=TB, N=N, C=C, H=H)
    return pl.pallas_call(
        kern,
        out_shape=jax.ShapeDtypeStruct((T, B, N, C), jnp.float32),
        grid_spec=pltpu.PrefetchScalarGridSpec(
            num_scalar_prefetch=0,
            # T is the innermost (fastest) grid axis so each batch tile sees
            # t = 0..T-1 in order; the batch-tile axis is independent ("parallel").
            grid=(B // TB, T),
            in_specs=in_specs,
            out_specs=pl.BlockSpec((1, TB, N, C), lambda bt, t: (t, bt, 0, 0)),
            scratch_shapes=[
                pltpu.VMEM((TB * N, C), jnp.float32),    # q LIF membrane
                pltpu.VMEM((TB * N, C), jnp.float32),    # k LIF membrane
                pltpu.VMEM((TB * N, C), jnp.float32),    # v LIF membrane
                pltpu.VMEM((TB * N, C), jnp.float32),    # attn LIF membrane
                pltpu.VMEM((TB * N, C), jnp.float32),    # proj LIF membrane
                pltpu.VMEM((TB * N, HID), jnp.float32),  # fc1 LIF membrane
                pltpu.VMEM((TB * N, C), jnp.float32),    # fc2 LIF membrane
            ],
        ),
        compiler_params=pltpu.CompilerParams(
            dimension_semantics=("parallel", "arbitrary"),
            vmem_limit_bytes=64 * 1024 * 1024),
    )(x, *weights)


# ---------------- parameter construction (deterministic, BN folded) ----------------
def make_params(key, dim, num_heads, mlp_ratio=4.0):
    hidden = int(dim * mlp_ratio)
    names_dims = [("q", dim, dim), ("k", dim, dim), ("v", dim, dim),
                  ("p", dim, dim), ("1", dim, hidden), ("2", hidden, dim)]
    params = {"num_heads": num_heads}
    keys = jax.random.split(key, 2 * len(names_dims))
    for i, (name, d_in, d_out) in enumerate(names_dims):
        w = 0.2 * jax.random.normal(keys[2 * i], (d_in, d_out), jnp.float32)
        b = 0.05 * jax.random.normal(keys[2 * i + 1], (d_out,), jnp.float32)
        # deterministic BN params (eval mode: running_mean=0, running_var=1)
        idx = jnp.arange(d_out, dtype=jnp.float32)
        gamma = 1.0 + 0.1 * jnp.sin(idx)
        beta = 0.02 * jnp.cos(idx)
        scale = gamma / jnp.sqrt(1.0 + BN_EPS)
        params["w" + name] = w * scale[None, :]
        params["b" + name] = ((b * scale) + beta).reshape(1, d_out)
    return params


# ---------------- pure-JAX reference (same math & same bf16 casts) ----------------
def _lif_seq_ref(x_pre, v_th):
    def step(v, xt):
        h = v + (xt - v) * (1.0 / TAU)
        s = h >= v_th
        return jnp.where(s, 0.0, h), s.astype(jnp.bfloat16)
    _, s = lax.scan(step, jnp.zeros_like(x_pre[0]), x_pre)
    return s


def block_ref(x, params):
    T, B, N, C = x.shape
    H = params["num_heads"]
    Ch = C // H
    bf16, f32 = jnp.bfloat16, jnp.float32
    xf = x.reshape(T, B * N, C)

    def lin(z, w, b):
        return jnp.einsum("tmc,cd->tmd", z.astype(bf16), w.astype(bf16),
                          preferred_element_type=f32) + b

    q = _lif_seq_ref(lin(xf, params["wq"], params["bq"]), V_TH)
    k = _lif_seq_ref(lin(xf, params["wk"], params["bk"]), V_TH)
    v = _lif_seq_ref(lin(xf, params["wv"], params["bv"]), V_TH)
    heads = lambda z: z.reshape(T, B, N, H, Ch)
    qh, kh, vh = heads(q), heads(k), heads(v)
    attn = jnp.einsum("tbnhd,tbmhd->tbhnm", qh, kh,
                      preferred_element_type=f32) * SCALE
    o = jnp.einsum("tbhnm,tbmhd->tbnhd", attn.astype(bf16), vh,
                   preferred_element_type=f32)
    o = o.reshape(T, B * N, C)
    a_s = _lif_seq_ref(o, V_TH_ATTN)
    p_s = _lif_seq_ref(lin(a_s, params["wp"], params["bp"]), V_TH)
    x1 = xf + p_s
    h_s = _lif_seq_ref(lin(x1, params["w1"], params["b1"]), V_TH)
    y_s = _lif_seq_ref(lin(h_s, params["w2"], params["b2"]), V_TH)
    return (x1 + y_s).reshape(T, B, N, C)


if __name__ == "__main__":
    T, B, N, C = 4, 2, 16, 128   # C=128 keeps stores lane-dense and slices aligned
    num_heads = 8

    key = jax.random.PRNGKey(0)
    kx, kp = jax.random.split(key)
    x = jax.random.normal(kx, (T, B, N, C), jnp.float32)
    params = make_params(kp, C, num_heads, mlp_ratio=4.0)

    out = block_forward(x, params, batch_tile=1)
    out = jax.block_until_ready(out)

    ref = jax.block_until_ready(block_ref(x, params))
    assert out.shape == (T, B, N, C)
    assert jnp.allclose(out, ref, atol=2e-3, rtol=1e-3), (
        float(jnp.max(jnp.abs(out - ref))))
    print("KERNEL_OK")
</pallas_src>

<mosaic_0001>
module attributes {stable_mosaic.version = 11 : i64} {
  func.func @block_kernel(%arg0: i32, %arg1: i32, %arg2: memref<1x1x16x128xf32, #tpu.memory_space<vmem>>, %arg3: memref<128x384xbf16, #tpu.memory_space<vmem>>, %arg4: memref<1x384xf32, #tpu.memory_space<vmem>>, %arg5: memref<128x128xbf16, #tpu.memory_space<vmem>>, %arg6: memref<1x128xf32, #tpu.memory_space<vmem>>, %arg7: memref<128x512xbf16, #tpu.memory_space<vmem>>, %arg8: memref<1x512xf32, #tpu.memory_space<vmem>>, %arg9: memref<512x128xbf16, #tpu.memory_space<vmem>>, %arg10: memref<1x128xf32, #tpu.memory_space<vmem>>, %arg11: memref<1x1x16x128xf32, #tpu.memory_space<vmem>>, %arg12: memref<16x128xf32, #tpu.memory_space<vmem>>, %arg13: memref<16x128xf32, #tpu.memory_space<vmem>>, %arg14: memref<16x128xf32, #tpu.memory_space<vmem>>, %arg15: memref<16x128xf32, #tpu.memory_space<vmem>>, %arg16: memref<16x128xf32, #tpu.memory_space<vmem>>, %arg17: memref<16x512xf32, #tpu.memory_space<vmem>>, %arg18: memref<16x128xf32, #tpu.memory_space<vmem>>) attributes {dimension_semantics = [#tpu.dimension_semantics<parallel>, #tpu.dimension_semantics<arbitrary>], iteration_bounds = array<i64: 2, 4>, scalar_prefetch = 0 : i64, scratch_operands = 7 : i64, tpu.core_type = #tpu.core_type<tc>, window_params = [{transform_indices = @transform_0, window_bounds = array<i64: 1, 1, 16, 128>}, {pipeline_mode = #tpu.pipeline_mode<synchronous>, transform_indices = @transform_1, window_bounds = array<i64: 128, 384>}, {pipeline_mode = #tpu.pipeline_mode<synchronous>, transform_indices = @transform_2, window_bounds = array<i64: 1, 384>}, {pipeline_mode = #tpu.pipeline_mode<synchronous>, transform_indices = @transform_3, window_bounds = array<i64: 128, 128>}, {pipeline_mode = #tpu.pipeline_mode<synchronous>, transform_indices = @transform_4, window_bounds = array<i64: 1, 128>}, {pipeline_mode = #tpu.pipeline_mode<synchronous>, transform_indices = @transform_5, window_bounds = array<i64: 128, 512>}, {pipeline_mode = #tpu.pipeline_mode<synchronous>, transform_indices = @transform_6, window_bounds = array<i64: 1, 512>}, {pipeline_mode = #tpu.pipeline_mode<synchronous>, transform_indices = @transform_7, window_bounds = array<i64: 512, 128>}, {pipeline_mode = #tpu.pipeline_mode<synchronous>, transform_indices = @transform_8, window_bounds = array<i64: 1, 128>}, {transform_indices = @transform_9, window_bounds = array<i64: 1, 1, 16, 128>}]} {
    %c0_i32 = arith.constant 0 : i32
    %0 = arith.cmpi eq, %arg1, %c0_i32 : i32
    %1 = arith.extui %0 : i1 to i32
    %c0_i32_0 = arith.constant 0 : i32
    %2 = arith.cmpi ne, %1, %c0_i32_0 : i32
    scf.if %2 {
      %cst_100 = arith.constant 0.000000e+00 : f32
      %196 = vector.broadcast %cst_100 : f32 to vector<16x128xf32>
      %c0_101 = arith.constant 0 : index
      %c0_102 = arith.constant 0 : index
      %197 = vector.load %arg12[%c0_101, %c0_102] : memref<16x128xf32, #tpu.memory_space<vmem>>, vector<16x128xf32>
      tpu.vector_store %arg12[%c0_101, %c0_102], %196 {strides = array<i32>} : memref<16x128xf32, #tpu.memory_space<vmem>>, vector<16x128xf32>,
      %cst_103 = arith.constant 0.000000e+00 : f32
      %198 = vector.broadcast %cst_103 : f32 to vector<16x128xf32>
      %c0_104 = arith.constant 0 : index
      %c0_105 = arith.constant 0 : index
      %199 = vector.load %arg13[%c0_104, %c0_105] : memref<16x128xf32, #tpu.memory_space<vmem>>, vector<16x128xf32>
      tpu.vector_store %arg13[%c0_104, %c0_105], %198 {strides = array<i32>} : memref<16x128xf32, #tpu.memory_space<vmem>>, vector<16x128xf32>,
      %cst_106 = arith.constant 0.000000e+00 : f32
      %200 = vector.broadcast %cst_106 : f32 to vector<16x128xf32>
      %c0_107 = arith.constant 0 : index
      %c0_108 = arith.constant 0 : index
      %201 = vector.load %arg14[%c0_107, %c0_108] : memref<16x128xf32, #tpu.memory_space<vmem>>, vector<16x128xf32>
      tpu.vector_store %arg14[%c0_107, %c0_108], %200 {strides = array<i32>} : memref<16x128xf32, #tpu.memory_space<vmem>>, vector<16x128xf32>,
      %cst_109 = arith.constant 0.000000e+00 : f32
      %202 = vector.broadcast %cst_109 : f32 to vector<16x128xf32>
      %c0_110 = arith.constant 0 : index
      %c0_111 = arith.constant 0 : index
      %203 = vector.load %arg15[%c0_110, %c0_111] : memref<16x128xf32, #tpu.memory_space<vmem>>, vector<16x128xf32>
      tpu.vector_store %arg15[%c0_110, %c0_111], %202 {strides = array<i32>} : memref<16x128xf32, #tpu.memory_space<vmem>>, vector<16x128xf32>,
      %cst_112 = arith.constant 0.000000e+00 : f32
      %204 = vector.broadcast %cst_112 : f32 to vector<16x128xf32>
      %c0_113 = arith.constant 0 : index
      %c0_114 = arith.constant 0 : index
      %205 = vector.load %arg16[%c0_113, %c0_114] : memref<16x128xf32, #tpu.memory_space<vmem>>, vector<16x128xf32>
      tpu.vector_store %arg16[%c0_113, %c0_114], %204 {strides = array<i32>} : memref<16x128xf32, #tpu.memory_space<vmem>>, vector<16x128xf32>,
      %cst_115 = arith.constant 0.000000e+00 : f32
      %206 = vector.broadcast %cst_115 : f32 to vector<16x512xf32>
      %c0_116 = arith.constant 0 : index
      %c0_117 = arith.constant 0 : index
      %207 = vector.load %arg17[%c0_116, %c0_117] : memref<16x512xf32, #tpu.memory_space<vmem>>, vector<16x512xf32>
      tpu.vector_store %arg17[%c0_116, %c0_117], %206 {strides = array<i32>} : memref<16x512xf32, #tpu.memory_space<vmem>>, vector<16x512xf32>,
      %cst_118 = arith.constant 0.000000e+00 : f32
      %208 = vector.broadcast %cst_118 : f32 to vector<16x128xf32>
      %c0_119 = arith.constant 0 : index
      %c0_120 = arith.constant 0 : index
      %209 = vector.load %arg18[%c0_119, %c0_120] : memref<16x128xf32, #tpu.memory_space<vmem>>, vector<16x128xf32>
      tpu.vector_store %arg18[%c0_119, %c0_120], %208 {strides = array<i32>} : memref<16x128xf32, #tpu.memory_space<vmem>>, vector<16x128xf32>,
    } else {
    }
    %c0 = arith.constant 0 : index
    %c0_1 = arith.constant 0 : index
    %c0_2 = arith.constant 0 : index
    %c0_3 = arith.constant 0 : index
    %3 = vector.load %arg2[%c0, %c0_1, %c0_2, %c0_3] : memref<1x1x16x128xf32, #tpu.memory_space<vmem>>, vector<1x1x16x128xf32>
    %4 = vector.shape_cast %3 : vector<1x1x16x128xf32> to vector<16x128xf32>
    %5 = arith.truncf %4 : vector<16x128xf32> to vector<16x128xbf16>
    %c0_4 = arith.constant 0 : index
    %c0_5 = arith.constant 0 : index
    %6 = vector.load %arg3[%c0_4, %c0_5] : memref<128x384xbf16, #tpu.memory_space<vmem>>, vector<128x384xbf16>
    %cst = arith.constant dense<0.000000e+00> : vector<16x384xf32>
    %7 = tpu.matmul %5, %6, %cst {dimension_numbers = #tpu.dot_dimension_numbers<[1], [0], [0], [1], [0, 0, 1, 1], [], []>} : vector<16x128xbf16>, vector<128x384xbf16>, vector<16x384xf32> -> vector<16x384xf32>
    %c0_6 = arith.constant 0 : index
    %c0_7 = arith.constant 0 : index
    %8 = vector.load %arg4[%c0_6, %c0_7] : memref<1x384xf32, #tpu.memory_space<vmem>>, vector<1x384xf32>
    %9 = vector.broadcast %8 : vector<1x384xf32> to vector<16x384xf32>
    %10 = arith.addf %7, %9 : vector<16x384xf32>
    %11 = vector.extract_strided_slice %10 {offsets = [0, 0], sizes = [16, 128], strides = [1, 1]} : vector<16x384xf32> to vector<16x128xf32>
    %c0_8 = arith.constant 0 : index
    %c0_9 = arith.constant 0 : index
    %12 = vector.load %arg12[%c0_8, %c0_9] : memref<16x128xf32, #tpu.memory_space<vmem>>, vector<16x128xf32>
    %13 = arith.subf %11, %12 : vector<16x128xf32>
    %cst_10 = arith.constant 5.000000e-01 : f32
    %14 = vector.broadcast %cst_10 : f32 to vector<16x128xf32>
    %15 = arith.mulf %13, %14 : vector<16x128xf32>
    %16 = arith.addf %12, %15 : vector<16x128xf32>
    %cst_11 = arith.constant 1.000000e+00 : f32
    %17 = vector.broadcast %cst_11 : f32 to vector<16x128xf32>
    %18 = arith.cmpf oge, %16, %17 : vector<16x128xf32>
    %cst_12 = arith.constant 0.000000e+00 : f32
    %19 = vector.broadcast %cst_12 : f32 to vector<16x128xf32>
    %20 = arith.select %18, %19, %16 : vector<16x128xi1>, vector<16x128xf32>
    %c0_13 = arith.constant 0 : index
    %c0_14 = arith.constant 0 : index
    %21 = vector.load %arg12[%c0_13, %c0_14] : memref<16x128xf32, #tpu.memory_space<vmem>>, vector<16x128xf32>
    tpu.vector_store %arg12[%c0_13, %c0_14], %20 {strides = array<i32>} : memref<16x128xf32, #tpu.memory_space<vmem>>, vector<16x128xf32>,
    %22 = arith.extui %18 : vector<16x128xi1> to vector<16x128xi32>
    %23 = arith.sitofp %22 : vector<16x128xi32> to vector<16x128xf32>
    %24 = arith.truncf %23 : vector<16x128xf32> to vector<16x128xbf16>
    %25 = vector.extract_strided_slice %10 {offsets = [0, 128], sizes = [16, 128], strides = [1, 1]} : vector<16x384xf32> to vector<16x128xf32>
    %c0_15 = arith.constant 0 : index
    %c0_16 = arith.constant 0 : index
    %26 = vector.load %arg13[%c0_15, %c0_16] : memref<16x128xf32, #tpu.memory_space<vmem>>, vector<16x128xf32>
    %27 = arith.subf %25, %26 : vector<16x128xf32>
    %cst_17 = arith.constant 5.000000e-01 : f32
    %28 = vector.broadcast %cst_17 : f32 to vector<16x128xf32>
    %29 = arith.mulf %27, %28 : vector<16x128xf32>
    %30 = arith.addf %26, %29 : vector<16x128xf32>
    %cst_18 = arith.constant 1.000000e+00 : f32
    %31 = vector.broadcast %cst_18 : f32 to vector<16x128xf32>
    %32 = arith.cmpf oge, %30, %31 : vector<16x128xf32>
    %cst_19 = arith.constant 0.000000e+00 : f32
    %33 = vector.broadcast %cst_19 : f32 to vector<16x128xf32>
    %34 = arith.select %32, %33, %30 : vector<16x128xi1>, vector<16x128xf32>
    %c0_20 = arith.constant 0 : index
    %c0_21 = arith.constant 0 : index
    %35 = vector.load %arg13[%c0_20, %c0_21] : memref<16x128xf32, #tpu.memory_space<vmem>>, vector<16x128xf32>
    tpu.vector_store %arg13[%c0_20, %c0_21], %34 {strides = array<i32>} : memref<16x128xf32, #tpu.memory_space<vmem>>, vector<16x128xf32>,
    %36 = arith.extui %32 : vector<16x128xi1> to vector<16x128xi32>
    %37 = arith.sitofp %36 : vector<16x128xi32> to vector<16x128xf32>
    %38 = arith.truncf %37 : vector<16x128xf32> to vector<16x128xbf16>
    %39 = vector.extract_strided_slice %10 {offsets = [0, 256], sizes = [16, 128], strides = [1, 1]} : vector<16x384xf32> to vector<16x128xf32>
    %c0_22 = arith.constant 0 : index
    %c0_23 = arith.constant 0 : index
    %40 = vector.load %arg14[%c0_22, %c0_23] : memref<16x128xf32, #tpu.memory_space<vmem>>, vector<16x128xf32>
    %41 = arith.subf %39, %40 : vector<16x128xf32>
    %cst_24 = arith.constant 5.000000e-01 : f32
    %42 = vector.broadcast %cst_24 : f32 to vector<16x128xf32>
    %43 = arith.mulf %41, %42 : vector<16x128xf32>
    %44 = arith.addf %40, %43 : vector<16x128xf32>
    %cst_25 = arith.constant 1.000000e+00 : f32
    %45 = vector.broadcast %cst_25 : f32 to vector<16x128xf32>
    %46 = arith.cmpf oge, %44, %45 : vector<16x128xf32>
    %cst_26 = arith.constant 0.000000e+00 : f32
    %47 = vector.broadcast %cst_26 : f32 to vector<16x128xf32>
    %48 = arith.select %46, %47, %44 : vector<16x128xi1>, vector<16x128xf32>
    %c0_27 = arith.constant 0 : index
    %c0_28 = arith.constant 0 : index
    %49 = vector.load %arg14[%c0_27, %c0_28] : memref<16x128xf32, #tpu.memory_space<vmem>>, vector<16x128xf32>
    tpu.vector_store %arg14[%c0_27, %c0_28], %48 {strides = array<i32>} : memref<16x128xf32, #tpu.memory_space<vmem>>, vector<16x128xf32>,
    %50 = arith.extui %46 : vector<16x128xi1> to vector<16x128xi32>
    %51 = arith.sitofp %50 : vector<16x128xi32> to vector<16x128xf32>
    %52 = arith.truncf %51 : vector<16x128xf32> to vector<16x128xbf16>
    %53 = vector.shape_cast %24 : vector<16x128xbf16> to vector<1x16x128xbf16>
    %54 = vector.shape_cast %38 : vector<16x128xbf16> to vector<1x16x128xbf16>
    %55 = vector.shape_cast %52 : vector<16x128xbf16> to vector<1x16x128xbf16>
    %56 = vector.extract_strided_slice %53 {offsets = [0, 0, 0], sizes = [1, 16, 16], strides = [1, 1, 1]} : vector<1x16x128xbf16> to vector<1x16x16xbf16>
    %57 = vector.extract_strided_slice %54 {offsets = [0, 0, 0], sizes = [1, 16, 16], strides = [1, 1, 1]} : vector<1x16x128xbf16> to vector<1x16x16xbf16>
    %58 = vector.extract_strided_slice %55 {offsets = [0, 0, 0], sizes = [1, 16, 16], strides = [1, 1, 1]} : vector<1x16x128xbf16> to vector<1x16x16xbf16>
    %cst_29 = arith.constant dense<0.000000e+00> : vector<1x16x16xf32>
    %59 = tpu.matmul %56, %57, %cst_29 {dimension_numbers = #tpu.dot_dimension_numbers<[2], [2], [1], [1], [0, 0, 0, 1, 1, 1], [0], [0]>} : vector<1x16x16xbf16>, vector<1x16x16xbf16>, vector<1x16x16xf32> -> vector<1x16x16xf32>
    %cst_30 = arith.constant 1.250000e-01 : f32
    %60 = vector.broadcast %cst_30 : f32 to vector<1x16x16xf32>
    %61 = arith.mulf %59, %60 : vector<1x16x16xf32>
    %62 = arith.truncf %61 : vector<1x16x16xf32> to vector<1x16x16xbf16>
    %cst_31 = arith.constant dense<0.000000e+00> : vector<1x16x16xf32>
    %63 = tpu.matmul %62, %58, %cst_31 {dimension_numbers = #tpu.dot_dimension_numbers<[2], [1], [1], [2], [0, 0, 0, 1, 1, 2], [0], [0]>} : vector<1x16x16xbf16>, vector<1x16x16xbf16>, vector<1x16x16xf32> -> vector<1x16x16xf32>
    %64 = vector.extract_strided_slice %53 {offsets = [0, 0, 16], sizes = [1, 16, 16], strides = [1, 1, 1]} : vector<1x16x128xbf16> to vector<1x16x16xbf16>
    %65 = vector.extract_strided_slice %54 {offsets = [0, 0, 16], sizes = [1, 16, 16], strides = [1, 1, 1]} : vector<1x16x128xbf16> to vector<1x16x16xbf16>
    %66 = vector.extract_strided_slice %55 {offsets = [0, 0, 16], sizes = [1, 16, 16], strides = [1, 1, 1]} : vector<1x16x128xbf16> to vector<1x16x16xbf16>
    %cst_32 = arith.constant dense<0.000000e+00> : vector<1x16x16xf32>
    %67 = tpu.matmul %64, %65, %cst_32 {dimension_numbers = #tpu.dot_dimension_numbers<[2], [2], [1], [1], [0, 0, 0, 1, 1, 1], [0], [0]>} : vector<1x16x16xbf16>, vector<1x16x16xbf16>, vector<1x16x16xf32> -> vector<1x16x16xf32>
    %cst_33 = arith.constant 1.250000e-01 : f32
    %68 = vector.broadcast %cst_33 : f32 to vector<1x16x16xf32>
    %69 = arith.mulf %67, %68 : vector<1x16x16xf32>
    %70 = arith.truncf %69 : vector<1x16x16xf32> to vector<1x16x16xbf16>
    %cst_34 = arith.constant dense<0.000000e+00> : vector<1x16x16xf32>
    %71 = tpu.matmul %70, %66, %cst_34 {dimension_numbers = #tpu.dot_dimension_numbers<[2], [1], [1], [2], [0, 0, 0, 1, 1, 2], [0], [0]>} : vector<1x16x16xbf16>, vector<1x16x16xbf16>, vector<1x16x16xf32> -> vector<1x16x16xf32>
    %72 = vector.extract_strided_slice %53 {offsets = [0, 0, 32], sizes = [1, 16, 16], strides = [1, 1, 1]} : vector<1x16x128xbf16> to vector<1x16x16xbf16>
    %73 = vector.extract_strided_slice %54 {offsets = [0, 0, 32], sizes = [1, 16, 16], strides = [1, 1, 1]} : vector<1x16x128xbf16> to vector<1x16x16xbf16>
    %74 = vector.extract_strided_slice %55 {offsets = [0, 0, 32], sizes = [1, 16, 16], strides = [1, 1, 1]} : vector<1x16x128xbf16> to vector<1x16x16xbf16>
    %cst_35 = arith.constant dense<0.000000e+00> : vector<1x16x16xf32>
    %75 = tpu.matmul %72, %73, %cst_35 {dimension_numbers = #tpu.dot_dimension_numbers<[2], [2], [1], [1], [0, 0, 0, 1, 1, 1], [0], [0]>} : vector<1x16x16xbf16>, vector<1x16x16xbf16>, vector<1x16x16xf32> -> vector<1x16x16xf32>
    %cst_36 = arith.constant 1.250000e-01 : f32
    %76 = vector.broadcast %cst_36 : f32 to vector<1x16x16xf32>
    %77 = arith.mulf %75, %76 : vector<1x16x16xf32>
    %78 = arith.truncf %77 : vector<1x16x16xf32> to vector<1x16x16xbf16>
    %cst_37 = arith.constant dense<0.000000e+00> : vector<1x16x16xf32>
    %79 = tpu.matmul %78, %74, %cst_37 {dimension_numbers = #tpu.dot_dimension_numbers<[2], [1], [1], [2], [0, 0, 0, 1, 1, 2], [0], [0]>} : vector<1x16x16xbf16>, vector<1x16x16xbf16>, vector<1x16x16xf32> -> vector<1x16x16xf32>
    %80 = vector.extract_strided_slice %53 {offsets = [0, 0, 48], sizes = [1, 16, 16], strides = [1, 1, 1]} : vector<1x16x128xbf16> to vector<1x16x16xbf16>
    %81 = vector.extract_strided_slice %54 {offsets = [0, 0, 48], sizes = [1, 16, 16], strides = [1, 1, 1]} : vector<1x16x128xbf16> to vector<1x16x16xbf16>
    %82 = vector.extract_strided_slice %55 {offsets = [0, 0, 48], sizes = [1, 16, 16], strides = [1, 1, 1]} : vector<1x16x128xbf16> to vector<1x16x16xbf16>
    %cst_38 = arith.constant dense<0.000000e+00> : vector<1x16x16xf32>
    %83 = tpu.matmul %80, %81, %cst_38 {dimension_numbers = #tpu.dot_dimension_numbers<[2], [2], [1], [1], [0, 0, 0, 1, 1, 1], [0], [0]>} : vector<1x16x16xbf16>, vector<1x16x16xbf16>, vector<1x16x16xf32> -> vector<1x16x16xf32>
    %cst_39 = arith.constant 1.250000e-01 : f32
    %84 = vector.broadcast %cst_39 : f32 to vector<1x16x16xf32>
    %85 = arith.mulf %83, %84 : vector<1x16x16xf32>
    %86 = arith.truncf %85 : vector<1x16x16xf32> to vector<1x16x16xbf16>
    %cst_40 = arith.constant dense<0.000000e+00> : vector<1x16x16xf32>
    %87 = tpu.matmul %86, %82, %cst_40 {dimension_numbers = #tpu.dot_dimension_numbers<[2], [1], [1], [2], [0, 0, 0, 1, 1, 2], [0], [0]>} : vector<1x16x16xbf16>, vector<1x16x16xbf16>, vector<1x16x16xf32> -> vector<1x16x16xf32>
    %88 = vector.extract_strided_slice %53 {offsets = [0, 0, 64], sizes = [1, 16, 16], strides = [1, 1, 1]} : vector<1x16x128xbf16> to vector<1x16x16xbf16>
    %89 = vector.extract_strided_slice %54 {offsets = [0, 0, 64], sizes = [1, 16, 16], strides = [1, 1, 1]} : vector<1x16x128xbf16> to vector<1x16x16xbf16>
    %90 = vector.extract_strided_slice %55 {offsets = [0, 0, 64], sizes = [1, 16, 16], strides = [1, 1, 1]} : vector<1x16x128xbf16> to vector<1x16x16xbf16>
    %cst_41 = arith.constant dense<0.000000e+00> : vector<1x16x16xf32>
    %91 = tpu.matmul %88, %89, %cst_41 {dimension_numbers = #tpu.dot_dimension_numbers<[2], [2], [1], [1], [0, 0, 0, 1, 1, 1], [0], [0]>} : vector<1x16x16xbf16>, vector<1x16x16xbf16>, vector<1x16x16xf32> -> vector<1x16x16xf32>
    %cst_42 = arith.constant 1.250000e-01 : f32
    %92 = vector.broadcast %cst_42 : f32 to vector<1x16x16xf32>
    %93 = arith.mulf %91, %92 : vector<1x16x16xf32>
    %94 = arith.truncf %93 : vector<1x16x16xf32> to vector<1x16x16xbf16>
    %cst_43 = arith.constant dense<0.000000e+00> : vector<1x16x16xf32>
    %95 = tpu.matmul %94, %90, %cst_43 {dimension_numbers = #tpu.dot_dimension_numbers<[2], [1], [1], [2], [0, 0, 0, 1, 1, 2], [0], [0]>} : vector<1x16x16xbf16>, vector<1x16x16xbf16>, vector<1x16x16xf32> -> vector<1x16x16xf32>
    %96 = vector.extract_strided_slice %53 {offsets = [0, 0, 80], sizes = [1, 16, 16], strides = [1, 1, 1]} : vector<1x16x128xbf16> to vector<1x16x16xbf16>
    %97 = vector.extract_strided_slice %54 {offsets = [0, 0, 80], sizes = [1, 16, 16], strides = [1, 1, 1]} : vector<1x16x128xbf16> to vector<1x16x16xbf16>
    %98 = vector.extract_strided_slice %55 {offsets = [0, 0, 80], sizes = [1, 16, 16], strides = [1, 1, 1]} : vector<1x16x128xbf16> to vector<1x16x16xbf16>
    %cst_44 = arith.constant dense<0.000000e+00> : vector<1x16x16xf32>
    %99 = tpu.matmul %96, %97, %cst_44 {dimension_numbers = #tpu.dot_dimension_numbers<[2], [2], [1], [1], [0, 0, 0, 1, 1, 1], [0], [0]>} : vector<1x16x16xbf16>, vector<1x16x16xbf16>, vector<1x16x16xf32> -> vector<1x16x16xf32>
    %cst_45 = arith.constant 1.250000e-01 : f32
    %100 = vector.broadcast %cst_45 : f32 to vector<1x16x16xf32>
    %101 = arith.mulf %99, %100 : vector<1x16x16xf32>
    %102 = arith.truncf %101 : vector<1x16x16xf32> to vector<1x16x16xbf16>
    %cst_46 = arith.constant dense<0.000000e+00> : vector<1x16x16xf32>
    %103 = tpu.matmul %102, %98, %cst_46 {dimension_numbers = #tpu.dot_dimension_numbers<[2], [1], [1], [2], [0, 0, 0, 1, 1, 2], [0], [0]>} : vector<1x16x16xbf16>, vector<1x16x16xbf16>, vector<1x16x16xf32> -> vector<1x16x16xf32>
    %104 = vector.extract_strided_slice %53 {offsets = [0, 0, 96], sizes = [1, 16, 16], strides = [1, 1, 1]} : vector<1x16x128xbf16> to vector<1x16x16xbf16>
    %105 = vector.extract_strided_slice %54 {offsets = [0, 0, 96], sizes = [1, 16, 16], strides = [1, 1, 1]} : vector<1x16x128xbf16> to vector<1x16x16xbf16>
    %106 = vector.extract_strided_slice %55 {offsets = [0, 0, 96], sizes = [1, 16, 16], strides = [1, 1, 1]} : vector<1x16x128xbf16> to vector<1x16x16xbf16>
    %cst_47 = arith.constant dense<0.000000e+00> : vector<1x16x16xf32>
    %107 = tpu.matmul %104, %105, %cst_47 {dimension_numbers = #tpu.dot_dimension_numbers<[2], [2], [1], [1], [0, 0, 0, 1, 1, 1], [0], [0]>} : vector<1x16x16xbf16>, vector<1x16x16xbf16>, vector<1x16x16xf32> -> vector<1x16x16xf32>
    %cst_48 = arith.constant 1.250000e-01 : f32
    %108 = vector.broadcast %cst_48 : f32 to vector<1x16x16xf32>
    %109 = arith.mulf %107, %108 : vector<1x16x16xf32>
    %110 = arith.truncf %109 : vector<1x16x16xf32> to vector<1x16x16xbf16>
    %cst_49 = arith.constant dense<0.000000e+00> : vector<1x16x16xf32>
    %111 = tpu.matmul %110, %106, %cst_49 {dimension_numbers = #tpu.dot_dimension_numbers<[2], [1], [1], [2], [0, 0, 0, 1, 1, 2], [0], [0]>} : vector<1x16x16xbf16>, vector<1x16x16xbf16>, vector<1x16x16xf32> -> vector<1x16x16xf32>
    %112 = vector.extract_strided_slice %53 {offsets = [0, 0, 112], sizes = [1, 16, 16], strides = [1, 1, 1]} : vector<1x16x128xbf16> to vector<1x16x16xbf16>
    %113 = vector.extract_strided_slice %54 {offsets = [0, 0, 112], sizes = [1, 16, 16], strides = [1, 1, 1]} : vector<1x16x128xbf16> to vector<1x16x16xbf16>
    %114 = vector.extract_strided_slice %55 {offsets = [0, 0, 112], sizes = [1, 16, 16], strides = [1, 1, 1]} : vector<1x16x128xbf16> to vector<1x16x16xbf16>
    %cst_50 = arith.constant dense<0.000000e+00> : vector<1x16x16xf32>
    %115 = tpu.matmul %112, %113, %cst_50 {dimension_numbers = #tpu.dot_dimension_numbers<[2], [2], [1], [1], [0, 0, 0, 1, 1, 1], [0], [0]>} : vector<1x16x16xbf16>, vector<1x16x16xbf16>, vector<1x16x16xf32> -> vector<1x16x16xf32>
    %cst_51 = arith.constant 1.250000e-01 : f32
    %116 = vector.broadcast %cst_51 : f32 to vector<1x16x16xf32>
    %117 = arith.mulf %115, %116 : vector<1x16x16xf32>
    %118 = arith.truncf %117 : vector<1x16x16xf32> to vector<1x16x16xbf16>
    %cst_52 = arith.constant dense<0.000000e+00> : vector<1x16x16xf32>
    %119 = tpu.matmul %118, %114, %cst_52 {dimension_numbers = #tpu.dot_dimension_numbers<[2], [1], [1], [2], [0, 0, 0, 1, 1, 2], [0], [0]>} : vector<1x16x16xbf16>, vector<1x16x16xbf16>, vector<1x16x16xf32> -> vector<1x16x16xf32>
    %120 = tpu.concatenate %63, %71, %79, %87, %95, %103, %111, %119 in 2 : vector<1x16x16xf32>, vector<1x16x16xf32>, vector<1x16x16xf32>, vector<1x16x16xf32>, vector<1x16x16xf32>, vector<1x16x16xf32>, vector<1x16x16xf32>, vector<1x16x16xf32> -> vector<1x16x128xf32>
    %121 = vector.shape_cast %120 : vector<1x16x128xf32> to vector<16x128xf32>
    %c0_53 = arith.constant 0 : index
    %c0_54 = arith.constant 0 : index
    %122 = vector.load %arg15[%c0_53, %c0_54] : memref<16x128xf32, #tpu.memory_space<vmem>>, vector<16x128xf32>
    %123 = arith.subf %121, %122 : vector<16x128xf32>
    %cst_55 = arith.constant 5.000000e-01 : f32
    %124 = vector.broadcast %cst_55 : f32 to vector<16x128xf32>
    %125 = arith.mulf %123, %124 : vector<16x128xf32>
    %126 = arith.addf %122, %125 : vector<16x128xf32>
    %cst_56 = arith.constant 5.000000e-01 : f32
    %127 = vector.broadcast %cst_56 : f32 to vector<16x128xf32>
    %128 = arith.cmpf oge, %126, %127 : vector<16x128xf32>
    %cst_57 = arith.constant 0.000000e+00 : f32
    %129 = vector.broadcast %cst_57 : f32 to vector<16x128xf32>
    %130 = arith.select %128, %129, %126 : vector<16x128xi1>, vector<16x128xf32>
    %c0_58 = arith.constant 0 : index
    %c0_59 = arith.constant 0 : index
    %131 = vector.load %arg15[%c0_58, %c0_59] : memref<16x128xf32, #tpu.memory_space<vmem>>, vector<16x128xf32>
    tpu.vector_store %arg15[%c0_58, %c0_59], %130 {strides = array<i32>} : memref<16x128xf32, #tpu.memory_space<vmem>>, vector<16x128xf32>,
    %132 = arith.extui %128 : vector<16x128xi1> to vector<16x128xi32>
    %133 = arith.sitofp %132 : vector<16x128xi32> to vector<16x128xf32>
    %134 = arith.truncf %133 : vector<16x128xf32> to vector<16x128xbf16>
    %c0_60 = arith.constant 0 : index
    %c0_61 = arith.constant 0 : index
    %135 = vector.load %arg5[%c0_60, %c0_61] : memref<128x128xbf16, #tpu.memory_space<vmem>>, vector<128x128xbf16>
    %cst_62 = arith.constant dense<0.000000e+00> : vector<16x128xf32>
    %136 = tpu.matmul %134, %135, %cst_62 {dimension_numbers = #tpu.dot_dimension_numbers<[1], [0], [0], [1], [0, 0, 1, 1], [], []>} : vector<16x128xbf16>, vector<128x128xbf16>, vector<16x128xf32> -> vector<16x128xf32>
    %c0_63 = arith.constant 0 : index
    %c0_64 = arith.constant 0 : index
    %137 = vector.load %arg6[%c0_63, %c0_64] : memref<1x128xf32, #tpu.memory_space<vmem>>, vector<1x128xf32>
    %138 = vector.broadcast %137 : vector<1x128xf32> to vector<16x128xf32>
    %139 = arith.addf %136, %138 : vector<16x128xf32>
    %c0_65 = arith.constant 0 : index
    %c0_66 = arith.constant 0 : index
    %140 = vector.load %arg16[%c0_65, %c0_66] : memref<16x128xf32, #tpu.memory_space<vmem>>, vector<16x128xf32>
    %141 = arith.subf %139, %140 : vector<16x128xf32>
    %cst_67 = arith.constant 5.000000e-01 : f32
    %142 = vector.broadcast %cst_67 : f32 to vector<16x128xf32>
    %143 = arith.mulf %141, %142 : vector<16x128xf32>
    %144 = arith.addf %140, %143 : vector<16x128xf32>
    %cst_68 = arith.constant 1.000000e+00 : f32
    %145 = vector.broadcast %cst_68 : f32 to vector<16x128xf32>
    %146 = arith.cmpf oge, %144, %145 : vector<16x128xf32>
    %cst_69 = arith.constant 0.000000e+00 : f32
    %147 = vector.broadcast %cst_69 : f32 to vector<16x128xf32>
    %148 = arith.select %146, %147, %144 : vector<16x128xi1>, vector<16x128xf32>
    %c0_70 = arith.constant 0 : index
    %c0_71 = arith.constant 0 : index
    %149 = vector.load %arg16[%c0_70, %c0_71] : memref<16x128xf32, #tpu.memory_space<vmem>>, vector<16x128xf32>
    tpu.vector_store %arg16[%c0_70, %c0_71], %148 {strides = array<i32>} : memref<16x128xf32, #tpu.memory_space<vmem>>, vector<16x128xf32>,
    %150 = arith.extui %146 : vector<16x128xi1> to vector<16x128xi32>
    %151 = arith.sitofp %150 : vector<16x128xi32> to vector<16x128xf32>
    %152 = arith.truncf %151 : vector<16x128xf32> to vector<16x128xbf16>
    %153 = arith.extf %152 : vector<16x128xbf16> to vector<16x128xf32>
    %154 = arith.addf %4, %153 : vector<16x128xf32>
    %155 = arith.truncf %154 : vector<16x128xf32> to vector<16x128xbf16>
    %c0_72 = arith.constant 0 : index
    %c0_73 = arith.constant 0 : index
    %156 = vector.load %arg7[%c0_72, %c0_73] : memref<128x512xbf16, #tpu.memory_space<vmem>>, vector<128x512xbf16>
    %cst_74 = arith.constant dense<0.000000e+00> : vector<16x512xf32>
    %157 = tpu.matmul %155, %156, %cst_74 {dimension_numbers = #tpu.dot_dimension_numbers<[1], [0], [0], [1], [0, 0, 1, 1], [], []>} : vector<16x128xbf16>, vector<128x512xbf16>, vector<16x512xf32> -> vector<16x512xf32>
    %c0_75 = arith.constant 0 : index
    %c0_76 = arith.constant 0 : index
    %158 = vector.load %arg8[%c0_75, %c0_76] : memref<1x512xf32, #tpu.memory_space<vmem>>, vector<1x512xf32>
    %159 = vector.broadcast %158 : vector<1x512xf32> to vector<16x512xf32>
    %160 = arith.addf %157, %159 : vector<16x512xf32>
    %c0_77 = arith.constant 0 : index
    %c0_78 = arith.constant 0 : index
    %161 = vector.load %arg17[%c0_77, %c0_78] : memref<16x512xf32, #tpu.memory_space<vmem>>, vector<16x512xf32>
    %162 = arith.subf %160, %161 : vector<16x512xf32>
    %cst_79 = arith.constant 5.000000e-01 : f32
    %163 = vector.broadcast %cst_79 : f32 to vector<16x512xf32>
    %164 = arith.mulf %162, %163 : vector<16x512xf32>
    %165 = arith.addf %161, %164 : vector<16x512xf32>
    %cst_80 = arith.constant 1.000000e+00 : f32
    %166 = vector.broadcast %cst_80 : f32 to vector<16x512xf32>
    %167 = arith.cmpf oge, %165, %166 : vector<16x512xf32>
    %cst_81 = arith.constant 0.000000e+00 : f32
    %168 = vector.broadcast %cst_81 : f32 to vector<16x512xf32>
    %169 = arith.select %167, %168, %165 : vector<16x512xi1>, vector<16x512xf32>
    %c0_82 = arith.constant 0 : index
    %c0_83 = arith.constant 0 : index
    %170 = vector.load %arg17[%c0_82, %c0_83] : memref<16x512xf32, #tpu.memory_space<vmem>>, vector<16x512xf32>
    tpu.vector_store %arg17[%c0_82, %c0_83], %169 {strides = array<i32>} : memref<16x512xf32, #tpu.memory_space<vmem>>, vector<16x512xf32>,
    %171 = arith.extui %167 : vector<16x512xi1> to vector<16x512xi32>
    %172 = arith.sitofp %171 : vector<16x512xi32> to vector<16x512xf32>
    %173 = arith.truncf %172 : vector<16x512xf32> to vector<16x512xbf16>
    %c0_84 = arith.constant 0 : index
    %c0_85 = arith.constant 0 : index
    %174 = vector.load %arg9[%c0_84, %c0_85] : memref<512x128xbf16, #tpu.memory_space<vmem>>, vector<512x128xbf16>
    %cst_86 = arith.constant dense<0.000000e+00> : vector<16x128xf32>
    %175 = tpu.matmul %173, %174, %cst_86 {dimension_numbers = #tpu.dot_dimension_numbers<[1], [0], [0], [1], [0, 0, 1, 1], [], []>} : vector<16x512xbf16>, vector<512x128xbf16>, vector<16x128xf32> -> vector<16x128xf32>
    %c0_87 = arith.constant 0 : index
    %c0_88 = arith.constant 0 : index
    %176 = vector.load %arg10[%c0_87, %c0_88] : memref<1x128xf32, #tpu.memory_space<vmem>>, vector<1x128xf32>
    %177 = vector.broadcast %176 : vector<1x128xf32> to vector<16x128xf32>
    %178 = arith.addf %175, %177 : vector<16x128xf32>
    %c0_89 = arith.constant 0 : index
    %c0_90 = arith.constant 0 : index
    %179 = vector.load %arg18[%c0_89, %c0_90] : memref<16x128xf32, #tpu.memory_space<vmem>>, vector<16x128xf32>
    %180 = arith.subf %178, %179 : vector<16x128xf32>
    %cst_91 = arith.constant 5.000000e-01 : f32
    %181 = vector.broadcast %cst_91 : f32 to vector<16x128xf32>
    %182 = arith.mulf %180, %181 : vector<16x128xf32>
    %183 = arith.addf %179, %182 : vector<16x128xf32>
    %cst_92 = arith.constant 1.000000e+00 : f32
    %184 = vector.broadcast %cst_92 : f32 to vector<16x128xf32>
    %185 = arith.cmpf oge, %183, %184 : vector<16x128xf32>
    %cst_93 = arith.constant 0.000000e+00 : f32
    %186 = vector.broadcast %cst_93 : f32 to vector<16x128xf32>
    %187 = arith.select %185, %186, %183 : vector<16x128xi1>, vector<16x128xf32>
    %c0_94 = arith.constant 0 : index
    %c0_95 = arith.constant 0 : index
    %188 = vector.load %arg18[%c0_94, %c0_95] : memref<16x128xf32, #tpu.memory_space<vmem>>, vector<16x128xf32>
    tpu.vector_store %arg18[%c0_94, %c0_95], %187 {strides = array<i32>} : memref<16x128xf32, #tpu.memory_space<vmem>>, vector<16x128xf32>,
    %189 = arith.extui %185 : vector<16x128xi1> to vector<16x128xi32>
    %190 = arith.sitofp %189 : vector<16x128xi32> to vector<16x128xf32>
    %191 = arith.truncf %190 : vector<16x128xf32> to vector<16x128xbf16>
    %192 = arith.extf %191 : vector<16x128xbf16> to vector<16x128xf32>
    %193 = arith.addf %154, %192 : vector<16x128xf32>
    %194 = vector.shape_cast %193 : vector<16x128xf32> to vector<1x1x16x128xf32>
    %c0_96 = arith.constant 0 : index
    %c0_97 = arith.constant 0 : index
    %c0_98 = arith.constant 0 : index
    %c0_99 = arith.constant 0 : index
    %195 = vector.load %arg11[%c0_96, %c0_97, %c0_98, %c0_99] : memref<1x1x16x128xf32, #tpu.memory_space<vmem>>, vector<1x1x16x128xf32>
    tpu.vector_store %arg11[%c0_96, %c0_97, %c0_98, %c0_99], %194 {strides = array<i32>} : memref<1x1x16x128xf32, #tpu.memory_space<vmem>>, vector<1x1x16x128xf32>,
    return
  }
  func.func @transform_0(%arg0: i32, %arg1: i32) -> (i32, i32, i32, i32) {
    %c0_i32 = arith.constant 0 : i32
    %c0_i32_0 = arith.constant 0 : i32
    %c0_i32_1 = arith.constant 0 : i32
    return %arg1, %arg0, %c0_i32, %c0_i32_0 : i32, i32, i32, i32
  }
  func.func @transform_1(%arg0: i32, %arg1: i32) -> (i32, i32) {
    %c0_i32 = arith.constant 0 : i32
    %c0_i32_0 = arith.constant 0 : i32
    %c0_i32_1 = arith.constant 0 : i32
    return %c0_i32, %c0_i32_0 : i32, i32
  }
  func.func @transform_2(%arg0: i32, %arg1: i32) -> (i32, i32) {
    %c0_i32 = arith.constant 0 : i32
    %c0_i32_0 = arith.constant 0 : i32
    %c0_i32_1 = arith.constant 0 : i32
    return %c0_i32, %c0_i32_0 : i32, i32
  }
  func.func @transform_3(%arg0: i32, %arg1: i32) -> (i32, i32) {
    %c0_i32 = arith.constant 0 : i32
    %c0_i32_0 = arith.constant 0 : i32
    %c0_i32_1 = arith.constant 0 : i32
    return %c0_i32, %c0_i32_0 : i32, i32
  }
  func.func @transform_4(%arg0: i32, %arg1: i32) -> (i32, i32) {
    %c0_i32 = arith.constant 0 : i32
    %c0_i32_0 = arith.constant 0 : i32
    %c0_i32_1 = arith.constant 0 : i32
    return %c0_i32, %c0_i32_0 : i32, i32
  }
  func.func @transform_5(%arg0: i32, %arg1: i32) -> (i32, i32) {
    %c0_i32 = arith.constant 0 : i32
    %c0_i32_0 = arith.constant 0 : i32
    %c0_i32_1 = arith.constant 0 : i32
    return %c0_i32, %c0_i32_0 : i32, i32
  }
  func.func @transform_6(%arg0: i32, %arg1: i32) -> (i32, i32) {
    %c0_i32 = arith.constant 0 : i32
    %c0_i32_0 = arith.constant 0 : i32
    %c0_i32_1 = arith.constant 0 : i32
    return %c0_i32, %c0_i32_0 : i32, i32
  }
  func.func @transform_7(%arg0: i32, %arg1: i32) -> (i32, i32) {
    %c0_i32 = arith.constant 0 : i32
    %c0_i32_0 = arith.constant 0 : i32
    %c0_i32_1 = arith.constant 0 : i32
    return %c0_i32, %c0_i32_0 : i32, i32
  }
  func.func @transform_8(%arg0: i32, %arg1: i32) -> (i32, i32) {
    %c0_i32 = arith.constant 0 : i32
    %c0_i32_0 = arith.constant 0 : i32
    %c0_i32_1 = arith.constant 0 : i32
    return %c0_i32, %c0_i32_0 : i32, i32
  }
  func.func @transform_9(%arg0: i32, %arg1: i32) -> (i32, i32, i32, i32) {
    %c0_i32 = arith.constant 0 : i32
    %c0_i32_0 = arith.constant 0 : i32
    %c0_i32_1 = arith.constant 0 : i32
    return %arg1, %arg0, %c0_i32, %c0_i32_0 : i32, i32, i32, i32
  }
}

</mosaic_0001>

<llo_original>
// kernel: tpu_custom_call.1
$region0: #{tpu_custom_call.1}
  #allocation0 [shape = 'u32[]', space=smem, size = 0x4, offset = 0x4, fixed_abs, tag = 'smem constant byte address 0x4 - core index']
  #allocation1 [shape = 'u32[144,128]{1,0:T(1,128)}', space=vmem, size = 0x12000, scoped, tag = 'internal scratch']
  #allocation2 [shape = 'f32[16,128]{1,0:T(8,128)}', space=vmem, size = 0x2000, scoped, tag = 'scratch operand']
  #allocation3 [shape = 'f32[16,128]{1,0:T(8,128)}', space=vmem, size = 0x2000, scoped, tag = 'scratch operand']
  #allocation4 [shape = 'f32[16,128]{1,0:T(8,128)}', space=vmem, size = 0x2000, scoped, tag = 'scratch operand']
  #allocation5 [shape = 'f32[16,128]{1,0:T(8,128)}', space=vmem, size = 0x2000, scoped, tag = 'scratch operand']
  #allocation6 [shape = 'f32[16,128]{1,0:T(8,128)}', space=vmem, size = 0x2000, scoped, tag = 'scratch operand']
  #allocation7 [shape = 'f32[16,512]{1,0:T(8,128)}', space=vmem, size = 0x8000, scoped, tag = 'scratch operand']
  #allocation8 [shape = 'f32[16,128]{1,0:T(8,128)}', space=vmem, size = 0x2000, scoped, tag = 'scratch operand']
  %s0 = inlined_call_operand.hbm [shape: f32[4,2,16,128], index: 0, kind: input, shape index: {}]
  %s1 = inlined_call_operand.hbm [shape: bf16[128,384], index: 1, kind: input, shape index: {}]
  %s2 = inlined_call_operand.hbm [shape: f32[1,384], index: 2, kind: input, shape index: {}]
  %s3 = inlined_call_operand.hbm [shape: bf16[128,128], index: 3, kind: input, shape index: {}]
  %s4 = inlined_call_operand.hbm [shape: f32[1,128], index: 4, kind: input, shape index: {}]
  %s5 = inlined_call_operand.hbm [shape: bf16[128,512], index: 5, kind: input, shape index: {}]
  %s6 = inlined_call_operand.hbm [shape: f32[1,512], index: 6, kind: input, shape index: {}]
  %s7 = inlined_call_operand.hbm [shape: bf16[512,128], index: 7, kind: input, shape index: {}]
  %s8 = inlined_call_operand.hbm [shape: f32[1,128], index: 8, kind: input, shape index: {}]
  %s9 = inlined_call_operand.hbm [shape: f32[4,2,16,128], index: 9, kind: output, shape index: {}]
  %s10 = sld [smem:[#allocation0]]
  $region109: #{tpu_custom_call.1} parent=0
    _
  %s12 = ssub.s32 1, %s10
  %s13 = scalar_select 0, %s12, %s10
  $region1: #{tpu_custom_call.1} parent=0
    #allocation9 [shape = 'u8[16384]{0}', space=vmem, size = 0x4000, scoped, tag = 'input window, operand 0']
    #allocation10 [shape = 's32[2]{0}', space=sflag, size = 0x8, scoped, tag = 'scoped memory for tpu_custom_call.1']
    #allocation11 [shape = 's32[2]{0}', space=sflag, size = 0x8, scoped, tag = 'scoped memory for tpu_custom_call.1']
    #allocation12 [shape = 'u8[98304]{0}', space=vmem, size = 0x18000, scoped, tag = 'input window, operand 1, single buffered']
    #allocation13 [shape = 's32[1]{0}', space=sflag, size = 0x4, scoped, tag = 'scoped memory for tpu_custom_call.1']
    #allocation14 [shape = 'u8[1536]{0}', space=vmem, size = 0x800, scoped, tag = 'input window, operand 2, single buffered']
    #allocation15 [shape = 'u8[32768]{0}', space=vmem, size = 0x8000, scoped, tag = 'input window, operand 3, single buffered']
    #allocation16 [shape = 's32[1]{0}', space=sflag, size = 0x4, scoped, tag = 'scoped memory for tpu_custom_call.1']
    #allocation17 [shape = 'u8[512]{0}', space=vmem, size = 0x400, scoped, tag = 'input window, operand 4, single buffered']
    #allocation18 [shape = 'u8[131072]{0}', space=vmem, size = 0x20000, scoped, tag = 'input window, operand 5, single buffered']
    #allocation19 [shape = 's32[1]{0}', space=sflag, size = 0x4, scoped, tag = 'scoped memory for tpu_custom_call.1']
    #allocation20 [shape = 'u8[2048]{0}', space=vmem, size = 0x800, scoped, tag = 'input window, operand 6, single buffered']
    #allocation21 [shape = 'u8[131072]{0}', space=vmem, size = 0x20000, scoped, tag = 'input window, operand 7, single buffered']
    #allocation22 [shape = 's32[1]{0}', space=sflag, size = 0x4, scoped, tag = 'scoped memory for tpu_custom_call.1']
    #allocation23 [shape = 'u8[512]{0}', space=vmem, size = 0x400, scoped, tag = 'input window, operand 8, single buffered']
    #allocation24 [shape = 'u8[16384]{0}', space=vmem, size = 0x4000, scoped, tag = 'output window, operand 0']
    %14 = vsyncpa [#allocation10], 0
    %s15 = scalar_lea.sflag [#allocation10], 1
    %16 = vsyncpa %s15, 0
    %17 = vsyncpa [#allocation13], 0
    %18 = vsyncpa [#allocation16], 0
    %19 = vsyncpa [#allocation19], 0
    %20 = vsyncpa [#allocation22], 0
    %21 = vsyncpa [#allocation11], 0
    %s22 = scalar_lea.sflag [#allocation11], 1
    %23 = vsyncpa %s22, 0
    loop: start=0, step=1, limit=10
    $region2: #{tpu_custom_call.1} parent=1 // loop_pre_header
      _
    $region3: #{tpu_custom_call.1} parent=1 // loop_header
      %s25 = sphi 0, %s29
      %p26 = scmp.ge.s32.totalorder %s25, 10
      %s32 = sphi 0, %s44
      %s33 = sphi 0, %s40
      %s34 = sphi 0, %s32
      %s35 = sphi 0, %s33
      %s36 = sphi 0, %s34
      %s37 = sphi 0, %s35
      %s49 = sphi 0, %s51
      %s52 = sphi 0, %s49
      %s53 = sphi 0, %s52
      %s69 = sphi 0, %s53
      %s73 = sphi 0, %s73
      %s75 = sphi 0, %s73
      %s76 = sphi 0, %s75
      %s90 = sphi 0, %s76
      %s94 = sphi 0, %s94
      %s96 = sphi 0, %s94
      %s97 = sphi 0, %s96
      %s111 = sphi 0, %s97
      %s115 = sphi 0, %s115
      %s117 = sphi 0, %s115
      %s118 = sphi 0, %s117
      %s132 = sphi 0, %s118
      %s136 = sphi 0, %s136
      %s138 = sphi 0, %s136
      %s139 = sphi 0, %s138
      %s153 = sphi 0, %s139
      %s157 = sphi 0, %s157
      %s159 = sphi 0, %s157
      %s160 = sphi 0, %s159
      %s174 = sphi 0, %s160
      %s178 = sphi 0, %s178
      %s180 = sphi 0, %s178
      %s181 = sphi 0, %s180
      %s195 = sphi 0, %s181
      %s199 = sphi 0, %s199
      %s201 = sphi 0, %s199
      %s202 = sphi 0, %s201
      %s216 = sphi 0, %s202
      %s220 = sphi 0, %s220
      %s222 = sphi 0, %s220
      %s223 = sphi 0, %s222
      %s237 = sphi 0, %s223
      %s245 = sphi 0, %s247
      %s248 = sphi 0, %s245
      %s249 = sphi 0, %s248
      %s265 = sphi 0, %s249
    $region4: #{tpu_custom_call.1} parent=1 // loop_header_branch
      %28 = sbr.rel (%p26) target = $region8
    $region5: #{tpu_custom_call.1} parent=1 // loop_body
      %s30 = ssub.s32 %s25, 1
      %s31 = ssub.s32 %s25, 2
      %s38 = sadd.s32 1, %s33
      %p39 = scmp.ge.s32.totalorder %s38, 4
      %s40 = scalar_select %p39, 0, %s38
      %s41 = sadd.s32 1, %s32
      %s42 = scalar_select %p39, %s41, %s32
      %p43 = scmp.ge.s32.totalorder %s42, 2
      %s44 = scalar_select %p43, 0, %s42
      %s45 = ssub.s32 %s33, %s40
      %s46 = ssub.s32 %s32, %s44
      %s47 = sor.u32 %s45, %s46
      %p48 = scmp.eq.s32.totalorder %s47, 0
      %s50 = sadd.s32 %s49, 1
      %s51 = scalar_select %p48, %s49, %s50
      %p54 = pneg %p48
      %p55 = scmp.eq.s32.totalorder %s25, 7
      %p56 = por %p54, %p55
      %p57 = scmp.ne.s32.totalorder %s49, %s52
      %p58 = scmp.eq.s32.totalorder %s25, 0
      %p59 = por %p57, %p58
      %p60 = scmp.ne.s32.totalorder %s49, %s52
      %p61 = scmp.eq.s32.totalorder %s30, 7
      %p62 = por %p60, %p61
      %p63 = scmp.ne.s32.totalorder %s52, %s53
      %p64 = scmp.eq.s32.totalorder %s30, 0
      %p65 = por %p63, %p64
      %p66 = scmp.ne.s32.totalorder %s52, %s53
      %p67 = scmp.eq.s32.totalorder %s31, 7
      %p68 = por %p66, %p67
      %p70 = scmp.ne.s32.totalorder %s53, %s69
      %p71 = scmp.eq.s32.totalorder %s31, 0
      %p72 = por %p70, %p71
      %s74 = sadd.s32 %s73, 1
      %p77 = scmp.eq.s32.totalorder %s25, 7
      %p78 = scmp.ne.s32.totalorder %s73, %s75
      %p79 = scmp.eq.s32.totalorder %s25, 0
      %p80 = por %p78, %p79
      %p81 = scmp.ne.s32.totalorder %s73, %s75
      %p82 = scmp.eq.s32.totalorder %s30, 7
      %p83 = por %p81, %p82
      %p84 = scmp.ne.s32.totalorder %s75, %s76
      %p85 = scmp.eq.s32.totalorder %s30, 0
      %p86 = por %p84, %p85
      %p87 = scmp.ne.s32.totalorder %s75, %s76
      %p88 = scmp.eq.s32.totalorder %s31, 7
      %p89 = por %p87, %p88
      %p91 = scmp.ne.s32.totalorder %s76, %s90
      %p92 = scmp.eq.s32.totalorder %s31, 0
      %p93 = por %p91, %p92
      %s95 = sadd.s32 %s94, 1
      %p98 = scmp.eq.s32.totalorder %s25, 7
      %p99 = scmp.ne.s32.totalorder %s94, %s96
      %p100 = scmp.eq.s32.totalorder %s25, 0
      %p101 = por %p99, %p100
      %p102 = scmp.ne.s32.totalorder %s94, %s96
      %p103 = scmp.eq.s32.totalorder %s30, 7
      %p104 = por %p102, %p103
      %p105 = scmp.ne.s32.totalorder %s96, %s97
      %p106 = scmp.eq.s32.totalorder %s30, 0
      %p107 = por %p105, %p106
      %p108 = scmp.ne.s32.totalorder %s96, %s97
      %p109 = scmp.eq.s32.totalorder %s31, 7
      %p110 = por %p108, %p109
      %p112 = scmp.ne.s32.totalorder %s97, %s111
      %p113 = scmp.eq.s32.totalorder %s31, 0
      %p114 = por %p112, %p113
      %s116 = sadd.s32 %s115, 1
      %p119 = scmp.eq.s32.totalorder %s25, 7
      %p120 = scmp.ne.s32.totalorder %s115, %s117
      %p121 = scmp.eq.s32.totalorder %s25, 0
      %p122 = por %p120, %p121
      %p123 = scmp.ne.s32.totalorder %s115, %s117
      %p124 = scmp.eq.s32.totalorder %s30, 7
      %p125 = por %p123, %p124
      %p126 = scmp.ne.s32.totalorder %s117, %s118
      %p127 = scmp.eq.s32.totalorder %s30, 0
      %p128 = por %p126, %p127
      %p129 = scmp.ne.s32.totalorder %s117, %s118
      %p130 = scmp.eq.s32.totalorder %s31, 7
      %p131 = por %p129, %p130
      %p133 = scmp.ne.s32.totalorder %s118, %s132
      %p134 = scmp.eq.s32.totalorder %s31, 0
      %p135 = por %p133, %p134
      %s137 = sadd.s32 %s136, 1
      %p140 = scmp.eq.s32.totalorder %s25, 7
      %p141 = scmp.ne.s32.totalorder %s136, %s138
      %p142 = scmp.eq.s32.totalorder %s25, 0
      %p143 = por %p141, %p142
      %p144 = scmp.ne.s32.totalorder %s136, %s138
      %p145 = scmp.eq.s32.totalorder %s30, 7
      %p146 = por %p144, %p145
      %p147 = scmp.ne.s32.totalorder %s138, %s139
      %p148 = scmp.eq.s32.totalorder %s30, 0
      %p149 = por %p147, %p148
      %p150 = scmp.ne.s32.totalorder %s138, %s139
      %p151 = scmp.eq.s32.totalorder %s31, 7
      %p152 = por %p150, %p151
      %p154 = scmp.ne.s32.totalorder %s139, %s153
      %p155 = scmp.eq.s32.totalorder %s31, 0
      %p156 = por %p154, %p155
      %s158 = sadd.s32 %s157, 1
      %p161 = scmp.eq.s32.totalorder %s25, 7
      %p162 = scmp.ne.s32.totalorder %s157, %s159
      %p163 = scmp.eq.s32.totalorder %s25, 0
      %p164 = por %p162, %p163
      %p165 = scmp.ne.s32.totalorder %s157, %s159
      %p166 = scmp.eq.s32.totalorder %s30, 7
      %p167 = por %p165, %p166
      %p168 = scmp.ne.s32.totalorder %s159, %s160
      %p169 = scmp.eq.s32.totalorder %s30, 0
      %p170 = por %p168, %p169
      %p171 = scmp.ne.s32.totalorder %s159, %s160
      %p172 = scmp.eq.s32.totalorder %s31, 7
      %p173 = por %p171, %p172
      %p175 = scmp.ne.s32.totalorder %s160, %s174
      %p176 = scmp.eq.s32.totalorder %s31, 0
      %p177 = por %p175, %p176
      %s179 = sadd.s32 %s178, 1
      %p182 = scmp.eq.s32.totalorder %s25, 7
      %p183 = scmp.ne.s32.totalorder %s178, %s180
      %p184 = scmp.eq.s32.totalorder %s25, 0
      %p185 = por %p183, %p184
      %p186 = scmp.ne.s32.totalorder %s178, %s180
      %p187 = scmp.eq.s32.totalorder %s30, 7
      %p188 = por %p186, %p187
      %p189 = scmp.ne.s32.totalorder %s180, %s181
      %p190 = scmp.eq.s32.totalorder %s30, 0
      %p191 = por %p189, %p190
      %p192 = scmp.ne.s32.totalorder %s180, %s181
      %p193 = scmp.eq.s32.totalorder %s31, 7
      %p194 = por %p192, %p193
      %p196 = scmp.ne.s32.totalorder %s181, %s195
      %p197 = scmp.eq.s32.totalorder %s31, 0
      %p198 = por %p196, %p197
      %s200 = sadd.s32 %s199, 1
      %p203 = scmp.eq.s32.totalorder %s25, 7
      %p204 = scmp.ne.s32.totalorder %s199, %s201
      %p205 = scmp.eq.s32.totalorder %s25, 0
      %p206 = por %p204, %p205
      %p207 = scmp.ne.s32.totalorder %s199, %s201
      %p208 = scmp.eq.s32.totalorder %s30, 7
      %p209 = por %p207, %p208
      %p210 = scmp.ne.s32.totalorder %s201, %s202
      %p211 = scmp.eq.s32.totalorder %s30, 0
      %p212 = por %p210, %p211
      %p213 = scmp.ne.s32.totalorder %s201, %s202
      %p214 = scmp.eq.s32.totalorder %s31, 7
      %p215 = por %p213, %p214
      %p217 = scmp.ne.s32.totalorder %s202, %s216
      %p218 = scmp.eq.s32.totalorder %s31, 0
      %p219 = por %p217, %p218
      %s221 = sadd.s32 %s220, 1
      %p224 = scmp.eq.s32.totalorder %s25, 7
      %p225 = scmp.ne.s32.totalorder %s220, %s222
      %p226 = scmp.eq.s32.totalorder %s25, 0
      %p227 = por %p225, %p226
      %p228 = scmp.ne.s32.totalorder %s220, %s222
      %p229 = scmp.eq.s32.totalorder %s30, 7
      %p230 = por %p228, %p229
      %p231 = scmp.ne.s32.totalorder %s222, %s223
      %p232 = scmp.eq.s32.totalorder %s30, 0
      %p233 = por %p231, %p232
      %p234 = scmp.ne.s32.totalorder %s222, %s223
      %p235 = scmp.eq.s32.totalorder %s31, 7
      %p236 = por %p234, %p235
      %p238 = scmp.ne.s32.totalorder %s223, %s237
      %p239 = scmp.eq.s32.totalorder %s31, 0
      %p240 = por %p238, %p239
      %s241 = ssub.s32 %s33, %s40
      %s242 = ssub.s32 %s32, %s44
      %s243 = sor.u32 %s241, %s242
      %p244 = scmp.eq.s32.totalorder %s243, 0
      %s246 = sadd.s32 %s245, 1
      %s247 = scalar_select %p244, %s245, %s246
      %p250 = pneg %p244
      %p251 = scmp.eq.s32.totalorder %s25, 7
      %p252 = por %p250, %p251
      %p253 = scmp.ne.s32.totalorder %s245, %s248
      %p254 = scmp.eq.s32.totalorder %s25, 0
      %p255 = por %p253, %p254
      %p256 = scmp.ne.s32.totalorder %s245, %s248
      %p257 = scmp.eq.s32.totalorder %s30, 7
      %p258 = por %p256, %p257
      %p259 = scmp.ne.s32.totalorder %s248, %s249
      %p260 = scmp.eq.s32.totalorder %s30, 0
      %p261 = por %p259, %p260
      %p262 = scmp.ne.s32.totalorder %s248, %s249
      %p263 = scmp.eq.s32.totalorder %s31, 7
      %p264 = por %p262, %p263
      %p266 = scmp.ne.s32.totalorder %s249, %s265
      %p267 = scmp.eq.s32.totalorder %s31, 0
      %p268 = por %p266, %p267
      %p269 = scmp.le.s32.totalorder 1, %s25
      %p270 = scmp.lt.s32.totalorder %s25, 9
      %p271 = pnand %p269, %p270
      %p272 = pneg %p271
      // Predicated region
      $region9: #{tpu_custom_call.1} parent=5 // pred_check
        _
      $region10: #{tpu_custom_call.1} parent=5 // pred_check_branch
        %274 = sbr.rel (%p271) target = $region12
      $region11: #{tpu_custom_call.1} parent=5 // pred_region
        %s275 = ssub.s32 %s25, 1
        // Predicated region
        $region13: #{tpu_custom_call.1} parent=11 // pred_check
          %p276 = pneg %p86
        $region14: #{tpu_custom_call.1} parent=11 // pred_check_branch
          %278 = sbr.rel (%p276) target = $region16
        $region15: #{tpu_custom_call.1} parent=11 // pred_region
          %s280 = ssub.s32 3072, 3072
          %281 = vsyncadd [#allocation13], %s280
          %s282 = sshll.u32 [#allocation12], 4
          %s283 = int_to_ptr.vmem [resolvable:$true] %s282
          %288 = dma.hbm_to_vmem [thread:$0]  %s1, 3072, %s283, [#allocation13], 192, 192, 12
        $region16: #{tpu_custom_call.1} parent=11 // pred_fallthru
          _
        // Predicated region
        $region17: #{tpu_custom_call.1} parent=11 // pred_check
          %p289 = pneg %p107
        $region18: #{tpu_custom_call.1} parent=11 // pred_check_branch
          %291 = sbr.rel (%p289) target = $region20
        $region19: #{tpu_custom_call.1} parent=11 // pred_region
          %s293 = ssub.s32 48, 48
          %294 = vsyncadd [#allocation13], %s293
          %s296 = sshll.u32 [#allocation14], 4
          %s297 = int_to_ptr.vmem [resolvable:$true] %s296
          %299 = dma.hbm_to_vmem [thread:$0]  %s2, 48, %s297, [#allocation13]
        $region20: #{tpu_custom_call.1} parent=11 // pred_fallthru
          _
        // Predicated region
        $region21: #{tpu_custom_call.1} parent=11 // pred_check
          %p300 = pneg %p128
        $region22: #{tpu_custom_call.1} parent=11 // pred_check_branch
          %302 = sbr.rel (%p300) target = $region24
        $region23: #{tpu_custom_call.1} parent=11 // pred_region
          %s304 = ssub.s32 1024, 1024
          %305 = vsyncadd [#allocation16], %s304
          %s306 = sshll.u32 [#allocation15], 4
          %s307 = int_to_ptr.vmem [resolvable:$true] %s306
          %312 = dma.hbm_to_vmem [thread:$0]  %s3, 1024, %s307, [#allocation16], 64, 64, 4
        $region24: #{tpu_custom_call.1} parent=11 // pred_fallthru
          _
        // Predicated region
        $region25: #{tpu_custom_call.1} parent=11 // pred_check
          %p313 = pneg %p149
        $region26: #{tpu_custom_call.1} parent=11 // pred_check_branch
          %315 = sbr.rel (%p313) target = $region28
        $region27: #{tpu_custom_call.1} parent=11 // pred_region
          %s317 = ssub.s32 16, 16
          %318 = vsyncadd [#allocation16], %s317
          %s320 = sshll.u32 [#allocation17], 4
          %s321 = int_to_ptr.vmem [resolvable:$true] %s320
          %323 = dma.hbm_to_vmem [thread:$0]  %s4, 16, %s321, [#allocation16]
        $region28: #{tpu_custom_call.1} parent=11 // pred_fallthru
          _
        // Predicated region
        $region29: #{tpu_custom_call.1} parent=11 // pred_check
          %p324 = pneg %p170
        $region30: #{tpu_custom_call.1} parent=11 // pred_check_branch
          %326 = sbr.rel (%p324) target = $region32
        $region31: #{tpu_custom_call.1} parent=11 // pred_region
          %s328 = ssub.s32 4096, 4096
          %329 = vsyncadd [#allocation19], %s328
          %s330 = sshll.u32 [#allocation18], 4
          %s331 = int_to_ptr.vmem [resolvable:$true] %s330
          %336 = dma.hbm_to_vmem [thread:$0]  %s5, 4096, %s331, [#allocation19], 256, 256, 16
        $region32: #{tpu_custom_call.1} parent=11 // pred_fallthru
          _
        // Predicated region
        $region33: #{tpu_custom_call.1} parent=11 // pred_check
          %p337 = pneg %p191
        $region34: #{tpu_custom_call.1} parent=11 // pred_check_branch
          %339 = sbr.rel (%p337) target = $region36
        $region35: #{tpu_custom_call.1} parent=11 // pred_region
          %s341 = ssub.s32 64, 64
          %342 = vsyncadd [#allocation19], %s341
          %s344 = sshll.u32 [#allocation20], 4
          %s345 = int_to_ptr.vmem [resolvable:$true] %s344
          %347 = dma.hbm_to_vmem [thread:$0]  %s6, 64, %s345, [#allocation19]
        $region36: #{tpu_custom_call.1} parent=11 // pred_fallthru
          _
        // Predicated region
        $region37: #{tpu_custom_call.1} parent=11 // pred_check
          %p348 = pneg %p212
        $region38: #{tpu_custom_call.1} parent=11 // pred_check_branch
          %350 = sbr.rel (%p348) target = $region40
        $region39: #{tpu_custom_call.1} parent=11 // pred_region
          %s352 = ssub.s32 4096, 4096
          %353 = vsyncadd [#allocation22], %s352
          %s354 = sshll.u32 [#allocation21], 4
          %s355 = int_to_ptr.vmem [resolvable:$true] %s354
          %360 = dma.hbm_to_vmem [thread:$0]  %s7, 4096, %s355, [#allocation22], 64, 64, 4
        $region40: #{tpu_custom_call.1} parent=11 // pred_fallthru
          _
        // Predicated region
        $region41: #{tpu_custom_call.1} parent=11 // pred_check
          %p361 = pneg %p233
        $region42: #{tpu_custom_call.1} parent=11 // pred_check_branch
          %363 = sbr.rel (%p361) target = $region44
        $region43: #{tpu_custom_call.1} parent=11 // pred_region
          %s365 = ssub.s32 16, 16
          %366 = vsyncadd [#allocation22], %s365
          %s368 = sshll.u32 [#allocation23], 4
          %s369 = int_to_ptr.vmem [resolvable:$true] %s368
          %371 = dma.hbm_to_vmem [thread:$0]  %s8, 16, %s369, [#allocation22]
        $region44: #{tpu_custom_call.1} parent=11 // pred_fallthru
          _
      $region12: #{tpu_custom_call.1} parent=5 // pred_fallthru
        _
      %p372 = scmp.lt.s32.totalorder %s25, 8
      // Predicated region
      $region45: #{tpu_custom_call.1} parent=5 // pred_check
        %p373 = pneg %p372
      $region46: #{tpu_custom_call.1} parent=5 // pred_check_branch
        %375 = sbr.rel (%p373) target = $region48
      $region47: #{tpu_custom_call.1} parent=5 // pred_region
        // Predicated region
        $region49: #{tpu_custom_call.1} parent=47 // pred_check
          %p376 = pneg %p59
        $region50: #{tpu_custom_call.1} parent=47 // pred_check_branch
          %378 = sbr.rel (%p376) target = $region52
        $region51: #{tpu_custom_call.1} parent=47 // pred_region
          %s379 = sand.u32 %s49, 1
          %s380 = scalar_lea.sflag [#allocation10], %s379
          %s381 = sand.u32 %s49, 1
          %s382 = smul.addr %s381, 16
          %s383 = scalar_lea.vmem [#allocation9], %s382
          %s385 = ssub.s32 256, 256
          %386 = vsyncadd %s380, %s385
          %s387 = smul.addr %s32, 2
          %s388 = smul.addr %s33, 4
          %s389 = sadd.s32 %s387, %s388
          %s390 = smul.addr %s389, 128
          %s391 = scalar_lea.hbm %s0, %s390
          %s392 = sshll.u32 %s383, 4
          %s393 = int_to_ptr.vmem [resolvable:$true] %s392
          %398 = dma.hbm_to_vmem [thread:$0]  %s391, 256, %s393, %s380, 128, 128, 8
        $region52: #{tpu_custom_call.1} parent=47 // pred_fallthru
          _
      $region48: #{tpu_custom_call.1} parent=5 // pred_fallthru
        _
      %p399 = scmp.le.s32.totalorder 1, %s25
      %p400 = scmp.lt.s32.totalorder %s25, 9
      %p401 = pnand %p399, %p400
      %p402 = pneg %p401
      // Predicated region
      $region53: #{tpu_custom_call.1} parent=5 // pred_check
        _
      $region54: #{tpu_custom_call.1} parent=5 // pred_check_branch
        %404 = sbr.rel (%p401) target = $region56
      $region55: #{tpu_custom_call.1} parent=5 // pred_region
        %s405 = ssub.s32 %s25, 1
        %s406 = sand.u32 %s52, 1
        %s407 = scalar_lea.sflag [#allocation10], %s406
        %s408 = sand.u32 %s52, 1
        %s409 = smul.addr %s408, 16
        %s410 = scalar_lea.vmem [#allocation9], %s409
        // Predicated region
        $region57: #{tpu_custom_call.1} parent=55 // pred_check
          %p411 = pneg %p65
        $region58: #{tpu_custom_call.1} parent=55 // pred_check_branch
          %413 = sbr.rel (%p411) target = $region60
        $region59: #{tpu_custom_call.1} parent=55 // pred_region
          %414 = dma.done %s407, 256
        $region60: #{tpu_custom_call.1} parent=55 // pred_fallthru
          _
        // Predicated region
        $region61: #{tpu_custom_call.1} parent=55 // pred_check
          %p415 = pneg %p86
        $region62: #{tpu_custom_call.1} parent=55 // pred_check_branch
          %417 = sbr.rel (%p415) target = $region64
        $region63: #{tpu_custom_call.1} parent=55 // pred_region
          %418 = dma.done [#allocation13], 3072
        $region64: #{tpu_custom_call.1} parent=55 // pred_fallthru
          _
        // Predicated region
        $region65: #{tpu_custom_call.1} parent=55 // pred_check
          %p419 = pneg %p107
        $region66: #{tpu_custom_call.1} parent=55 // pred_check_branch
          %421 = sbr.rel (%p419) target = $region68
        $region67: #{tpu_custom_call.1} parent=55 // pred_region
          %422 = dma.done [#allocation13], 48
        $region68: #{tpu_custom_call.1} parent=55 // pred_fallthru
          _
        // Predicated region
        $region69: #{tpu_custom_call.1} parent=55 // pred_check
          %p423 = pneg %p128
        $region70: #{tpu_custom_call.1} parent=55 // pred_check_branch
          %425 = sbr.rel (%p423) target = $region72
        $region71: #{tpu_custom_call.1} parent=55 // pred_region
          %426 = dma.done [#allocation16], 1024
        $region72: #{tpu_custom_call.1} parent=55 // pred_fallthru
          _
        // Predicated region
        $region73: #{tpu_custom_call.1} parent=55 // pred_check
          %p427 = pneg %p149
        $region74: #{tpu_custom_call.1} parent=55 // pred_check_branch
          %429 = sbr.rel (%p427) target = $region76
        $region75: #{tpu_custom_call.1} parent=55 // pred_region
          %430 = dma.done [#allocation16], 16
        $region76: #{tpu_custom_call.1} parent=55 // pred_fallthru
          _
        // Predicated region
        $region77: #{tpu_custom_call.1} parent=55 // pred_check
          %p431 = pneg %p170
        $region78: #{tpu_custom_call.1} parent=55 // pred_check_branch
          %433 = sbr.rel (%p431) target = $region80
        $region79: #{tpu_custom_call.1} parent=55 // pred_region
          %434 = dma.done [#allocation19], 4096
        $region80: #{tpu_custom_call.1} parent=55 // pred_fallthru
          _
        // Predicated region
        $region81: #{tpu_custom_call.1} parent=55 // pred_check
          %p435 = pneg %p191
        $region82: #{tpu_custom_call.1} parent=55 // pred_check_branch
          %437 = sbr.rel (%p435) target = $region84
        $region83: #{tpu_custom_call.1} parent=55 // pred_region
          %438 = dma.done [#allocation19], 64
        $region84: #{tpu_custom_call.1} parent=55 // pred_fallthru
          _
        // Predicated region
        $region85: #{tpu_custom_call.1} parent=55 // pred_check
          %p439 = pneg %p212
        $region86: #{tpu_custom_call.1} parent=55 // pred_check_branch
          %441 = sbr.rel (%p439) target = $region88
        $region87: #{tpu_custom_call.1} parent=55 // pred_region
          %442 = dma.done [#allocation22], 4096
        $region88: #{tpu_custom_call.1} parent=55 // pred_fallthru
          _
        // Predicated region
        $region89: #{tpu_custom_call.1} parent=55 // pred_check
          %p443 = pneg %p233
        $region90: #{tpu_custom_call.1} parent=55 // pred_check_branch
          %445 = sbr.rel (%p443) target = $region92
        $region91: #{tpu_custom_call.1} parent=55 // pred_region
          %446 = dma.done [#allocation22], 16
        $region92: #{tpu_custom_call.1} parent=55 // pred_fallthru
          _
        %s447 = sand.u32 %s52, 1
        %s448 = scalar_lea.sflag [#allocation10], %s447
        %s449 = sand.u32 %s52, 1
        %s450 = smul.addr %s449, 16
        %s451 = scalar_lea.vmem [#allocation9], %s450
        %p452 = pneg %p65
        %p453 = pneg %p62
        %p454 = pneg %p86
        %p455 = pneg %p83
        %p456 = pneg %p107
        %p457 = pneg %p104
        %p458 = pneg %p128
        %p459 = pneg %p125
        %p460 = pneg %p149
        %p461 = pneg %p146
        %p462 = pneg %p170
        %p463 = pneg %p167
        %p464 = pneg %p191
        %p465 = pneg %p188
        %p466 = pneg %p212
        %p467 = pneg %p209
        %p468 = pneg %p233
        %p469 = pneg %p230
        %p470 = pneg %p261
        %p471 = pneg %p258
        %s472 = sand.u32 %s248, 1
        %s473 = scalar_lea.sflag [#allocation11], %s472
        %s474 = sand.u32 %s248, 1
        %s475 = smul.addr %s474, 16
        %s476 = scalar_lea.vmem [#allocation24], %s475
        %p478 = scmp.eq.s32.totalorder %s35, 0
        // Predicated region
        $region93: #{tpu_custom_call.1} parent=55 // pred_check
          %p479 = pneg %p478
        $region94: #{tpu_custom_call.1} parent=55 // pred_check_branch
          %481 = sbr.rel (%p479) target = $region96
        $region95: #{tpu_custom_call.1} parent=55 // pred_region
          %482 = vst [vmem:[#allocation2] sm:$0xff] 0.0
          %483 = vst [vmem:[#allocation2 + $0x8] sm:$0xff] 0.0
          %484 = vst [vmem:[#allocation3] sm:$0xff] 0.0
          %485 = vst [vmem:[#allocation3 + $0x8] sm:$0xff] 0.0
          %486 = vst [vmem:[#allocation4] sm:$0xff] 0.0
          %487 = vst [vmem:[#allocation4 + $0x8] sm:$0xff] 0.0
          %488 = vst [vmem:[#allocation5] sm:$0xff] 0.0
          %489 = vst [vmem:[#allocation5 + $0x8] sm:$0xff] 0.0
          %490 = vst [vmem:[#allocation6] sm:$0xff] 0.0
          %491 = vst [vmem:[#allocation6 + $0x8] sm:$0xff] 0.0
          %492 = vst [vmem:[#allocation7] sm:$0xff] 0.0
          %493 = vst [vmem:[#allocation7 + $0x8] sm:$0xff] 0.0
          %494 = vst [vmem:[#allocation7 + $0x10] sm:$0xff] 0.0
          %495 = vst [vmem:[#allocation7 + $0x18] sm:$0xff] 0.0
          %496 = vst [vmem:[#allocation7 + $0x20] sm:$0xff] 0.0
          %497 = vst [vmem:[#allocation7 + $0x28] sm:$0xff] 0.0
          %498 = vst [vmem:[#allocation7 + $0x30] sm:$0xff] 0.0
          %499 = vst [vmem:[#allocation7 + $0x38] sm:$0xff] 0.0
          %500 = vst [vmem:[#allocation8] sm:$0xff] 0.0
          %501 = vst [vmem:[#allocation8 + $0x8] sm:$0xff] 0.0
        $region96: #{tpu_custom_call.1} parent=55 // pred_fallthru
          _
        %v502 = vld [vmem:[%s410] sm:$0xff]
        %v503 = vld [vmem:[%s410 + $0x8] sm:$0xff]
        %v504 = vpack.c.bf16 %v503, %v502
        %v505 = vld [vmem:[#allocation12] sm:$0xff]
        %v506 = vld [vmem:[#allocation12 + $0x8] sm:$0xf]
        %v507 = vld [vmem:[#allocation12 + $0xc] sm:$0xff]
        %v508 = vld [vmem:[#allocation12 + $0x14] sm:$0xf]
        %v509 = vld [vmem:[#allocation12 + $0x18] sm:$0xff]
        %v510 = vld [vmem:[#allocation12 + $0x20] sm:$0xf]
        %v511 = vld [vmem:[#allocation12 + $0x24] sm:$0xff]
        %v512 = vld [vmem:[#allocation12 + $0x2c] sm:$0xf]
        %v513 = vld [vmem:[#allocation12 + $0x30] sm:$0xff]
        %v514 = vld [vmem:[#allocation12 + $0x38] sm:$0xf]
        %v515 = vld [vmem:[#allocation12 + $0x3c] sm:$0xff]
        %v516 = vld [vmem:[#allocation12 + $0x44] sm:$0xf]
        %v517 = vld [vmem:[#allocation12 + $0x48] sm:$0xff]
        %v518 = vld [vmem:[#allocation12 + $0x50] sm:$0xf]
        %v519 = vld [vmem:[#allocation12 + $0x54] sm:$0xff]
        %v520 = vld [vmem:[#allocation12 + $0x5c] sm:$0xf]
        %v521 = vld [vmem:[#allocation12 + $0x60] sm:$0xff]
        %v522 = vld [vmem:[#allocation12 + $0x68] sm:$0xf]
        %v523 = vld [vmem:[#allocation12 + $0x6c] sm:$0xff]
        %v524 = vld [vmem:[#allocation12 + $0x74] sm:$0xf]
        %v525 = vld [vmem:[#allocation12 + $0x78] sm:$0xff]
        %v526 = vld [vmem:[#allocation12 + $0x80] sm:$0xf]
        %v527 = vld [vmem:[#allocation12 + $0x84] sm:$0xff]
        %v528 = vld [vmem:[#allocation12 + $0x8c] sm:$0xf]
        %v529 = vld [vmem:[#allocation12 + $0x90] sm:$0xff]
        %v530 = vld [vmem:[#allocation12 + $0x98] sm:$0xf]
        %v531 = vld [vmem:[#allocation12 + $0x9c] sm:$0xff]
        %v532 = vld [vmem:[#allocation12 + $0xa4] sm:$0xf]
        %v533 = vld [vmem:[#allocation12 + $0xa8] sm:$0xff]
        %v534 = vld [vmem:[#allocation12 + $0xb0] sm:$0xf]
        %v535 = vld [vmem:[#allocation12 + $0xb4] sm:$0xff]
        %v536 = vld [vmem:[#allocation12 + $0xbc] sm:$0xf]
        %v537 = vld [vmem:[#allocation14] sm:$0x7]
        %v539 = vlaneseq
        %v540 = vshrl.u32 %v539, 7
        %v541 = vsub.s32 0, %v540
        %v542 = vrot.slane %v537, %v541
        %v543 = vlaneseq
        %v544 = vshrl.u32 %v543, 7
        %v545 = vsub.s32 1, %v544
        %v546 = vrot.slane %v537, %v545
        %v547 = vlaneseq
        %v548 = vshrl.u32 %v547, 7
        %v549 = vsub.s32 2, %v548
        %v550 = vrot.slane %v537, %v549
        %v586 = vunpack.c.l.b16 %v505
        %v587 = vunpack.c.h.b16 %v505
        %v588 = vunpack.c.l.b16 %v506
        %v589 = vunpack.c.l.b16 %v507
        %v590 = vunpack.c.h.b16 %v507
        %v591 = vunpack.c.l.b16 %v508
        %v592 = vunpack.c.l.b16 %v509
        %v593 = vunpack.c.h.b16 %v509
        %v594 = vunpack.c.l.b16 %v510
        %v595 = vunpack.c.l.b16 %v511
        %v596 = vunpack.c.h.b16 %v511
        %v597 = vunpack.c.l.b16 %v512
        %v598 = vunpack.c.l.b16 %v513
        %v599 = vunpack.c.h.b16 %v513
        %v600 = vunpack.c.l.b16 %v514
        %v601 = vunpack.c.l.b16 %v515
        %v602 = vunpack.c.h.b16 %v515
        %v603 = vunpack.c.l.b16 %v516
        %v604 = vunpack.c.l.b16 %v517
        %v605 = vunpack.c.h.b16 %v517
        %v606 = vunpack.c.l.b16 %v518
        %v607 = vunpack.c.l.b16 %v519
        %v608 = vunpack.c.h.b16 %v519
        %v609 = vunpack.c.l.b16 %v520
        %v610 = vunpack.c.l.b16 %v521
        %v611 = vunpack.c.h.b16 %v521
        %v612 = vunpack.c.l.b16 %v522
        %v613 = vunpack.c.l.b16 %v523
        %v614 = vunpack.c.h.b16 %v523
        %v615 = vunpack.c.l.b16 %v524
        %v616 = vunpack.c.l.b16 %v525
        %v617 = vunpack.c.h.b16 %v525
        %v618 = vunpack.c.l.b16 %v526
        %v619 = vunpack.c.l.b16 %v527
        %v620 = vunpack.c.h.b16 %v527
        %v621 = vunpack.c.l.b16 %v528
        %v622 = vunpack.c.l.b16 %v529
        %v623 = vunpack.c.h.b16 %v529
        %v624 = vunpack.c.l.b16 %v530
        %v625 = vunpack.c.l.b16 %v531
        %v626 = vunpack.c.h.b16 %v531
        %v627 = vunpack.c.l.b16 %v532
        %v628 = vunpack.c.l.b16 %v533
        %v629 = vunpack.c.h.b16 %v533
        %v630 = vunpack.c.l.b16 %v534
        %v631 = vunpack.c.l.b16 %v535
        %v632 = vunpack.c.h.b16 %v535
        %v633 = vunpack.c.l.b16 %v536
        %v634 = vpack.c.b16 %v589, %v586
        %v635 = vpack.c.b16 %v590, %v587
        %v636 = vpack.c.b16 %v591, %v588
        %v637 = vpack.c.b16 %v595, %v592
        %v638 = vpack.c.b16 %v596, %v593
        %v639 = vpack.c.b16 %v597, %v594
        %v640 = vpack.c.b16 %v601, %v598
        %v641 = vpack.c.b16 %v602, %v599
        %v642 = vpack.c.b16 %v603, %v600
        %v643 = vpack.c.b16 %v607, %v604
        %v644 = vpack.c.b16 %v608, %v605
        %v645 = vpack.c.b16 %v609, %v606
        %v646 = vpack.c.b16 %v613, %v610
        %v647 = vpack.c.b16 %v614, %v611
        %v648 = vpack.c.b16 %v615, %v612
        %v649 = vpack.c.b16 %v619, %v616
        %v650 = vpack.c.b16 %v620, %v617
        %v651 = vpack.c.b16 %v621, %v618
        %v652 = vpack.c.b16 %v625, %v622
        %v653 = vpack.c.b16 %v626, %v623
        %v654 = vpack.c.b16 %v627, %v624
        %v655 = vpack.c.b16 %v631, %v628
        %v656 = vpack.c.b16 %v632, %v629
        %v657 = vpack.c.b16 %v633, %v630
        %682 = vmatprep.subr.bf16.mxu0 %v635
        %683 = vmatpush1.bf16.msra.mxu0 %v634
        %684 = vmatprep.subr.bf16.mxu0 %v638
        %685 = vmatpush1.bf16.msra.mxu0 %v637
        %686 = vmatprep.subr.bf16.mxu0 %v641
        %687 = vmatpush1.bf16.msra.mxu0 %v640
        %688 = vmatprep.subr.bf16.mxu0 %v644
        %689 = vmatpush1.bf16.msra.mxu0 %v643
        %690 = vmatprep.subr.bf16.mxu0 %v647
        %691 = vmatpush1.bf16.msra.mxu0 %v646
        %692 = vmatprep.subr.bf16.mxu0 %v650
        %693 = vmatpush1.bf16.msra.mxu0 %v649
        %694 = vmatprep.subr.bf16.mxu0 %v653
        %695 = vmatpush1.bf16.msra.mxu0 %v652
        %696 = vmatprep.subr.bf16.mxu0 %v656
        %697 = vmatpush1.bf16.msra.mxu0 %v655
        %698 = vmatprep.subr.bf16.mxu0 0
        %699 = vmatpush1.bf16.msra.mxu0 0
        %700 = vmatprep.subr.bf16.mxu0 0
        %701 = vmatpush1.bf16.msra.mxu0 0
        %702 = vmatprep.subr.bf16.mxu0 0
        %703 = vmatpush1.bf16.msra.mxu0 0
        %704 = vmatprep.subr.bf16.mxu0 0
        %705 = vmatpush1.bf16.msra.mxu0 0
        %706 = vmatprep.subr.bf16.mxu0 0
        %707 = vmatpush1.bf16.msra.mxu0 0
        %708 = vmatprep.subr.bf16.mxu0 0
        %709 = vmatpush1.bf16.msra.mxu0 0
        %710 = vmatprep.subr.bf16.mxu0 0
        %711 = vmatpush1.bf16.msra.mxu0 0
        %712 = vmatprep.subr.bf16.mxu0 0
        %713 = vmatpush1.bf16.msra.mxu0 0
        %714 = vmatprep.mubr.bf16.mxu0 0
        %715 = vmatmul.mubr.bf16.gmra.mrb[0].mxu0 %v504
        %v716 = vpop.f32.mrb[0].mxu0
        %v717 = vadd.f32 %v542, %v716
        %v718 = vpop.f32.mrb[0].mxu0
        %v719 = vadd.f32 %v546, %v718
        %v720 = vpop.f32.mrb[0].mxu0
        %v721 = vadd.f32 %v542, %v720
        %v722 = vpop.f32.mrb[0].mxu0
        %v723 = vadd.f32 %v546, %v722
        %724 = vdwg.mxu0
        %725 = vmatprep.subr.bf16.mxu0 0
        %726 = vmatpush1.bf16.msra.mxu0 %v636
        %727 = vmatprep.subr.bf16.mxu0 0
        %728 = vmatpush1.bf16.msra.mxu0 %v639
        %729 = vmatprep.subr.bf16.mxu0 0
        %730 = vmatpush1.bf16.msra.mxu0 %v642
        %731 = vmatprep.subr.bf16.mxu0 0
        %732 = vmatpush1.bf16.msra.mxu0 %v645
        %733 = vmatprep.subr.bf16.mxu0 0
        %734 = vmatpush1.bf16.msra.mxu0 %v648
        %735 = vmatprep.subr.bf16.mxu0 0
        %736 = vmatpush1.bf16.msra.mxu0 %v651
        %737 = vmatprep.subr.bf16.mxu0 0
        %738 = vmatpush1.bf16.msra.mxu0 %v654
        %739 = vmatprep.subr.bf16.mxu0 0
        %740 = vmatpush1.bf16.msra.mxu0 %v657
        %741 = vmatprep.subr.bf16.mxu0 0
        %742 = vmatpush1.bf16.msra.mxu0 0
        %743 = vmatprep.subr.bf16.mxu0 0
        %744 = vmatpush1.bf16.msra.mxu0 0
        %745 = vmatprep.subr.bf16.mxu0 0
        %746 = vmatpush1.bf16.msra.mxu0 0
        %747 = vmatprep.subr.bf16.mxu0 0
        %748 = vmatpush1.bf16.msra.mxu0 0
        %749 = vmatprep.subr.bf16.mxu0 0
        %750 = vmatpush1.bf16.msra.mxu0 0
        %751 = vmatprep.subr.bf16.mxu0 0
        %752 = vmatpush1.bf16.msra.mxu0 0
        %753 = vmatprep.subr.bf16.mxu0 0
        %754 = vmatpush1.bf16.msra.mxu0 0
        %755 = vmatprep.subr.bf16.mxu0 0
        %756 = vmatpush1.bf16.msra.mxu0 0
        %757 = vmatprep.mubr.bf16.mxu0 0
        %758 = vmatmul.mubr.bf16.gmra.mrb[0].mxu0 %v504
        %v759 = vpop.f32.mrb[0].mxu0
        %v760 = vadd.f32 %v550, %v759
        %v761 = vpop.f32.mrb[0].mxu0
        %v762 = vpop.f32.mrb[0].mxu0
        %v763 = vadd.f32 %v550, %v762
        %v764 = vpop.f32.mrb[0].mxu0
        %765 = vdwg.mxu0
        %v766 = vld [vmem:[#allocation2] sm:$0xff]
        %v767 = vld [vmem:[#allocation2 + $0x8] sm:$0xff]
        %v768 = vsub.f32 %v717, %v766
        %v769 = vsub.f32 %v721, %v767
        %v770 = vmul.f32 %v768, 0.5
        %v771 = vmul.f32 %v769, 0.5
        %v772 = vadd.f32 %v766, %v770
        %v773 = vadd.f32 %v767, %v771
        %vm774 = vcmp.ge.f32.partialorder %v772, 1.0
        %vm775 = vcmp.ge.f32.partialorder %v773, 1.0
        %v776 = vsel %vm774, 0.0, %v772
        %v777 = vsel %vm775, 0.0, %v773
        %778 = vst [vmem:[#allocation2] sm:$0xff] %v776
        %779 = vst [vmem:[#allocation2 + $0x8] sm:$0xff] %v777
        %v780 = vsel %vm774, 1, 0
        %v781 = vsel %vm775, 1, 0
        %v782 = vcvt.s32.f32 %v780
        %v783 = vcvt.s32.f32 %v781
        %v784 = vpack.c.bf16 %v783, %v782
        %v785 = vld [vmem:[#allocation3] sm:$0xff]
        %v786 = vld [vmem:[#allocation3 + $0x8] sm:$0xff]
        %v787 = vsub.f32 %v719, %v785
        %v788 = vsub.f32 %v723, %v786
        %v789 = vmul.f32 %v787, 0.5
        %v790 = vmul.f32 %v788, 0.5
        %v791 = vadd.f32 %v785, %v789
        %v792 = vadd.f32 %v786, %v790
        %vm793 = vcmp.ge.f32.partialorder %v791, 1.0
        %vm794 = vcmp.ge.f32.partialorder %v792, 1.0
        %v795 = vsel %vm793, 0.0, %v791
        %v796 = vsel %vm794, 0.0, %v792
        %797 = vst [vmem:[#allocation3] sm:$0xff] %v795
        %798 = vst [vmem:[#allocation3 + $0x8] sm:$0xff] %v796
        %v799 = vsel %vm793, 1, 0
        %v800 = vsel %vm794, 1, 0
        %v801 = vcvt.s32.f32 %v799
        %v802 = vcvt.s32.f32 %v800
        %v803 = vpack.c.bf16 %v802, %v801
        %v804 = vld [vmem:[#allocation4] sm:$0xff]
        %v805 = vld [vmem:[#allocation4 + $0x8] sm:$0xff]
        %v806 = vsub.f32 %v760, %v804
        %v807 = vsub.f32 %v763, %v805
        %v808 = vmul.f32 %v806, 0.5
        %v809 = vmul.f32 %v807, 0.5
        %v810 = vadd.f32 %v804, %v808
        %v811 = vadd.f32 %v805, %v809
        %vm812 = vcmp.ge.f32.partialorder %v810, 1.0
        %vm813 = vcmp.ge.f32.partialorder %v811, 1.0
        %v814 = vsel %vm812, 0.0, %v810
        %v815 = vsel %vm813, 0.0, %v811
        %816 = vst [vmem:[#allocation4] sm:$0xff] %v814
        %817 = vst [vmem:[#allocation4 + $0x8] sm:$0xff] %v815
        %v818 = vsel %vm812, 1, 0
        %v819 = vsel %vm813, 1, 0
        %v820 = vcvt.s32.f32 %v818
        %v821 = vcvt.s32.f32 %v819
        %v822 = vpack.c.bf16 %v821, %v820
        %vm823 = vcmask 130048
        %v825 = vsel %vm823, %v784, 0
        %v828 = vsel %vm823, %v803, 0
        %830 = vmatprep.subr.bf16.mxu0 0
        %831 = vmatpush1.bf16.xpose.msra.mxu0 %v828
        %832 = vmatprep.subr.bf16.mxu0 0
        %833 = vmatpush1.bf16.xpose.msra.mxu0 0
        %834 = vmatprep.subr.bf16.mxu0 0
        %835 = vmatpush1.bf16.xpose.msra.mxu0 0
        %836 = vmatprep.subr.bf16.mxu0 0
        %837 = vmatpush1.bf16.xpose.msra.mxu0 0
        %838 = vmatprep.subr.bf16.mxu0 0
        %839 = vmatpush1.bf16.xpose.msra.mxu0 0
        %840 = vmatprep.subr.bf16.mxu0 0
        %841 = vmatpush1.bf16.xpose.msra.mxu0 0
        %842 = vmatprep.subr.bf16.mxu0 0
        %843 = vmatpush1.bf16.xpose.msra.mxu0 0
        %844 = vmatprep.subr.bf16.mxu0 0
        %845 = vmatpush1.bf16.xpose.msra.mxu0 0
        %846 = vmatprep.subr.bf16.mxu0 0
        %847 = vmatpush1.bf16.xpose.msra.mxu0 0
        %848 = vmatprep.subr.bf16.mxu0 0
        %849 = vmatpush1.bf16.xpose.msra.mxu0 0
        %850 = vmatprep.subr.bf16.mxu0 0
        %851 = vmatpush1.bf16.xpose.msra.mxu0 0
        %852 = vmatprep.subr.bf16.mxu0 0
        %853 = vmatpush1.bf16.xpose.msra.mxu0 0
        %854 = vmatprep.subr.bf16.mxu0 0
        %855 = vmatpush1.bf16.xpose.msra.mxu0 0
        %856 = vmatprep.subr.bf16.mxu0 0
        %857 = vmatpush1.bf16.xpose.msra.mxu0 0
        %858 = vmatprep.subr.bf16.mxu0 0
        %859 = vmatpush1.bf16.xpose.msra.mxu0 0
        %860 = vmatprep.subr.bf16.mxu0 0
        %861 = vmatpush1.bf16.xpose.msra.mxu0 0
        %862 = vmatprep.mubr.bf16.mxu0 0
        %863 = vmatmul.mubr.bf16.gmra.mrb[0].mxu0 %v825
        %v864 = vpop.f32.mrb[0].mxu0
        %v865 = vadd.f32 0.0, %v864
        %v866 = vpop.f32.mrb[0].mxu0
        %v867 = vpop.f32.mrb[0].mxu0
        %v868 = vadd.f32 0.0, %v867
        %v869 = vpop.f32.mrb[0].mxu0
        %870 = vdwg.mxu0
        %v871 = vmul.f32 %v865, 0.125
        %v872 = vmul.f32 %v868, 0.125
        %v873 = vpack.c.bf16 %v872, %v871
        %v875 = vsel %vm823, %v873, 0
        %877 = vmatprep.subr.bf16.mxu0 0
        %878 = vmatpush1.bf16.msra.mxu0 %v822
        %879 = vmatprep.subr.bf16.mxu0 0
        %880 = vmatpush1.bf16.msra.mxu0 0
        %881 = vmatprep.subr.bf16.mxu0 0
        %882 = vmatpush1.bf16.msra.mxu0 0
        %883 = vmatprep.subr.bf16.mxu0 0
        %884 = vmatpush1.bf16.msra.mxu0 0
        %885 = vmatprep.subr.bf16.mxu0 0
        %886 = vmatpush1.bf16.msra.mxu0 0
        %887 = vmatprep.subr.bf16.mxu0 0
        %888 = vmatpush1.bf16.msra.mxu0 0
        %889 = vmatprep.subr.bf16.mxu0 0
        %890 = vmatpush1.bf16.msra.mxu0 0
        %891 = vmatprep.subr.bf16.mxu0 0
        %892 = vmatpush1.bf16.msra.mxu0 0
        %893 = vmatprep.subr.bf16.mxu0 0
        %894 = vmatpush1.bf16.msra.mxu0 0
        %895 = vmatprep.subr.bf16.mxu0 0
        %896 = vmatpush1.bf16.msra.mxu0 0
        %897 = vmatprep.subr.bf16.mxu0 0
        %898 = vmatpush1.bf16.msra.mxu0 0
        %899 = vmatprep.subr.bf16.mxu0 0
        %900 = vmatpush1.bf16.msra.mxu0 0
        %901 = vmatprep.subr.bf16.mxu0 0
        %902 = vmatpush1.bf16.msra.mxu0 0
        %903 = vmatprep.subr.bf16.mxu0 0
        %904 = vmatpush1.bf16.msra.mxu0 0
        %905 = vmatprep.subr.bf16.mxu0 0
        %906 = vmatpush1.bf16.msra.mxu0 0
        %907 = vmatprep.subr.bf16.mxu0 0
        %908 = vmatpush1.bf16.msra.mxu0 0
        %909 = vmatprep.mubr.bf16.mxu0 0
        %910 = vmatmul.mubr.bf16.gmra.mrb[0].mxu0 %v875
        %v911 = vpop.f32.mrb[0].mxu0
        %v912 = vadd.f32 0.0, %v911
        %v913 = vpop.f32.mrb[0].mxu0
        %v914 = vpop.f32.mrb[0].mxu0
        %v915 = vadd.f32 0.0, %v914
        %v916 = vpop.f32.mrb[0].mxu0
        %917 = vdwg.mxu0
        %919 = vrot.lane.b32.xlu0 %v784, 112
        %v920 = vpop.permute.xlu0 %919
        %922 = vrot.lane.b32.xlu0 %v803, 112
        %v923 = vpop.permute.xlu0 %922
        %v925 = vsel %vm823, %v920, 0
        %v928 = vsel %vm823, %v923, 0
        %930 = vmatprep.subr.bf16.mxu0 0
        %931 = vmatpush1.bf16.xpose.msra.mxu0 %v928
        %932 = vmatprep.subr.bf16.mxu0 0
        %933 = vmatpush1.bf16.xpose.msra.mxu0 0
        %934 = vmatprep.subr.bf16.mxu0 0
        %935 = vmatpush1.bf16.xpose.msra.mxu0 0
        %936 = vmatprep.subr.bf16.mxu0 0
        %937 = vmatpush1.bf16.xpose.msra.mxu0 0
        %938 = vmatprep.subr.bf16.mxu0 0
        %939 = vmatpush1.bf16.xpose.msra.mxu0 0
        %940 = vmatprep.subr.bf16.mxu0 0
        %941 = vmatpush1.bf16.xpose.msra.mxu0 0
        %942 = vmatprep.subr.bf16.mxu0 0
        %943 = vmatpush1.bf16.xpose.msra.mxu0 0
        %944 = vmatprep.subr.bf16.mxu0 0
        %945 = vmatpush1.bf16.xpose.msra.mxu0 0
        %946 = vmatprep.subr.bf16.mxu0 0
        %947 = vmatpush1.bf16.xpose.msra.mxu0 0
        %948 = vmatprep.subr.bf16.mxu0 0
        %949 = vmatpush1.bf16.xpose.msra.mxu0 0
        %950 = vmatprep.subr.bf16.mxu0 0
        %951 = vmatpush1.bf16.xpose.msra.mxu0 0
        %952 = vmatprep.subr.bf16.mxu0 0
        %953 = vmatpush1.bf16.xpose.msra.mxu0 0
        %954 = vmatprep.subr.bf16.mxu0 0
        %955 = vmatpush1.bf16.xpose.msra.mxu0 0
        %956 = vmatprep.subr.bf16.mxu0 0
        %957 = vmatpush1.bf16.xpose.msra.mxu0 0
        %958 = vmatprep.subr.bf16.mxu0 0
        %959 = vmatpush1.bf16.xpose.msra.mxu0 0
        %960 = vmatprep.subr.bf16.mxu0 0
        %961 = vmatpush1.bf16.xpose.msra.mxu0 0
        %962 = vmatprep.mubr.bf16.mxu0 0
        %963 = vmatmul.mubr.bf16.gmra.mrb[0].mxu0 %v925
        %v964 = vpop.f32.mrb[0].mxu0
        %v965 = vadd.f32 0.0, %v964
        %v966 = vpop.f32.mrb[0].mxu0
        %v967 = vpop.f32.mrb[0].mxu0
        %v968 = vadd.f32 0.0, %v967
        %v969 = vpop.f32.mrb[0].mxu0
        %970 = vdwg.mxu0
        %v971 = vmul.f32 %v965, 0.125
        %v972 = vmul.f32 %v968, 0.125
        %v973 = vpack.c.bf16 %v972, %v971
        %975 = vrot.lane.b32.xlu0 %v822, 112
        %v976 = vpop.permute.xlu0 %975
        %v979 = vsel %vm823, %v973, 0
        %981 = vmatprep.subr.bf16.mxu0 0
        %982 = vmatpush1.bf16.msra.mxu0 %v976
        %983 = vmatprep.subr.bf16.mxu0 0
        %984 = vmatpush1.bf16.msra.mxu0 0
        %985 = vmatprep.subr.bf16.mxu0 0
        %986 = vmatpush1.bf16.msra.mxu0 0
        %987 = vmatprep.subr.bf16.mxu0 0
        %988 = vmatpush1.bf16.msra.mxu0 0
        %989 = vmatprep.subr.bf16.mxu0 0
        %990 = vmatpush1.bf16.msra.mxu0 0
        %991 = vmatprep.subr.bf16.mxu0 0
        %992 = vmatpush1.bf16.msra.mxu0 0
        %993 = vmatprep.subr.bf16.mxu0 0
        %994 = vmatpush1.bf16.msra.mxu0 0
        %995 = vmatprep.subr.bf16.mxu0 0
        %996 = vmatpush1.bf16.msra.mxu0 0
        %997 = vmatprep.subr.bf16.mxu0 0
        %998 = vmatpush1.bf16.msra.mxu0 0
        %999 = vmatprep.subr.bf16.mxu0 0
        %1000 = vmatpush1.bf16.msra.mxu0 0
        %1001 = vmatprep.subr.bf16.mxu0 0
        %1002 = vmatpush1.bf16.msra.mxu0 0
        %1003 = vmatprep.subr.bf16.mxu0 0
        %1004 = vmatpush1.bf16.msra.mxu0 0
        %1005 = vmatprep.subr.bf16.mxu0 0
        %1006 = vmatpush1.bf16.msra.mxu0 0
        %1007 = vmatprep.subr.bf16.mxu0 0
        %1008 = vmatpush1.bf16.msra.mxu0 0
        %1009 = vmatprep.subr.bf16.mxu0 0
        %1010 = vmatpush1.bf16.msra.mxu0 0
        %1011 = vmatprep.subr.bf16.mxu0 0
        %1012 = vmatpush1.bf16.msra.mxu0 0
        %1013 = vmatprep.mubr.bf16.mxu0 0
        %1014 = vmatmul.mubr.bf16.gmra.mrb[0].mxu0 %v979
        %v1015 = vpop.f32.mrb[0].mxu0
        %v1016 = vadd.f32 0.0, %v1015
        %v1017 = vpop.f32.mrb[0].mxu0
        %v1018 = vpop.f32.mrb[0].mxu0
        %v1019 = vadd.f32 0.0, %v1018
        %v1020 = vpop.f32.mrb[0].mxu0
        %1021 = vdwg.mxu0
        %1022 = vrot.lane.b32.xlu0 %v784, 96
        %v1023 = vpop.permute.xlu0 %1022
        %1024 = vrot.lane.b32.xlu0 %v803, 96
        %v1025 = vpop.permute.xlu0 %1024
        %v1027 = vsel %vm823, %v1023, 0
        %v1030 = vsel %vm823, %v1025, 0
        %1032 = vmatprep.subr.bf16.mxu0 0
        %1033 = vmatpush1.bf16.xpose.msra.mxu0 %v1030
        %1034 = vmatprep.subr.bf16.mxu0 0
        %1035 = vmatpush1.bf16.xpose.msra.mxu0 0
        %1036 = vmatprep.subr.bf16.mxu0 0
        %1037 = vmatpush1.bf16.xpose.msra.mxu0 0
        %1038 = vmatprep.subr.bf16.mxu0 0
        %1039 = vmatpush1.bf16.xpose.msra.mxu0 0
        %1040 = vmatprep.subr.bf16.mxu0 0
        %1041 = vmatpush1.bf16.xpose.msra.mxu0 0
        %1042 = vmatprep.subr.bf16.mxu0 0
        %1043 = vmatpush1.bf16.xpose.msra.mxu0 0
        %1044 = vmatprep.subr.bf16.mxu0 0
        %1045 = vmatpush1.bf16.xpose.msra.mxu0 0
        %1046 = vmatprep.subr.bf16.mxu0 0
        %1047 = vmatpush1.bf16.xpose.msra.mxu0 0
        %1048 = vmatprep.subr.bf16.mxu0 0
        %1049 = vmatpush1.bf16.xpose.msra.mxu0 0
        %1050 = vmatprep.subr.bf16.mxu0 0
        %1051 = vmatpush1.bf16.xpose.msra.mxu0 0
        %1052 = vmatprep.subr.bf16.mxu0 0
        %1053 = vmatpush1.bf16.xpose.msra.mxu0 0
        %1054 = vmatprep.subr.bf16.mxu0 0
        %1055 = vmatpush1.bf16.xpose.msra.mxu0 0
        %1056 = vmatprep.subr.bf16.mxu0 0
        %1057 = vmatpush1.bf16.xpose.msra.mxu0 0
        %1058 = vmatprep.subr.bf16.mxu0 0
        %1059 = vmatpush1.bf16.xpose.msra.mxu0 0
        %1060 = vmatprep.subr.bf16.mxu0 0
        %1061 = vmatpush1.bf16.xpose.msra.mxu0 0
        %1062 = vmatprep.subr.bf16.mxu0 0
        %1063 = vmatpush1.bf16.xpose.msra.mxu0 0
        %1064 = vmatprep.mubr.bf16.mxu0 0
        %1065 = vmatmul.mubr.bf16.gmra.mrb[0].mxu0 %v1027
        %v1066 = vpop.f32.mrb[0].mxu0
        %v1067 = vadd.f32 0.0, %v1066
        %v1068 = vpop.f32.mrb[0].mxu0
        %v1069 = vpop.f32.mrb[0].mxu0
        %v1070 = vadd.f32 0.0, %v1069
        %v1071 = vpop.f32.mrb[0].mxu0
        %1072 = vdwg.mxu0
        %v1073 = vmul.f32 %v1067, 0.125
        %v1074 = vmul.f32 %v1070, 0.125
        %v1075 = vpack.c.bf16 %v1074, %v1073
        %1076 = vrot.lane.b32.xlu0 %v822, 96
        %v1077 = vpop.permute.xlu0 %1076
        %v1080 = vsel %vm823, %v1075, 0
        %1082 = vmatprep.subr.bf16.mxu0 0
        %1083 = vmatpush1.bf16.msra.mxu0 %v1077
        %1084 = vmatprep.subr.bf16.mxu0 0
        %1085 = vmatpush1.bf16.msra.mxu0 0
        %1086 = vmatprep.subr.bf16.mxu0 0
        %1087 = vmatpush1.bf16.msra.mxu0 0
        %1088 = vmatprep.subr.bf16.mxu0 0
        %1089 = vmatpush1.bf16.msra.mxu0 0
        %1090 = vmatprep.subr.bf16.mxu0 0
        %1091 = vmatpush1.bf16.msra.mxu0 0
        %1092 = vmatprep.subr.bf16.mxu0 0
        %1093 = vmatpush1.bf16.msra.mxu0 0
        %1094 = vmatprep.subr.bf16.mxu0 0
        %1095 = vmatpush1.bf16.msra.mxu0 0
        %1096 = vmatprep.subr.bf16.mxu0 0
        %1097 = vmatpush1.bf16.msra.mxu0 0
        %1098 = vmatprep.subr.bf16.mxu0 0
        %1099 = vmatpush1.bf16.msra.mxu0 0
        %1100 = vmatprep.subr.bf16.mxu0 0
        %1101 = vmatpush1.bf16.msra.mxu0 0
        %1102 = vmatprep.subr.bf16.mxu0 0
        %1103 = vmatpush1.bf16.msra.mxu0 0
        %1104 = vmatprep.subr.bf16.mxu0 0
        %1105 = vmatpush1.bf16.msra.mxu0 0
        %1106 = vmatprep.subr.bf16.mxu0 0
        %1107 = vmatpush1.bf16.msra.mxu0 0
        %1108 = vmatprep.subr.bf16.mxu0 0
        %1109 = vmatpush1.bf16.msra.mxu0 0
        %1110 = vmatprep.subr.bf16.mxu0 0
        %1111 = vmatpush1.bf16.msra.mxu0 0
        %1112 = vmatprep.subr.bf16.mxu0 0
        %1113 = vmatpush1.bf16.msra.mxu0 0
        %1114 = vmatprep.mubr.bf16.mxu0 0
        %1115 = vmatmul.mubr.bf16.gmra.mrb[0].mxu0 %v1080
        %v1116 = vpop.f32.mrb[0].mxu0
        %v1117 = vadd.f32 0.0, %v1116
        %v1118 = vpop.f32.mrb[0].mxu0
        %v1119 = vpop.f32.mrb[0].mxu0
        %v1120 = vadd.f32 0.0, %v1119
        %v1121 = vpop.f32.mrb[0].mxu0
        %1122 = vdwg.mxu0
        %1123 = vrot.lane.b32.xlu0 %v784, 80
        %v1124 = vpop.permute.xlu0 %1123
        %1125 = vrot.lane.b32.xlu0 %v803, 80
        %v1126 = vpop.permute.xlu0 %1125
        %v1128 = vsel %vm823, %v1124, 0
        %v1131 = vsel %vm823, %v1126, 0
        %1133 = vmatprep.subr.bf16.mxu0 0
        %1134 = vmatpush1.bf16.xpose.msra.mxu0 %v1131
        %1135 = vmatprep.subr.bf16.mxu0 0
        %1136 = vmatpush1.bf16.xpose.msra.mxu0 0
        %1137 = vmatprep.subr.bf16.mxu0 0
        %1138 = vmatpush1.bf16.xpose.msra.mxu0 0
        %1139 = vmatprep.subr.bf16.mxu0 0
        %1140 = vmatpush1.bf16.xpose.msra.mxu0 0
        %1141 = vmatprep.subr.bf16.mxu0 0
        %1142 = vmatpush1.bf16.xpose.msra.mxu0 0
        %1143 = vmatprep.subr.bf16.mxu0 0
        %1144 = vmatpush1.bf16.xpose.msra.mxu0 0
        %1145 = vmatprep.subr.bf16.mxu0 0
        %1146 = vmatpush1.bf16.xpose.msra.mxu0 0
        %1147 = vmatprep.subr.bf16.mxu0 0
        %1148 = vmatpush1.bf16.xpose.msra.mxu0 0
        %1149 = vmatprep.subr.bf16.mxu0 0
        %1150 = vmatpush1.bf16.xpose.msra.mxu0 0
        %1151 = vmatprep.subr.bf16.mxu0 0
        %1152 = vmatpush1.bf16.xpose.msra.mxu0 0
        %1153 = vmatprep.subr.bf16.mxu0 0
        %1154 = vmatpush1.bf16.xpose.msra.mxu0 0
        %1155 = vmatprep.subr.bf16.mxu0 0
        %1156 = vmatpush1.bf16.xpose.msra.mxu0 0
        %1157 = vmatprep.subr.bf16.mxu0 0
        %1158 = vmatpush1.bf16.xpose.msra.mxu0 0
        %1159 = vmatprep.subr.bf16.mxu0 0
        %1160 = vmatpush1.bf16.xpose.msra.mxu0 0
        %1161 = vmatprep.subr.bf16.mxu0 0
        %1162 = vmatpush1.bf16.xpose.msra.mxu0 0
        %1163 = vmatprep.subr.bf16.mxu0 0
        %1164 = vmatpush1.bf16.xpose.msra.mxu0 0
        %1165 = vmatprep.mubr.bf16.mxu0 0
        %1166 = vmatmul.mubr.bf16.gmra.mrb[0].mxu0 %v1128
        %v1167 = vpop.f32.mrb[0].mxu0
        %v1168 = vadd.f32 0.0, %v1167
        %v1169 = vpop.f32.mrb[0].mxu0
        %v1170 = vpop.f32.mrb[0].mxu0
        %v1171 = vadd.f32 0.0, %v1170
        %v1172 = vpop.f32.mrb[0].mxu0
        %1173 = vdwg.mxu0
        %v1174 = vmul.f32 %v1168, 0.125
        %v1175 = vmul.f32 %v1171, 0.125
        %v1176 = vpack.c.bf16 %v1175, %v1174
        %1177 = vrot.lane.b32.xlu0 %v822, 80
        %v1178 = vpop.permute.xlu0 %1177
        %v1181 = vsel %vm823, %v1176, 0
        %1183 = vmatprep.subr.bf16.mxu0 0
        %1184 = vmatpush1.bf16.msra.mxu0 %v1178
        %1185 = vmatprep.subr.bf16.mxu0 0
        %1186 = vmatpush1.bf16.msra.mxu0 0
        %1187 = vmatprep.subr.bf16.mxu0 0
        %1188 = vmatpush1.bf16.msra.mxu0 0
        %1189 = vmatprep.subr.bf16.mxu0 0
        %1190 = vmatpush1.bf16.msra.mxu0 0
        %1191 = vmatprep.subr.bf16.mxu0 0
        %1192 = vmatpush1.bf16.msra.mxu0 0
        %1193 = vmatprep.subr.bf16.mxu0 0
        %1194 = vmatpush1.bf16.msra.mxu0 0
        %1195 = vmatprep.subr.bf16.mxu0 0
        %1196 = vmatpush1.bf16.msra.mxu0 0
        %1197 = vmatprep.subr.bf16.mxu0 0
        %1198 = vmatpush1.bf16.msra.mxu0 0
        %1199 = vmatprep.subr.bf16.mxu0 0
        %1200 = vmatpush1.bf16.msra.mxu0 0
        %1201 = vmatprep.subr.bf16.mxu0 0
        %1202 = vmatpush1.bf16.msra.mxu0 0
        %1203 = vmatprep.subr.bf16.mxu0 0
        %1204 = vmatpush1.bf16.msra.mxu0 0
        %1205 = vmatprep.subr.bf16.mxu0 0
        %1206 = vmatpush1.bf16.msra.mxu0 0
        %1207 = vmatprep.subr.bf16.mxu0 0
        %1208 = vmatpush1.bf16.msra.mxu0 0
        %1209 = vmatprep.subr.bf16.mxu0 0
        %1210 = vmatpush1.bf16.msra.mxu0 0
        %1211 = vmatprep.subr.bf16.mxu0 0
        %1212 = vmatpush1.bf16.msra.mxu0 0
        %1213 = vmatprep.subr.bf16.mxu0 0
        %1214 = vmatpush1.bf16.msra.mxu0 0
        %1215 = vmatprep.mubr.bf16.mxu0 0
        %1216 = vmatmul.mubr.bf16.gmra.mrb[0].mxu0 %v1181
        %v1217 = vpop.f32.mrb[0].mxu0
        %v1218 = vadd.f32 0.0, %v1217
        %v1219 = vpop.f32.mrb[0].mxu0
        %v1220 = vpop.f32.mrb[0].mxu0
        %v1221 = vadd.f32 0.0, %v1220
        %v1222 = vpop.f32.mrb[0].mxu0
        %1223 = vdwg.mxu0
        %1224 = vrot.lane.b32.xlu0 %v784, 64
        %v1225 = vpop.permute.xlu0 %1224
        %1226 = vrot.lane.b32.xlu0 %v803, 64
        %v1227 = vpop.permute.xlu0 %1226
        %v1229 = vsel %vm823, %v1225, 0
        %v1232 = vsel %vm823, %v1227, 0
        %1234 = vmatprep.subr.bf16.mxu0 0
        %1235 = vmatpush1.bf16.xpose.msra.mxu0 %v1232
        %1236 = vmatprep.subr.bf16.mxu0 0
        %1237 = vmatpush1.bf16.xpose.msra.mxu0 0
        %1238 = vmatprep.subr.bf16.mxu0 0
        %1239 = vmatpush1.bf16.xpose.msra.mxu0 0
        %1240 = vmatprep.subr.bf16.mxu0 0
        %1241 = vmatpush1.bf16.xpose.msra.mxu0 0
        %1242 = vmatprep.subr.bf16.mxu0 0
        %1243 = vmatpush1.bf16.xpose.msra.mxu0 0
        %1244 = vmatprep.subr.bf16.mxu0 0
        %1245 = vmatpush1.bf16.xpose.msra.mxu0 0
        %1246 = vmatprep.subr.bf16.mxu0 0
        %1247 = vmatpush1.bf16.xpose.msra.mxu0 0
        %1248 = vmatprep.subr.bf16.mxu0 0
        %1249 = vmatpush1.bf16.xpose.msra.mxu0 0
        %1250 = vmatprep.subr.bf16.mxu0 0
        %1251 = vmatpush1.bf16.xpose.msra.mxu0 0
        %1252 = vmatprep.subr.bf16.mxu0 0
        %1253 = vmatpush1.bf16.xpose.msra.mxu0 0
        %1254 = vmatprep.subr.bf16.mxu0 0
        %1255 = vmatpush1.bf16.xpose.msra.mxu0 0
        %1256 = vmatprep.subr.bf16.mxu0 0
        %1257 = vmatpush1.bf16.xpose.msra.mxu0 0
        %1258 = vmatprep.subr.bf16.mxu0 0
        %1259 = vmatpush1.bf16.xpose.msra.mxu0 0
        %1260 = vmatprep.subr.bf16.mxu0 0
        %1261 = vmatpush1.bf16.xpose.msra.mxu0 0
        %1262 = vmatprep.subr.bf16.mxu0 0
        %1263 = vmatpush1.bf16.xpose.msra.mxu0 0
        %1264 = vmatprep.subr.bf16.mxu0 0
        %1265 = vmatpush1.bf16.xpose.msra.mxu0 0
        %1266 = vmatprep.mubr.bf16.mxu0 0
        %1267 = vmatmul.mubr.bf16.gmra.mrb[0].mxu0 %v1229
        %v1268 = vpop.f32.mrb[0].mxu0
        %v1269 = vadd.f32 0.0, %v1268
        %v1270 = vpop.f32.mrb[0].mxu0
        %v1271 = vpop.f32.mrb[0].mxu0
        %v1272 = vadd.f32 0.0, %v1271
        %v1273 = vpop.f32.mrb[0].mxu0
        %1274 = vdwg.mxu0
        %v1275 = vmul.f32 %v1269, 0.125
        %v1276 = vmul.f32 %v1272, 0.125
        %v1277 = vpack.c.bf16 %v1276, %v1275
        %1278 = vrot.lane.b32.xlu0 %v822, 64
        %v1279 = vpop.permute.xlu0 %1278
        %v1282 = vsel %vm823, %v1277, 0
        %1284 = vmatprep.subr.bf16.mxu0 0
        %1285 = vmatpush1.bf16.msra.mxu0 %v1279
        %1286 = vmatprep.subr.bf16.mxu0 0
        %1287 = vmatpush1.bf16.msra.mxu0 0
        %1288 = vmatprep.subr.bf16.mxu0 0
        %1289 = vmatpush1.bf16.msra.mxu0 0
        %1290 = vmatprep.subr.bf16.mxu0 0
        %1291 = vmatpush1.bf16.msra.mxu0 0
        %1292 = vmatprep.subr.bf16.mxu0 0
        %1293 = vmatpush1.bf16.msra.mxu0 0
        %1294 = vmatprep.subr.bf16.mxu0 0
        %1295 = vmatpush1.bf16.msra.mxu0 0
        %1296 = vmatprep.subr.bf16.mxu0 0
        %1297 = vmatpush1.bf16.msra.mxu0 0
        %1298 = vmatprep.subr.bf16.mxu0 0
        %1299 = vmatpush1.bf16.msra.mxu0 0
        %1300 = vmatprep.subr.bf16.mxu0 0
        %1301 = vmatpush1.bf16.msra.mxu0 0
        %1302 = vmatprep.subr.bf16.mxu0 0
        %1303 = vmatpush1.bf16.msra.mxu0 0
        %1304 = vmatprep.subr.bf16.mxu0 0
        %1305 = vmatpush1.bf16.msra.mxu0 0
        %1306 = vmatprep.subr.bf16.mxu0 0
        %1307 = vmatpush1.bf16.msra.mxu0 0
        %1308 = vmatprep.subr.bf16.mxu0 0
        %1309 = vmatpush1.bf16.msra.mxu0 0
        %1310 = vmatprep.subr.bf16.mxu0 0
        %1311 = vmatpush1.bf16.msra.mxu0 0
        %1312 = vmatprep.subr.bf16.mxu0 0
        %1313 = vmatpush1.bf16.msra.mxu0 0
        %1314 = vmatprep.subr.bf16.mxu0 0
        %1315 = vmatpush1.bf16.msra.mxu0 0
        %1316 = vmatprep.mubr.bf16.mxu0 0
        %1317 = vmatmul.mubr.bf16.gmra.mrb[0].mxu0 %v1282
        %v1318 = vpop.f32.mrb[0].mxu0
        %v1319 = vadd.f32 0.0, %v1318
        %v1320 = vpop.f32.mrb[0].mxu0
        %v1321 = vpop.f32.mrb[0].mxu0
        %v1322 = vadd.f32 0.0, %v1321
        %v1323 = vpop.f32.mrb[0].mxu0
        %1324 = vdwg.mxu0
        %1325 = vrot.lane.b32.xlu0 %v784, 48
        %v1326 = vpop.permute.xlu0 %1325
        %1327 = vrot.lane.b32.xlu0 %v803, 48
        %v1328 = vpop.permute.xlu0 %1327
        %v1330 = vsel %vm823, %v1326, 0
        %v1333 = vsel %vm823, %v1328, 0
        %1335 = vmatprep.subr.bf16.mxu0 0
        %1336 = vmatpush1.bf16.xpose.msra.mxu0 %v1333
        %1337 = vmatprep.subr.bf16.mxu0 0
        %1338 = vmatpush1.bf16.xpose.msra.mxu0 0
        %1339 = vmatprep.subr.bf16.mxu0 0
        %1340 = vmatpush1.bf16.xpose.msra.mxu0 0
        %1341 = vmatprep.subr.bf16.mxu0 0
        %1342 = vmatpush1.bf16.xpose.msra.mxu0 0
        %1343 = vmatprep.subr.bf16.mxu0 0
        %1344 = vmatpush1.bf16.xpose.msra.mxu0 0
        %1345 = vmatprep.subr.bf16.mxu0 0
        %1346 = vmatpush1.bf16.xpose.msra.mxu0 0
        %1347 = vmatprep.subr.bf16.mxu0 0
        %1348 = vmatpush1.bf16.xpose.msra.mxu0 0
        %1349 = vmatprep.subr.bf16.mxu0 0
        %1350 = vmatpush1.bf16.xpose.msra.mxu0 0
        %1351 = vmatprep.subr.bf16.mxu0 0
        %1352 = vmatpush1.bf16.xpose.msra.mxu0 0
        %1353 = vmatprep.subr.bf16.mxu0 0
        %1354 = vmatpush1.bf16.xpose.msra.mxu0 0
        %1355 = vmatprep.subr.bf16.mxu0 0
        %1356 = vmatpush1.bf16.xpose.msra.mxu0 0
        %1357 = vmatprep.subr.bf16.mxu0 0
        %1358 = vmatpush1.bf16.xpose.msra.mxu0 0
        %1359 = vmatprep.subr.bf16.mxu0 0
        %1360 = vmatpush1.bf16.xpose.msra.mxu0 0
        %1361 = vmatprep.subr.bf16.mxu0 0
        %1362 = vmatpush1.bf16.xpose.msra.mxu0 0
        %1363 = vmatprep.subr.bf16.mxu0 0
        %1364 = vmatpush1.bf16.xpose.msra.mxu0 0
        %1365 = vmatprep.subr.bf16.mxu0 0
        %1366 = vmatpush1.bf16.xpose.msra.mxu0 0
        %1367 = vmatprep.mubr.bf16.mxu0 0
        %1368 = vmatmul.mubr.bf16.gmra.mrb[0].mxu0 %v1330
        %v1369 = vpop.f32.mrb[0].mxu0
        %v1370 = vadd.f32 0.0, %v1369
        %v1371 = vpop.f32.mrb[0].mxu0
        %v1372 = vpop.f32.mrb[0].mxu0
        %v1373 = vadd.f32 0.0, %v1372
        %v1374 = vpop.f32.mrb[0].mxu0
        %1375 = vdwg.mxu0
        %v1376 = vmul.f32 %v1370, 0.125
        %v1377 = vmul.f32 %v1373, 0.125
        %v1378 = vpack.c.bf16 %v1377, %v1376
        %1379 = vrot.lane.b32.xlu0 %v822, 48
        %v1380 = vpop.permute.xlu0 %1379
        %v1383 = vsel %vm823, %v1378, 0
        %1385 = vmatprep.subr.bf16.mxu0 0
        %1386 = vmatpush1.bf16.msra.mxu0 %v1380
        %1387 = vmatprep.subr.bf16.mxu0 0
        %1388 = vmatpush1.bf16.msra.mxu0 0
        %1389 = vmatprep.subr.bf16.mxu0 0
        %1390 = vmatpush1.bf16.msra.mxu0 0
        %1391 = vmatprep.subr.bf16.mxu0 0
        %1392 = vmatpush1.bf16.msra.mxu0 0
        %1393 = vmatprep.subr.bf16.mxu0 0
        %1394 = vmatpush1.bf16.msra.mxu0 0
        %1395 = vmatprep.subr.bf16.mxu0 0
        %1396 = vmatpush1.bf16.msra.mxu0 0
        %1397 = vmatprep.subr.bf16.mxu0 0
        %1398 = vmatpush1.bf16.msra.mxu0 0
        %1399 = vmatprep.subr.bf16.mxu0 0
        %1400 = vmatpush1.bf16.msra.mxu0 0
        %1401 = vmatprep.subr.bf16.mxu0 0
        %1402 = vmatpush1.bf16.msra.mxu0 0
        %1403 = vmatprep.subr.bf16.mxu0 0
        %1404 = vmatpush1.bf16.msra.mxu0 0
        %1405 = vmatprep.subr.bf16.mxu0 0
        %1406 = vmatpush1.bf16.msra.mxu0 0
        %1407 = vmatprep.subr.bf16.mxu0 0
        %1408 = vmatpush1.bf16.msra.mxu0 0
        %1409 = vmatprep.subr.bf16.mxu0 0
        %1410 = vmatpush1.bf16.msra.mxu0 0
        %1411 = vmatprep.subr.bf16.mxu0 0
        %1412 = vmatpush1.bf16.msra.mxu0 0
        %1413 = vmatprep.subr.bf16.mxu0 0
        %1414 = vmatpush1.bf16.msra.mxu0 0
        %1415 = vmatprep.subr.bf16.mxu0 0
        %1416 = vmatpush1.bf16.msra.mxu0 0
        %1417 = vmatprep.mubr.bf16.mxu0 0
        %1418 = vmatmul.mubr.bf16.gmra.mrb[0].mxu0 %v1383
        %v1419 = vpop.f32.mrb[0].mxu0
        %v1420 = vadd.f32 0.0, %v1419
        %v1421 = vpop.f32.mrb[0].mxu0
        %v1422 = vpop.f32.mrb[0].mxu0
        %v1423 = vadd.f32 0.0, %v1422
        %v1424 = vpop.f32.mrb[0].mxu0
        %1425 = vdwg.mxu0
        %1426 = vrot.lane.b32.xlu0 %v784, 32
        %v1427 = vpop.permute.xlu0 %1426
        %1428 = vrot.lane.b32.xlu0 %v803, 32
        %v1429 = vpop.permute.xlu0 %1428
        %v1431 = vsel %vm823, %v1427, 0
        %v1434 = vsel %vm823, %v1429, 0
        %1436 = vmatprep.subr.bf16.mxu0 0
        %1437 = vmatpush1.bf16.xpose.msra.mxu0 %v1434
        %1438 = vmatprep.subr.bf16.mxu0 0
        %1439 = vmatpush1.bf16.xpose.msra.mxu0 0
        %1440 = vmatprep.subr.bf16.mxu0 0
        %1441 = vmatpush1.bf16.xpose.msra.mxu0 0
        %1442 = vmatprep.subr.bf16.mxu0 0
        %1443 = vmatpush1.bf16.xpose.msra.mxu0 0
        %1444 = vmatprep.subr.bf16.mxu0 0
        %1445 = vmatpush1.bf16.xpose.msra.mxu0 0
        %1446 = vmatprep.subr.bf16.mxu0 0
        %1447 = vmatpush1.bf16.xpose.msra.mxu0 0
        %1448 = vmatprep.subr.bf16.mxu0 0
        %1449 = vmatpush1.bf16.xpose.msra.mxu0 0
        %1450 = vmatprep.subr.bf16.mxu0 0
        %1451 = vmatpush1.bf16.xpose.msra.mxu0 0
        %1452 = vmatprep.subr.bf16.mxu0 0
        %1453 = vmatpush1.bf16.xpose.msra.mxu0 0
        %1454 = vmatprep.subr.bf16.mxu0 0
        %1455 = vmatpush1.bf16.xpose.msra.mxu0 0
        %1456 = vmatprep.subr.bf16.mxu0 0
        %1457 = vmatpush1.bf16.xpose.msra.mxu0 0
        %1458 = vmatprep.subr.bf16.mxu0 0
        %1459 = vmatpush1.bf16.xpose.msra.mxu0 0
        %1460 = vmatprep.subr.bf16.mxu0 0
        %1461 = vmatpush1.bf16.xpose.msra.mxu0 0
        %1462 = vmatprep.subr.bf16.mxu0 0
        %1463 = vmatpush1.bf16.xpose.msra.mxu0 0
        %1464 = vmatprep.subr.bf16.mxu0 0
        %1465 = vmatpush1.bf16.xpose.msra.mxu0 0
        %1466 = vmatprep.subr.bf16.mxu0 0
        %1467 = vmatpush1.bf16.xpose.msra.mxu0 0
        %1468 = vmatprep.mubr.bf16.mxu0 0
        %1469 = vmatmul.mubr.bf16.gmra.mrb[0].mxu0 %v1431
        %v1470 = vpop.f32.mrb[0].mxu0
        %v1471 = vadd.f32 0.0, %v1470
        %v1472 = vpop.f32.mrb[0].mxu0
        %v1473 = vpop.f32.mrb[0].mxu0
        %v1474 = vadd.f32 0.0, %v1473
        %v1475 = vpop.f32.mrb[0].mxu0
        %1476 = vdwg.mxu0
        %v1477 = vmul.f32 %v1471, 0.125
        %v1478 = vmul.f32 %v1474, 0.125
        %v1479 = vpack.c.bf16 %v1478, %v1477
        %1480 = vrot.lane.b32.xlu0 %v822, 32
        %v1481 = vpop.permute.xlu0 %1480
        %v1484 = vsel %vm823, %v1479, 0
        %1486 = vmatprep.subr.bf16.mxu0 0
        %1487 = vmatpush1.bf16.msra.mxu0 %v1481
        %1488 = vmatprep.subr.bf16.mxu0 0
        %1489 = vmatpush1.bf16.msra.mxu0 0
        %1490 = vmatprep.subr.bf16.mxu0 0
        %1491 = vmatpush1.bf16.msra.mxu0 0
        %1492 = vmatprep.subr.bf16.mxu0 0
        %1493 = vmatpush1.bf16.msra.mxu0 0
        %1494 = vmatprep.subr.bf16.mxu0 0
        %1495 = vmatpush1.bf16.msra.mxu0 0
        %1496 = vmatprep.subr.bf16.mxu0 0
        %1497 = vmatpush1.bf16.msra.mxu0 0
        %1498 = vmatprep.subr.bf16.mxu0 0
        %1499 = vmatpush1.bf16.msra.mxu0 0
        %1500 = vmatprep.subr.bf16.mxu0 0
        %1501 = vmatpush1.bf16.msra.mxu0 0
        %1502 = vmatprep.subr.bf16.mxu0 0
        %1503 = vmatpush1.bf16.msra.mxu0 0
        %1504 = vmatprep.subr.bf16.mxu0 0
        %1505 = vmatpush1.bf16.msra.mxu0 0
        %1506 = vmatprep.subr.bf16.mxu0 0
        %1507 = vmatpush1.bf16.msra.mxu0 0
        %1508 = vmatprep.subr.bf16.mxu0 0
        %1509 = vmatpush1.bf16.msra.mxu0 0
        %1510 = vmatprep.subr.bf16.mxu0 0
        %1511 = vmatpush1.bf16.msra.mxu0 0
        %1512 = vmatprep.subr.bf16.mxu0 0
        %1513 = vmatpush1.bf16.msra.mxu0 0
        %1514 = vmatprep.subr.bf16.mxu0 0
        %1515 = vmatpush1.bf16.msra.mxu0 0
        %1516 = vmatprep.subr.bf16.mxu0 0
        %1517 = vmatpush1.bf16.msra.mxu0 0
        %1518 = vmatprep.mubr.bf16.mxu0 0
        %1519 = vmatmul.mubr.bf16.gmra.mrb[0].mxu0 %v1484
        %v1520 = vpop.f32.mrb[0].mxu0
        %v1521 = vadd.f32 0.0, %v1520
        %v1522 = vpop.f32.mrb[0].mxu0
        %v1523 = vpop.f32.mrb[0].mxu0
        %v1524 = vadd.f32 0.0, %v1523
        %v1525 = vpop.f32.mrb[0].mxu0
        %1526 = vdwg.mxu0
        %1527 = vrot.lane.b32.xlu0 %v784, 16
        %v1528 = vpop.permute.xlu0 %1527
        %1529 = vrot.lane.b32.xlu0 %v803, 16
        %v1530 = vpop.permute.xlu0 %1529
        %v1532 = vsel %vm823, %v1528, 0
        %v1535 = vsel %vm823, %v1530, 0
        %1537 = vmatprep.subr.bf16.mxu0 0
        %1538 = vmatpush1.bf16.xpose.msra.mxu0 %v1535
        %1539 = vmatprep.subr.bf16.mxu0 0
        %1540 = vmatpush1.bf16.xpose.msra.mxu0 0
        %1541 = vmatprep.subr.bf16.mxu0 0
        %1542 = vmatpush1.bf16.xpose.msra.mxu0 0
        %1543 = vmatprep.subr.bf16.mxu0 0
        %1544 = vmatpush1.bf16.xpose.msra.mxu0 0
        %1545 = vmatprep.subr.bf16.mxu0 0
        %1546 = vmatpush1.bf16.xpose.msra.mxu0 0
        %1547 = vmatprep.subr.bf16.mxu0 0
        %1548 = vmatpush1.bf16.xpose.msra.mxu0 0
        %1549 = vmatprep.subr.bf16.mxu0 0
        %1550 = vmatpush1.bf16.xpose.msra.mxu0 0
        %1551 = vmatprep.subr.bf16.mxu0 0
        %1552 = vmatpush1.bf16.xpose.msra.mxu0 0
        %1553 = vmatprep.subr.bf16.mxu0 0
        %1554 = vmatpush1.bf16.xpose.msra.mxu0 0
        %1555 = vmatprep.subr.bf16.mxu0 0
        %1556 = vmatpush1.bf16.xpose.msra.mxu0 0
        %1557 = vmatprep.subr.bf16.mxu0 0
        %1558 = vmatpush1.bf16.xpose.msra.mxu0 0
        %1559 = vmatprep.subr.bf16.mxu0 0
        %1560 = vmatpush1.bf16.xpose.msra.mxu0 0
        %1561 = vmatprep.subr.bf16.mxu0 0
        %1562 = vmatpush1.bf16.xpose.msra.mxu0 0
        %1563 = vmatprep.subr.bf16.mxu0 0
        %1564 = vmatpush1.bf16.xpose.msra.mxu0 0
        %1565 = vmatprep.subr.bf16.mxu0 0
        %1566 = vmatpush1.bf16.xpose.msra.mxu0 0
        %1567 = vmatprep.subr.bf16.mxu0 0
        %1568 = vmatpush1.bf16.xpose.msra.mxu0 0
        %1569 = vmatprep.mubr.bf16.mxu0 0
        %1570 = vmatmul.mubr.bf16.gmra.mrb[0].mxu0 %v1532
        %v1571 = vpop.f32.mrb[0].mxu0
        %v1572 = vadd.f32 0.0, %v1571
        %v1573 = vpop.f32.mrb[0].mxu0
        %v1574 = vpop.f32.mrb[0].mxu0
        %v1575 = vadd.f32 0.0, %v1574
        %v1576 = vpop.f32.mrb[0].mxu0
        %1577 = vdwg.mxu0
        %v1578 = vmul.f32 %v1572, 0.125
        %v1579 = vmul.f32 %v1575, 0.125
        %v1580 = vpack.c.bf16 %v1579, %v1578
        %1581 = vrot.lane.b32.xlu0 %v822, 16
        %v1582 = vpop.permute.xlu0 %1581
        %v1585 = vsel %vm823, %v1580, 0
        %1587 = vmatprep.subr.bf16.mxu0 0
        %1588 = vmatpush1.bf16.msra.mxu0 %v1582
        %1589 = vmatprep.subr.bf16.mxu0 0
        %1590 = vmatpush1.bf16.msra.mxu0 0
        %1591 = vmatprep.subr.bf16.mxu0 0
        %1592 = vmatpush1.bf16.msra.mxu0 0
        %1593 = vmatprep.subr.bf16.mxu0 0
        %1594 = vmatpush1.bf16.msra.mxu0 0
        %1595 = vmatprep.subr.bf16.mxu0 0
        %1596 = vmatpush1.bf16.msra.mxu0 0
        %1597 = vmatprep.subr.bf16.mxu0 0
        %1598 = vmatpush1.bf16.msra.mxu0 0
        %1599 = vmatprep.subr.bf16.mxu0 0
        %1600 = vmatpush1.bf16.msra.mxu0 0
        %1601 = vmatprep.subr.bf16.mxu0 0
        %1602 = vmatpush1.bf16.msra.mxu0 0
        %1603 = vmatprep.subr.bf16.mxu0 0
        %1604 = vmatpush1.bf16.msra.mxu0 0
        %1605 = vmatprep.subr.bf16.mxu0 0
        %1606 = vmatpush1.bf16.msra.mxu0 0
        %1607 = vmatprep.subr.bf16.mxu0 0
        %1608 = vmatpush1.bf16.msra.mxu0 0
        %1609 = vmatprep.subr.bf16.mxu0 0
        %1610 = vmatpush1.bf16.msra.mxu0 0
        %1611 = vmatprep.subr.bf16.mxu0 0
        %1612 = vmatpush1.bf16.msra.mxu0 0
        %1613 = vmatprep.subr.bf16.mxu0 0
        %1614 = vmatpush1.bf16.msra.mxu0 0
        %1615 = vmatprep.subr.bf16.mxu0 0
        %1616 = vmatpush1.bf16.msra.mxu0 0
        %1617 = vmatprep.subr.bf16.mxu0 0
        %1618 = vmatpush1.bf16.msra.mxu0 0
        %1619 = vmatprep.mubr.bf16.mxu0 0
        %1620 = vmatmul.mubr.bf16.gmra.mrb[0].mxu0 %v1585
        %v1621 = vpop.f32.mrb[0].mxu0
        %v1622 = vadd.f32 0.0, %v1621
        %v1623 = vpop.f32.mrb[0].mxu0
        %v1624 = vpop.f32.mrb[0].mxu0
        %v1625 = vadd.f32 0.0, %v1624
        %v1626 = vpop.f32.mrb[0].mxu0
        %1627 = vdwg.mxu0
        %1630 = vrot.lane.b32.xlu0 %v1016, 16
        %v1631 = vpop.permute.xlu0 %1630
        %1632 = vrot.lane.b32.xlu0 %v1019, 16
        %v1633 = vpop.permute.xlu0 %1632
        %1638 = vrot.lane.b32.xlu0 %v1117, 32
        %v1639 = vpop.permute.xlu0 %1638
        %1640 = vrot.lane.b32.xlu0 %v1120, 32
        %v1641 = vpop.permute.xlu0 %1640
        %1646 = vrot.lane.b32.xlu0 %v1218, 48
        %v1647 = vpop.permute.xlu0 %1646
        %1648 = vrot.lane.b32.xlu0 %v1221, 48
        %v1649 = vpop.permute.xlu0 %1648
        %1654 = vrot.lane.b32.xlu0 %v1319, 64
        %v1655 = vpop.permute.xlu0 %1654
        %1656 = vrot.lane.b32.xlu0 %v1322, 64
        %v1657 = vpop.permute.xlu0 %1656
        %1662 = vrot.lane.b32.xlu0 %v1420, 80
        %v1663 = vpop.permute.xlu0 %1662
        %1664 = vrot.lane.b32.xlu0 %v1423, 80
        %v1665 = vpop.permute.xlu0 %1664
        %1670 = vrot.lane.b32.xlu0 %v1521, 96
        %v1671 = vpop.permute.xlu0 %1670
        %1672 = vrot.lane.b32.xlu0 %v1524, 96
        %v1673 = vpop.permute.xlu0 %1672
        %1678 = vrot.lane.b32.xlu0 %v1622, 112
        %v1679 = vpop.permute.xlu0 %1678
        %1680 = vrot.lane.b32.xlu0 %v1625, 112
        %v1681 = vpop.permute.xlu0 %1680
        %v1684 = vsel %vm823, %v912, %v1631
        %v1685 = vsel %vm823, %v915, %v1633
        %vm1686 = vcmask 261120
        %v1687 = vsel %vm1686, %v1684, %v1639
        %v1688 = vsel %vm1686, %v1685, %v1641
        %vm1689 = vcmask 392192
        %v1690 = vsel %vm1689, %v1687, %v1647
        %v1691 = vsel %vm1689, %v1688, %v1649
        %vm1692 = vcmask 523264
        %v1693 = vsel %vm1692, %v1690, %v1655
        %v1694 = vsel %vm1692, %v1691, %v1657
        %vm1695 = vcmask 654336
        %v1696 = vsel %vm1695, %v1693, %v1663
        %v1697 = vsel %vm1695, %v1694, %v1665
        %vm1698 = vcmask 785408
        %v1699 = vsel %vm1698, %v1696, %v1671
        %v1700 = vsel %vm1698, %v1697, %v1673
        %vm1701 = vcmask 916480
        %v1702 = vsel %vm1701, %v1699, %v1679
        %v1703 = vsel %vm1701, %v1700, %v1681
        %v1704 = vld [vmem:[#allocation5] sm:$0xff]
        %v1705 = vld [vmem:[#allocation5 + $0x8] sm:$0xff]
        %v1706 = vsub.f32 %v1702, %v1704
        %v1707 = vsub.f32 %v1703, %v1705
        %v1708 = vmul.f32 %v1706, 0.5
        %v1709 = vmul.f32 %v1707, 0.5
        %v1710 = vadd.f32 %v1704, %v1708
        %v1711 = vadd.f32 %v1705, %v1709
        %vm1712 = vcmp.ge.f32.partialorder %v1710, 0.5
        %vm1713 = vcmp.ge.f32.partialorder %v1711, 0.5
        %v1714 = vsel %vm1712, 0.0, %v1710
        %v1715 = vsel %vm1713, 0.0, %v1711
        %1716 = vst [vmem:[#allocation5] sm:$0xff] %v1714
        %1717 = vst [vmem:[#allocation5 + $0x8] sm:$0xff] %v1715
        %v1718 = vsel %vm1712, 1, 0
        %v1719 = vsel %vm1713, 1, 0
        %v1720 = vcvt.s32.f32 %v1718
        %v1721 = vcvt.s32.f32 %v1719
        %v1722 = vpack.c.bf16 %v1721, %v1720
        %v1723 = vld [vmem:[#allocation15] sm:$0xf]
        %v1724 = vld [vmem:[#allocation15 + $0x4] sm:$0xf]
        %v1725 = vld [vmem:[#allocation15 + $0x8] sm:$0xf]
        %v1726 = vld [vmem:[#allocation15 + $0xc] sm:$0xf]
        %v1727 = vld [vmem:[#allocation15 + $0x10] sm:$0xf]
        %v1728 = vld [vmem:[#allocation15 + $0x14] sm:$0xf]
        %v1729 = vld [vmem:[#allocation15 + $0x18] sm:$0xf]
        %v1730 = vld [vmem:[#allocation15 + $0x1c] sm:$0xf]
        %v1731 = vld [vmem:[#allocation15 + $0x20] sm:$0xf]
        %v1732 = vld [vmem:[#allocation15 + $0x24] sm:$0xf]
        %v1733 = vld [vmem:[#allocation15 + $0x28] sm:$0xf]
        %v1734 = vld [vmem:[#allocation15 + $0x2c] sm:$0xf]
        %v1735 = vld [vmem:[#allocation15 + $0x30] sm:$0xf]
        %v1736 = vld [vmem:[#allocation15 + $0x34] sm:$0xf]
        %v1737 = vld [vmem:[#allocation15 + $0x38] sm:$0xf]
        %v1738 = vld [vmem:[#allocation15 + $0x3c] sm:$0xf]
        %v1739 = vld [vmem:[#allocation17] sm:$0x1]
        %v1741 = vlaneseq
        %v1742 = vshrl.u32 %v1741, 7
        %v1743 = vsub.s32 0, %v1742
        %v1744 = vrot.slane %v1739, %v1743
        %v1762 = vunpack.c.l.b16 %v1723
        %v1763 = vunpack.c.l.b16 %v1724
        %v1764 = vunpack.c.l.b16 %v1725
        %v1765 = vunpack.c.l.b16 %v1726
        %v1766 = vunpack.c.l.b16 %v1727
        %v1767 = vunpack.c.l.b16 %v1728
        %v1768 = vunpack.c.l.b16 %v1729
        %v1769 = vunpack.c.l.b16 %v1730
        %v1770 = vunpack.c.l.b16 %v1731
        %v1771 = vunpack.c.l.b16 %v1732
        %v1772 = vunpack.c.l.b16 %v1733
        %v1773 = vunpack.c.l.b16 %v1734
        %v1774 = vunpack.c.l.b16 %v1735
        %v1775 = vunpack.c.l.b16 %v1736
        %v1776 = vunpack.c.l.b16 %v1737
        %v1777 = vunpack.c.l.b16 %v1738
        %v1778 = vpack.c.b16 %v1763, %v1762
        %v1779 = vpack.c.b16 %v1765, %v1764
        %v1780 = vpack.c.b16 %v1767, %v1766
        %v1781 = vpack.c.b16 %v1769, %v1768
        %v1782 = vpack.c.b16 %v1771, %v1770
        %v1783 = vpack.c.b16 %v1773, %v1772
        %v1784 = vpack.c.b16 %v1775, %v1774
        %v1785 = vpack.c.b16 %v1777, %v1776
        %1794 = vmatprep.subr.bf16.mxu0 0
        %1795 = vmatpush1.bf16.msra.mxu0 %v1778
        %1796 = vmatprep.subr.bf16.mxu0 0
        %1797 = vmatpush1.bf16.msra.mxu0 %v1779
        %1798 = vmatprep.subr.bf16.mxu0 0
        %1799 = vmatpush1.bf16.msra.mxu0 %v1780
        %1800 = vmatprep.subr.bf16.mxu0 0
        %1801 = vmatpush1.bf16.msra.mxu0 %v1781
        %1802 = vmatprep.subr.bf16.mxu0 0
        %1803 = vmatpush1.bf16.msra.mxu0 %v1782
        %1804 = vmatprep.subr.bf16.mxu0 0
        %1805 = vmatpush1.bf16.msra.mxu0 %v1783
        %1806 = vmatprep.subr.bf16.mxu0 0
        %1807 = vmatpush1.bf16.msra.mxu0 %v1784
        %1808 = vmatprep.subr.bf16.mxu0 0
        %1809 = vmatpush1.bf16.msra.mxu0 %v1785
        %1810 = vmatprep.subr.bf16.mxu0 0
        %1811 = vmatpush1.bf16.msra.mxu0 0
        %1812 = vmatprep.subr.bf16.mxu0 0
        %1813 = vmatpush1.bf16.msra.mxu0 0
        %1814 = vmatprep.subr.bf16.mxu0 0
        %1815 = vmatpush1.bf16.msra.mxu0 0
        %1816 = vmatprep.subr.bf16.mxu0 0
        %1817 = vmatpush1.bf16.msra.mxu0 0
        %1818 = vmatprep.subr.bf16.mxu0 0
        %1819 = vmatpush1.bf16.msra.mxu0 0
        %1820 = vmatprep.subr.bf16.mxu0 0
        %1821 = vmatpush1.bf16.msra.mxu0 0
        %1822 = vmatprep.subr.bf16.mxu0 0
        %1823 = vmatpush1.bf16.msra.mxu0 0
        %1824 = vmatprep.subr.bf16.mxu0 0
        %1825 = vmatpush1.bf16.msra.mxu0 0
        %1826 = vmatprep.mubr.bf16.mxu0 0
        %1827 = vmatmul.mubr.bf16.gmra.mrb[0].mxu0 %v1722
        %v1828 = vpop.f32.mrb[0].mxu0
        %v1829 = vadd.f32 %v1744, %v1828
        %v1830 = vpop.f32.mrb[0].mxu0
        %v1831 = vpop.f32.mrb[0].mxu0
        %v1832 = vadd.f32 %v1744, %v1831
        %v1833 = vpop.f32.mrb[0].mxu0
        %1834 = vdwg.mxu0
        %v1835 = vld [vmem:[#allocation6] sm:$0xff]
        %v1836 = vld [vmem:[#allocation6 + $0x8] sm:$0xff]
        %v1837 = vsub.f32 %v1829, %v1835
        %v1838 = vsub.f32 %v1832, %v1836
        %v1839 = vmul.f32 %v1837, 0.5
        %v1840 = vmul.f32 %v1838, 0.5
        %v1841 = vadd.f32 %v1835, %v1839
        %v1842 = vadd.f32 %v1836, %v1840
        %vm1843 = vcmp.ge.f32.partialorder %v1841, 1.0
        %vm1844 = vcmp.ge.f32.partialorder %v1842, 1.0
        %v1845 = vsel %vm1843, 0.0, %v1841
        %v1846 = vsel %vm1844, 0.0, %v1842
        %1847 = vst [vmem:[#allocation6] sm:$0xff] %v1845
        %1848 = vst [vmem:[#allocation6 + $0x8] sm:$0xff] %v1846
        %v1849 = vsel %vm1843, 1, 0
        %v1850 = vsel %vm1844, 1, 0
        %v1851 = vcvt.s32.f32 %v1849
        %v1852 = vcvt.s32.f32 %v1850
        %v1853 = vpack.c.bf16 %v1852, %v1851
        %v1854 = vunpack.c.l.bf16 %v1853
        %v1855 = vunpack.c.h.bf16 %v1853
        %v1856 = vadd.f32 %v502, %v1854
        %v1857 = vadd.f32 %v503, %v1855
        %v1858 = vpack.c.bf16 %v1857, %v1856
        %v1859 = vld [vmem:[#allocation18] sm:$0xff]
        %v1860 = vld [vmem:[#allocation18 + $0x8] sm:$0xff]
        %v1861 = vld [vmem:[#allocation18 + $0x10] sm:$0xff]
        %v1862 = vld [vmem:[#allocation18 + $0x18] sm:$0xff]
        %v1863 = vld [vmem:[#allocation18 + $0x20] sm:$0xff]
        %v1864 = vld [vmem:[#allocation18 + $0x28] sm:$0xff]
        %v1865 = vld [vmem:[#allocation18 + $0x30] sm:$0xff]
        %v1866 = vld [vmem:[#allocation18 + $0x38] sm:$0xff]
        %v1867 = vld [vmem:[#allocation18 + $0x40] sm:$0xff]
        %v1868 = vld [vmem:[#allocation18 + $0x48] sm:$0xff]
        %v1869 = vld [vmem:[#allocation18 + $0x50] sm:$0xff]
        %v1870 = vld [vmem:[#allocation18 + $0x58] sm:$0xff]
        %v1871 = vld [vmem:[#allocation18 + $0x60] sm:$0xff]
        %v1872 = vld [vmem:[#allocation18 + $0x68] sm:$0xff]
        %v1873 = vld [vmem:[#allocation18 + $0x70] sm:$0xff]
        %v1874 = vld [vmem:[#allocation18 + $0x78] sm:$0xff]
        %v1875 = vld [vmem:[#allocation18 + $0x80] sm:$0xff]
        %v1876 = vld [vmem:[#allocation18 + $0x88] sm:$0xff]
        %v1877 = vld [vmem:[#allocation18 + $0x90] sm:$0xff]
        %v1878 = vld [vmem:[#allocation18 + $0x98] sm:$0xff]
        %v1879 = vld [vmem:[#allocation18 + $0xa0] sm:$0xff]
        %v1880 = vld [vmem:[#allocation18 + $0xa8] sm:$0xff]
        %v1881 = vld [vmem:[#allocation18 + $0xb0] sm:$0xff]
        %v1882 = vld [vmem:[#allocation18 + $0xb8] sm:$0xff]
        %v1883 = vld [vmem:[#allocation18 + $0xc0] sm:$0xff]
        %v1884 = vld [vmem:[#allocation18 + $0xc8] sm:$0xff]
        %v1885 = vld [vmem:[#allocation18 + $0xd0] sm:$0xff]
        %v1886 = vld [vmem:[#allocation18 + $0xd8] sm:$0xff]
        %v1887 = vld [vmem:[#allocation18 + $0xe0] sm:$0xff]
        %v1888 = vld [vmem:[#allocation18 + $0xe8] sm:$0xff]
        %v1889 = vld [vmem:[#allocation18 + $0xf0] sm:$0xff]
        %v1890 = vld [vmem:[#allocation18 + $0xf8] sm:$0xff]
        %v1891 = vld [vmem:[#allocation20] sm:$0xf]
        %v1893 = vlaneseq
        %v1894 = vshrl.u32 %v1893, 7
        %v1895 = vsub.s32 0, %v1894
        %v1896 = vrot.slane %v1891, %v1895
        %v1897 = vlaneseq
        %v1898 = vshrl.u32 %v1897, 7
        %v1899 = vsub.s32 1, %v1898
        %v1900 = vrot.slane %v1891, %v1899
        %v1901 = vlaneseq
        %v1902 = vshrl.u32 %v1901, 7
        %v1903 = vsub.s32 2, %v1902
        %v1904 = vrot.slane %v1891, %v1903
        %v1905 = vlaneseq
        %v1906 = vshrl.u32 %v1905, 7
        %v1907 = vsub.s32 3, %v1906
        %v1908 = vrot.slane %v1891, %v1907
        %v1945 = vunpack.c.l.b16 %v1859
        %v1946 = vunpack.c.h.b16 %v1859
        %v1947 = vunpack.c.l.b16 %v1860
        %v1948 = vunpack.c.h.b16 %v1860
        %v1949 = vunpack.c.l.b16 %v1861
        %v1950 = vunpack.c.h.b16 %v1861
        %v1951 = vunpack.c.l.b16 %v1862
        %v1952 = vunpack.c.h.b16 %v1862
        %v1953 = vunpack.c.l.b16 %v1863
        %v1954 = vunpack.c.h.b16 %v1863
        %v1955 = vunpack.c.l.b16 %v1864
        %v1956 = vunpack.c.h.b16 %v1864
        %v1957 = vunpack.c.l.b16 %v1865
        %v1958 = vunpack.c.h.b16 %v1865
        %v1959 = vunpack.c.l.b16 %v1866
        %v1960 = vunpack.c.h.b16 %v1866
        %v1961 = vunpack.c.l.b16 %v1867
        %v1962 = vunpack.c.h.b16 %v1867
        %v1963 = vunpack.c.l.b16 %v1868
        %v1964 = vunpack.c.h.b16 %v1868
        %v1965 = vunpack.c.l.b16 %v1869
        %v1966 = vunpack.c.h.b16 %v1869
        %v1967 = vunpack.c.l.b16 %v1870
        %v1968 = vunpack.c.h.b16 %v1870
        %v1969 = vunpack.c.l.b16 %v1871
        %v1970 = vunpack.c.h.b16 %v1871
        %v1971 = vunpack.c.l.b16 %v1872
        %v1972 = vunpack.c.h.b16 %v1872
        %v1973 = vunpack.c.l.b16 %v1873
        %v1974 = vunpack.c.h.b16 %v1873
        %v1975 = vunpack.c.l.b16 %v1874
        %v1976 = vunpack.c.h.b16 %v1874
        %v1977 = vunpack.c.l.b16 %v1875
        %v1978 = vunpack.c.h.b16 %v1875
        %v1979 = vunpack.c.l.b16 %v1876
        %v1980 = vunpack.c.h.b16 %v1876
        %v1981 = vunpack.c.l.b16 %v1877
        %v1982 = vunpack.c.h.b16 %v1877
        %v1983 = vunpack.c.l.b16 %v1878
        %v1984 = vunpack.c.h.b16 %v1878
        %v1985 = vunpack.c.l.b16 %v1879
        %v1986 = vunpack.c.h.b16 %v1879
        %v1987 = vunpack.c.l.b16 %v1880
        %v1988 = vunpack.c.h.b16 %v1880
        %v1989 = vunpack.c.l.b16 %v1881
        %v1990 = vunpack.c.h.b16 %v1881
        %v1991 = vunpack.c.l.b16 %v1882
        %v1992 = vunpack.c.h.b16 %v1882
        %v1993 = vunpack.c.l.b16 %v1883
        %v1994 = vunpack.c.h.b16 %v1883
        %v1995 = vunpack.c.l.b16 %v1884
        %v1996 = vunpack.c.h.b16 %v1884
        %v1997 = vunpack.c.l.b16 %v1885
        %v1998 = vunpack.c.h.b16 %v1885
        %v1999 = vunpack.c.l.b16 %v1886
        %v2000 = vunpack.c.h.b16 %v1886
        %v2001 = vunpack.c.l.b16 %v1887
        %v2002 = vunpack.c.h.b16 %v1887
        %v2003 = vunpack.c.l.b16 %v1888
        %v2004 = vunpack.c.h.b16 %v1888
        %v2005 = vunpack.c.l.b16 %v1889
        %v2006 = vunpack.c.h.b16 %v1889
        %v2007 = vunpack.c.l.b16 %v1890
        %v2008 = vunpack.c.h.b16 %v1890
        %v2009 = vpack.c.b16 %v1949, %v1945
        %v2010 = vpack.c.b16 %v1950, %v1946
        %v2011 = vpack.c.b16 %v1951, %v1947
        %v2012 = vpack.c.b16 %v1952, %v1948
        %v2013 = vpack.c.b16 %v1957, %v1953
        %v2014 = vpack.c.b16 %v1958, %v1954
        %v2015 = vpack.c.b16 %v1959, %v1955
        %v2016 = vpack.c.b16 %v1960, %v1956
        %v2017 = vpack.c.b16 %v1965, %v1961
        %v2018 = vpack.c.b16 %v1966, %v1962
        %v2019 = vpack.c.b16 %v1967, %v1963
        %v2020 = vpack.c.b16 %v1968, %v1964
        %v2021 = vpack.c.b16 %v1973, %v1969
        %v2022 = vpack.c.b16 %v1974, %v1970
        %v2023 = vpack.c.b16 %v1975, %v1971
        %v2024 = vpack.c.b16 %v1976, %v1972
        %v2025 = vpack.c.b16 %v1981, %v1977
        %v2026 = vpack.c.b16 %v1982, %v1978
        %v2027 = vpack.c.b16 %v1983, %v1979
        %v2028 = vpack.c.b16 %v1984, %v1980
        %v2029 = vpack.c.b16 %v1989, %v1985
        %v2030 = vpack.c.b16 %v1990, %v1986
        %v2031 = vpack.c.b16 %v1991, %v1987
        %v2032 = vpack.c.b16 %v1992, %v1988
        %v2033 = vpack.c.b16 %v1997, %v1993
        %v2034 = vpack.c.b16 %v1998, %v1994
        %v2035 = vpack.c.b16 %v1999, %v1995
        %v2036 = vpack.c.b16 %v2000, %v1996
        %v2037 = vpack.c.b16 %v2005, %v2001
        %v2038 = vpack.c.b16 %v2006, %v2002
        %v2039 = vpack.c.b16 %v2007, %v2003
        %v2040 = vpack.c.b16 %v2008, %v2004
        %2073 = vmatprep.subr.bf16.mxu0 %v2010
        %2074 = vmatpush1.bf16.msra.mxu0 %v2009
        %2075 = vmatprep.subr.bf16.mxu0 %v2014
        %2076 = vmatpush1.bf16.msra.mxu0 %v2013
        %2077 = vmatprep.subr.bf16.mxu0 %v2018
        %2078 = vmatpush1.bf16.msra.mxu0 %v2017
        %2079 = vmatprep.subr.bf16.mxu0 %v2022
        %2080 = vmatpush1.bf16.msra.mxu0 %v2021
        %2081 = vmatprep.subr.bf16.mxu0 %v2026
        %2082 = vmatpush1.bf16.msra.mxu0 %v2025
        %2083 = vmatprep.subr.bf16.mxu0 %v2030
        %2084 = vmatpush1.bf16.msra.mxu0 %v2029
        %2085 = vmatprep.subr.bf16.mxu0 %v2034
        %2086 = vmatpush1.bf16.msra.mxu0 %v2033
        %2087 = vmatprep.subr.bf16.mxu0 %v2038
        %2088 = vmatpush1.bf16.msra.mxu0 %v2037
        %2089 = vmatprep.subr.bf16.mxu0 0
        %2090 = vmatpush1.bf16.msra.mxu0 0
        %2091 = vmatprep.subr.bf16.mxu0 0
        %2092 = vmatpush1.bf16.msra.mxu0 0
        %2093 = vmatprep.subr.bf16.mxu0 0
        %2094 = vmatpush1.bf16.msra.mxu0 0
        %2095 = vmatprep.subr.bf16.mxu0 0
        %2096 = vmatpush1.bf16.msra.mxu0 0
        %2097 = vmatprep.subr.bf16.mxu0 0
        %2098 = vmatpush1.bf16.msra.mxu0 0
        %2099 = vmatprep.subr.bf16.mxu0 0
        %2100 = vmatpush1.bf16.msra.mxu0 0
        %2101 = vmatprep.subr.bf16.mxu0 0
        %2102 = vmatpush1.bf16.msra.mxu0 0
        %2103 = vmatprep.subr.bf16.mxu0 0
        %2104 = vmatpush1.bf16.msra.mxu0 0
        %2105 = vmatprep.mubr.bf16.mxu0 0
        %2106 = vmatmul.mubr.bf16.gmra.mrb[0].mxu0 %v1858
        %v2107 = vpop.f32.mrb[0].mxu0
        %v2108 = vadd.f32 %v1896, %v2107
        %v2109 = vpop.f32.mrb[0].mxu0
        %v2110 = vadd.f32 %v1900, %v2109
        %v2111 = vpop.f32.mrb[0].mxu0
        %v2112 = vadd.f32 %v1896, %v2111
        %v2113 = vpop.f32.mrb[0].mxu0
        %v2114 = vadd.f32 %v1900, %v2113
        %2115 = vdwg.mxu0
        %2116 = vmatprep.subr.bf16.mxu0 %v2012
        %2117 = vmatpush1.bf16.msra.mxu0 %v2011
        %2118 = vmatprep.subr.bf16.mxu0 %v2016
        %2119 = vmatpush1.bf16.msra.mxu0 %v2015
        %2120 = vmatprep.subr.bf16.mxu0 %v2020
        %2121 = vmatpush1.bf16.msra.mxu0 %v2019
        %2122 = vmatprep.subr.bf16.mxu0 %v2024
        %2123 = vmatpush1.bf16.msra.mxu0 %v2023
        %2124 = vmatprep.subr.bf16.mxu0 %v2028
        %2125 = vmatpush1.bf16.msra.mxu0 %v2027
        %2126 = vmatprep.subr.bf16.mxu0 %v2032
        %2127 = vmatpush1.bf16.msra.mxu0 %v2031
        %2128 = vmatprep.subr.bf16.mxu0 %v2036
        %2129 = vmatpush1.bf16.msra.mxu0 %v2035
        %2130 = vmatprep.subr.bf16.mxu0 %v2040
        %2131 = vmatpush1.bf16.msra.mxu0 %v2039
        %2132 = vmatprep.subr.bf16.mxu0 0
        %2133 = vmatpush1.bf16.msra.mxu0 0
        %2134 = vmatprep.subr.bf16.mxu0 0
        %2135 = vmatpush1.bf16.msra.mxu0 0
        %2136 = vmatprep.subr.bf16.mxu0 0
        %2137 = vmatpush1.bf16.msra.mxu0 0
        %2138 = vmatprep.subr.bf16.mxu0 0
        %2139 = vmatpush1.bf16.msra.mxu0 0
        %2140 = vmatprep.subr.bf16.mxu0 0
        %2141 = vmatpush1.bf16.msra.mxu0 0
        %2142 = vmatprep.subr.bf16.mxu0 0
        %2143 = vmatpush1.bf16.msra.mxu0 0
        %2144 = vmatprep.subr.bf16.mxu0 0
        %2145 = vmatpush1.bf16.msra.mxu0 0
        %2146 = vmatprep.subr.bf16.mxu0 0
        %2147 = vmatpush1.bf16.msra.mxu0 0
        %2148 = vmatprep.mubr.bf16.mxu0 0
        %2149 = vmatmul.mubr.bf16.gmra.mrb[0].mxu0 %v1858
        %v2150 = vpop.f32.mrb[0].mxu0
        %v2151 = vadd.f32 %v1904, %v2150
        %v2152 = vpop.f32.mrb[0].mxu0
        %v2153 = vadd.f32 %v1908, %v2152
        %v2154 = vpop.f32.mrb[0].mxu0
        %v2155 = vadd.f32 %v1904, %v2154
        %v2156 = vpop.f32.mrb[0].mxu0
        %v2157 = vadd.f32 %v1908, %v2156
        %2158 = vdwg.mxu0
        %v2159 = vld [vmem:[#allocation7] sm:$0xff]
        %v2160 = vld [vmem:[#allocation7 + $0x8] sm:$0xff]
        %v2161 = vld [vmem:[#allocation7 + $0x10] sm:$0xff]
        %v2162 = vld [vmem:[#allocation7 + $0x18] sm:$0xff]
        %v2163 = vld [vmem:[#allocation7 + $0x20] sm:$0xff]
        %v2164 = vld [vmem:[#allocation7 + $0x28] sm:$0xff]
        %v2165 = vld [vmem:[#allocation7 + $0x30] sm:$0xff]
        %v2166 = vld [vmem:[#allocation7 + $0x38] sm:$0xff]
        %v2167 = vsub.f32 %v2108, %v2159
        %v2168 = vsub.f32 %v2110, %v2160
        %v2169 = vsub.f32 %v2151, %v2161
        %v2170 = vsub.f32 %v2153, %v2162
        %v2171 = vsub.f32 %v2112, %v2163
        %v2172 = vsub.f32 %v2114, %v2164
        %v2173 = vsub.f32 %v2155, %v2165
        %v2174 = vsub.f32 %v2157, %v2166
        %v2175 = vmul.f32 %v2167, 0.5
        %v2176 = vmul.f32 %v2168, 0.5
        %v2177 = vmul.f32 %v2169, 0.5
        %v2178 = vmul.f32 %v2170, 0.5
        %v2179 = vmul.f32 %v2171, 0.5
        %v2180 = vmul.f32 %v2172, 0.5
        %v2181 = vmul.f32 %v2173, 0.5
        %v2182 = vmul.f32 %v2174, 0.5
        %v2183 = vadd.f32 %v2159, %v2175
        %v2184 = vadd.f32 %v2160, %v2176
        %v2185 = vadd.f32 %v2161, %v2177
        %v2186 = vadd.f32 %v2162, %v2178
        %v2187 = vadd.f32 %v2163, %v2179
        %v2188 = vadd.f32 %v2164, %v2180
        %v2189 = vadd.f32 %v2165, %v2181
        %v2190 = vadd.f32 %v2166, %v2182
        %vm2191 = vcmp.ge.f32.partialorder %v2183, 1.0
        %vm2192 = vcmp.ge.f32.partialorder %v2184, 1.0
        %vm2193 = vcmp.ge.f32.partialorder %v2185, 1.0
        %vm2194 = vcmp.ge.f32.partialorder %v2186, 1.0
        %vm2195 = vcmp.ge.f32.partialorder %v2187, 1.0
        %vm2196 = vcmp.ge.f32.partialorder %v2188, 1.0
        %vm2197 = vcmp.ge.f32.partialorder %v2189, 1.0
        %vm2198 = vcmp.ge.f32.partialorder %v2190, 1.0
        %v2199 = vsel %vm2191, 0.0, %v2183
        %v2200 = vsel %vm2192, 0.0, %v2184
        %v2201 = vsel %vm2193, 0.0, %v2185
        %v2202 = vsel %vm2194, 0.0, %v2186
        %v2203 = vsel %vm2195, 0.0, %v2187
        %v2204 = vsel %vm2196, 0.0, %v2188
        %v2205 = vsel %vm2197, 0.0, %v2189
        %v2206 = vsel %vm2198, 0.0, %v2190
        %2207 = vst [vmem:[#allocation7] sm:$0xff] %v2199
        %2208 = vst [vmem:[#allocation7 + $0x8] sm:$0xff] %v2200
        %2209 = vst [vmem:[#allocation7 + $0x10] sm:$0xff] %v2201
        %2210 = vst [vmem:[#allocation7 + $0x18] sm:$0xff] %v2202
        %2211 = vst [vmem:[#allocation7 + $0x20] sm:$0xff] %v2203
        %2212 = vst [vmem:[#allocation7 + $0x28] sm:$0xff] %v2204
        %2213 = vst [vmem:[#allocation7 + $0x30] sm:$0xff] %v2205
        %2214 = vst [vmem:[#allocation7 + $0x38] sm:$0xff] %v2206
        %v2215 = vsel %vm2191, 1, 0
        %v2216 = vsel %vm2192, 1, 0
        %v2217 = vsel %vm2193, 1, 0
        %v2218 = vsel %vm2194, 1, 0
        %v2219 = vsel %vm2195, 1, 0
        %v2220 = vsel %vm2196, 1, 0
        %v2221 = vsel %vm2197, 1, 0
        %v2222 = vsel %vm2198, 1, 0
        %v2223 = vcvt.s32.f32 %v2215
        %v2224 = vcvt.s32.f32 %v2216
        %v2225 = vcvt.s32.f32 %v2217
        %v2226 = vcvt.s32.f32 %v2218
        %v2227 = vcvt.s32.f32 %v2219
        %v2228 = vcvt.s32.f32 %v2220
        %v2229 = vcvt.s32.f32 %v2221
        %v2230 = vcvt.s32.f32 %v2222
        %v2231 = vpack.c.bf16 %v2227, %v2223
        %v2232 = vpack.c.bf16 %v2228, %v2224
        %v2233 = vpack.c.bf16 %v2229, %v2225
        %v2234 = vpack.c.bf16 %v2230, %v2226
        %v2235 = vld [vmem:[#allocation21] sm:$0xf]
        %v2236 = vld [vmem:[#allocation21 + $0x4] sm:$0xf]
        %v2237 = vld [vmem:[#allocation21 + $0x8] sm:$0xf]
        %v2238 = vld [vmem:[#allocation21 + $0xc] sm:$0xf]
        %v2239 = vld [vmem:[#allocation21 + $0x10] sm:$0xf]
        %v2240 = vld [vmem:[#allocation21 + $0x14] sm:$0xf]
        %v2241 = vld [vmem:[#allocation21 + $0x18] sm:$0xf]
        %v2242 = vld [vmem:[#allocation21 + $0x1c] sm:$0xf]
        %v2243 = vld [vmem:[#allocation21 + $0x20] sm:$0xf]
        %v2244 = vld [vmem:[#allocation21 + $0x24] sm:$0xf]
        %v2245 = vld [vmem:[#allocation21 + $0x28] sm:$0xf]
        %v2246 = vld [vmem:[#allocation21 + $0x2c] sm:$0xf]
        %v2247 = vld [vmem:[#allocation21 + $0x30] sm:$0xf]
        %v2248 = vld [vmem:[#allocation21 + $0x34] sm:$0xf]
        %v2249 = vld [vmem:[#allocation21 + $0x38] sm:$0xf]
        %v2250 = vld [vmem:[#allocation21 + $0x3c] sm:$0xf]
        %v2251 = vld [vmem:[#allocation21 + $0x40] sm:$0xf]
        %v2252 = vld [vmem:[#allocation21 + $0x44] sm:$0xf]
        %v2253 = vld [vmem:[#allocation21 + $0x48] sm:$0xf]
        %v2254 = vld [vmem:[#allocation21 + $0x4c] sm:$0xf]
        %v2255 = vld [vmem:[#allocation21 + $0x50] sm:$0xf]
        %v2256 = vld [vmem:[#allocation21 + $0x54] sm:$0xf]
        %v2257 = vld [vmem:[#allocation21 + $0x58] sm:$0xf]
        %v2258 = vld [vmem:[#allocation21 + $0x5c] sm:$0xf]
        %v2259 = vld [vmem:[#allocation21 + $0x60] sm:$0xf]
        %v2260 = vld [vmem:[#allocation21 + $0x64] sm:$0xf]
        %v2261 = vld [vmem:[#allocation21 + $0x68] sm:$0xf]
        %v2262 = vld [vmem:[#allocation21 + $0x6c] sm:$0xf]
        %v2263 = vld [vmem:[#allocation21 + $0x70] sm:$0xf]
        %v2264 = vld [vmem:[#allocation21 + $0x74] sm:$0xf]
        %v2265 = vld [vmem:[#allocation21 + $0x78] sm:$0xf]
        %v2266 = vld [vmem:[#allocation21 + $0x7c] sm:$0xf]
        %v2267 = vld [vmem:[#allocation21 + $0x80] sm:$0xf]
        %v2268 = vld [vmem:[#allocation21 + $0x84] sm:$0xf]
        %v2269 = vld [vmem:[#allocation21 + $0x88] sm:$0xf]
        %v2270 = vld [vmem:[#allocation21 + $0x8c] sm:$0xf]
        %v2271 = vld [vmem:[#allocation21 + $0x90] sm:$0xf]
        %v2272 = vld [vmem:[#allocation21 + $0x94] sm:$0xf]
        %v2273 = vld [vmem:[#allocation21 + $0x98] sm:$0xf]
        %v2274 = vld [vmem:[#allocation21 + $0x9c] sm:$0xf]
        %v2275 = vld [vmem:[#allocation21 + $0xa0] sm:$0xf]
        %v2276 = vld [vmem:[#allocation21 + $0xa4] sm:$0xf]
        %v2277 = vld [vmem:[#allocation21 + $0xa8] sm:$0xf]
        %v2278 = vld [vmem:[#allocation21 + $0xac] sm:$0xf]
        %v2279 = vld [vmem:[#allocation21 + $0xb0] sm:$0xf]
        %v2280 = vld [vmem:[#allocation21 + $0xb4] sm:$0xf]
        %v2281 = vld [vmem:[#allocation21 + $0xb8] sm:$0xf]
        %v2282 = vld [vmem:[#allocation21 + $0xbc] sm:$0xf]
        %v2283 = vld [vmem:[#allocation21 + $0xc0] sm:$0xf]
        %v2284 = vld [vmem:[#allocation21 + $0xc4] sm:$0xf]
        %v2285 = vld [vmem:[#allocation21 + $0xc8] sm:$0xf]
        %v2286 = vld [vmem:[#allocation21 + $0xcc] sm:$0xf]
        %v2287 = vld [vmem:[#allocation21 + $0xd0] sm:$0xf]
        %v2288 = vld [vmem:[#allocation21 + $0xd4] sm:$0xf]
        %v2289 = vld [vmem:[#allocation21 + $0xd8] sm:$0xf]
        %v2290 = vld [vmem:[#allocation21 + $0xdc] sm:$0xf]
        %v2291 = vld [vmem:[#allocation21 + $0xe0] sm:$0xf]
        %v2292 = vld [vmem:[#allocation21 + $0xe4] sm:$0xf]
        %v2293 = vld [vmem:[#allocation21 + $0xe8] sm:$0xf]
        %v2294 = vld [vmem:[#allocation21 + $0xec] sm:$0xf]
        %v2295 = vld [vmem:[#allocation21 + $0xf0] sm:$0xf]
        %v2296 = vld [vmem:[#allocation21 + $0xf4] sm:$0xf]
        %v2297 = vld [vmem:[#allocation21 + $0xf8] sm:$0xf]
        %v2298 = vld [vmem:[#allocation21 + $0xfc] sm:$0xf]
        %v2299 = vld [vmem:[#allocation23] sm:$0x1]
        %v2301 = vlaneseq
        %v2302 = vshrl.u32 %v2301, 7
        %v2303 = vsub.s32 0, %v2302
        %v2304 = vrot.slane %v2299, %v2303
        %v2370 = vunpack.c.l.b16 %v2235
        %v2371 = vunpack.c.l.b16 %v2236
        %v2372 = vunpack.c.l.b16 %v2237
        %v2373 = vunpack.c.l.b16 %v2238
        %v2374 = vunpack.c.l.b16 %v2239
        %v2375 = vunpack.c.l.b16 %v2240
        %v2376 = vunpack.c.l.b16 %v2241
        %v2377 = vunpack.c.l.b16 %v2242
        %v2378 = vunpack.c.l.b16 %v2243
        %v2379 = vunpack.c.l.b16 %v2244
        %v2380 = vunpack.c.l.b16 %v2245
        %v2381 = vunpack.c.l.b16 %v2246
        %v2382 = vunpack.c.l.b16 %v2247
        %v2383 = vunpack.c.l.b16 %v2248
        %v2384 = vunpack.c.l.b16 %v2249
        %v2385 = vunpack.c.l.b16 %v2250
        %v2386 = vunpack.c.l.b16 %v2251
        %v2387 = vunpack.c.l.b16 %v2252
        %v2388 = vunpack.c.l.b16 %v2253
        %v2389 = vunpack.c.l.b16 %v2254
        %v2390 = vunpack.c.l.b16 %v2255
        %v2391 = vunpack.c.l.b16 %v2256
        %v2392 = vunpack.c.l.b16 %v2257
        %v2393 = vunpack.c.l.b16 %v2258
        %v2394 = vunpack.c.l.b16 %v2259
        %v2395 = vunpack.c.l.b16 %v2260
        %v2396 = vunpack.c.l.b16 %v2261
        %v2397 = vunpack.c.l.b16 %v2262
        %v2398 = vunpack.c.l.b16 %v2263
        %v2399 = vunpack.c.l.b16 %v2264
        %v2400 = vunpack.c.l.b16 %v2265
        %v2401 = vunpack.c.l.b16 %v2266
        %v2402 = vunpack.c.l.b16 %v2267
        %v2403 = vunpack.c.l.b16 %v2268
        %v2404 = vunpack.c.l.b16 %v2269
        %v2405 = vunpack.c.l.b16 %v2270
        %v2406 = vunpack.c.l.b16 %v2271
        %v2407 = vunpack.c.l.b16 %v2272
        %v2408 = vunpack.c.l.b16 %v2273
        %v2409 = vunpack.c.l.b16 %v2274
        %v2410 = vunpack.c.l.b16 %v2275
        %v2411 = vunpack.c.l.b16 %v2276
        %v2412 = vunpack.c.l.b16 %v2277
        %v2413 = vunpack.c.l.b16 %v2278
        %v2414 = vunpack.c.l.b16 %v2279
        %v2415 = vunpack.c.l.b16 %v2280
        %v2416 = vunpack.c.l.b16 %v2281
        %v2417 = vunpack.c.l.b16 %v2282
        %v2418 = vunpack.c.l.b16 %v2283
        %v2419 = vunpack.c.l.b16 %v2284
        %v2420 = vunpack.c.l.b16 %v2285
        %v2421 = vunpack.c.l.b16 %v2286
        %v2422 = vunpack.c.l.b16 %v2287
        %v2423 = vunpack.c.l.b16 %v2288
        %v2424 = vunpack.c.l.b16 %v2289
        %v2425 = vunpack.c.l.b16 %v2290
        %v2426 = vunpack.c.l.b16 %v2291
        %v2427 = vunpack.c.l.b16 %v2292
        %v2428 = vunpack.c.l.b16 %v2293
        %v2429 = vunpack.c.l.b16 %v2294
        %v2430 = vunpack.c.l.b16 %v2295
        %v2431 = vunpack.c.l.b16 %v2296
        %v2432 = vunpack.c.l.b16 %v2297
        %v2433 = vunpack.c.l.b16 %v2298
        %v2434 = vpack.c.b16 %v2371, %v2370
        %v2435 = vpack.c.b16 %v2373, %v2372
        %v2436 = vpack.c.b16 %v2375, %v2374
        %v2437 = vpack.c.b16 %v2377, %v2376
        %v2438 = vpack.c.b16 %v2379, %v2378
        %v2439 = vpack.c.b16 %v2381, %v2380
        %v2440 = vpack.c.b16 %v2383, %v2382
        %v2441 = vpack.c.b16 %v2385, %v2384
        %v2442 = vpack.c.b16 %v2387, %v2386
        %v2443 = vpack.c.b16 %v2389, %v2388
        %v2444 = vpack.c.b16 %v2391, %v2390
        %v2445 = vpack.c.b16 %v2393, %v2392
        %v2446 = vpack.c.b16 %v2395, %v2394
        %v2447 = vpack.c.b16 %v2397, %v2396
        %v2448 = vpack.c.b16 %v2399, %v2398
        %v2449 = vpack.c.b16 %v2401, %v2400
        %v2450 = vpack.c.b16 %v2403, %v2402
        %v2451 = vpack.c.b16 %v2405, %v2404
        %v2452 = vpack.c.b16 %v2407, %v2406
        %v2453 = vpack.c.b16 %v2409, %v2408
        %v2454 = vpack.c.b16 %v2411, %v2410
        %v2455 = vpack.c.b16 %v2413, %v2412
        %v2456 = vpack.c.b16 %v2415, %v2414
        %v2457 = vpack.c.b16 %v2417, %v2416
        %v2458 = vpack.c.b16 %v2419, %v2418
        %v2459 = vpack.c.b16 %v2421, %v2420
        %v2460 = vpack.c.b16 %v2423, %v2422
        %v2461 = vpack.c.b16 %v2425, %v2424
        %v2462 = vpack.c.b16 %v2427, %v2426
        %v2463 = vpack.c.b16 %v2429, %v2428
        %v2464 = vpack.c.b16 %v2431, %v2430
        %v2465 = vpack.c.b16 %v2433, %v2432
        %2498 = vmatprep.subr.bf16.mxu0 0
        %2499 = vmatpush1.bf16.msra.mxu0 %v2434
        %2500 = vmatprep.subr.bf16.mxu0 0
        %2501 = vmatpush1.bf16.msra.mxu0 %v2435
        %2502 = vmatprep.subr.bf16.mxu0 0
        %2503 = vmatpush1.bf16.msra.mxu0 %v2436
        %2504 = vmatprep.subr.bf16.mxu0 0
        %2505 = vmatpush1.bf16.msra.mxu0 %v2437
        %2506 = vmatprep.subr.bf16.mxu0 0
        %2507 = vmatpush1.bf16.msra.mxu0 %v2438
        %2508 = vmatprep.subr.bf16.mxu0 0
        %2509 = vmatpush1.bf16.msra.mxu0 %v2439
        %2510 = vmatprep.subr.bf16.mxu0 0
        %2511 = vmatpush1.bf16.msra.mxu0 %v2440
        %2512 = vmatprep.subr.bf16.mxu0 0
        %2513 = vmatpush1.bf16.msra.mxu0 %v2441
        %2514 = vmatprep.subr.bf16.mxu0 0
        %2515 = vmatpush1.bf16.msra.mxu0 %v2442
        %2516 = vmatprep.subr.bf16.mxu0 0
        %2517 = vmatpush1.bf16.msra.mxu0 %v2443
        %2518 = vmatprep.subr.bf16.mxu0 0
        %2519 = vmatpush1.bf16.msra.mxu0 %v2444
        %2520 = vmatprep.subr.bf16.mxu0 0
        %2521 = vmatpush1.bf16.msra.mxu0 %v2445
        %2522 = vmatprep.subr.bf16.mxu0 0
        %2523 = vmatpush1.bf16.msra.mxu0 %v2446
        %2524 = vmatprep.subr.bf16.mxu0 0
        %2525 = vmatpush1.bf16.msra.mxu0 %v2447
        %2526 = vmatprep.subr.bf16.mxu0 0
        %2527 = vmatpush1.bf16.msra.mxu0 %v2448
        %2528 = vmatprep.subr.bf16.mxu0 0
        %2529 = vmatpush1.bf16.msra.mxu0 %v2449
        %2530 = vmatprep.mubr.bf16.mxu0 %v2232
        %2531 = vmatmul.mubr.bf16.gmra.mrb[0].mxu0 %v2231
        %v2532 = vpop.f32.mrb[0].mxu0
        %v2533 = vadd.f32 %v2304, %v2532
        %v2534 = vpop.f32.mrb[0].mxu0
        %v2535 = vpop.f32.mrb[0].mxu0
        %v2536 = vadd.f32 %v2304, %v2535
        %v2537 = vpop.f32.mrb[0].mxu0
        %2538 = vdwg.mxu0
        %2539 = vmatprep.subr.bf16.mxu0 0
        %2540 = vmatpush1.bf16.msra.mxu0 %v2450
        %2541 = vmatprep.subr.bf16.mxu0 0
        %2542 = vmatpush1.bf16.msra.mxu0 %v2451
        %2543 = vmatprep.subr.bf16.mxu0 0
        %2544 = vmatpush1.bf16.msra.mxu0 %v2452
        %2545 = vmatprep.subr.bf16.mxu0 0
        %2546 = vmatpush1.bf16.msra.mxu0 %v2453
        %2547 = vmatprep.subr.bf16.mxu0 0
        %2548 = vmatpush1.bf16.msra.mxu0 %v2454
        %2549 = vmatprep.subr.bf16.mxu0 0
        %2550 = vmatpush1.bf16.msra.mxu0 %v2455
        %2551 = vmatprep.subr.bf16.mxu0 0
        %2552 = vmatpush1.bf16.msra.mxu0 %v2456
        %2553 = vmatprep.subr.bf16.mxu0 0
        %2554 = vmatpush1.bf16.msra.mxu0 %v2457
        %2555 = vmatprep.subr.bf16.mxu0 0
        %2556 = vmatpush1.bf16.msra.mxu0 %v2458
        %2557 = vmatprep.subr.bf16.mxu0 0
        %2558 = vmatpush1.bf16.msra.mxu0 %v2459
        %2559 = vmatprep.subr.bf16.mxu0 0
        %2560 = vmatpush1.bf16.msra.mxu0 %v2460
        %2561 = vmatprep.subr.bf16.mxu0 0
        %2562 = vmatpush1.bf16.msra.mxu0 %v2461
        %2563 = vmatprep.subr.bf16.mxu0 0
        %2564 = vmatpush1.bf16.msra.mxu0 %v2462
        %2565 = vmatprep.subr.bf16.mxu0 0
        %2566 = vmatpush1.bf16.msra.mxu0 %v2463
        %2567 = vmatprep.subr.bf16.mxu0 0
        %2568 = vmatpush1.bf16.msra.mxu0 %v2464
        %2569 = vmatprep.subr.bf16.mxu0 0
        %2570 = vmatpush1.bf16.msra.mxu0 %v2465
        %2571 = vmatprep.mubr.bf16.mxu0 %v2234
        %2572 = vmatmul.mubr.bf16.gmra.mrb[0].mxu0 %v2233
        %v2573 = vpop.f32.mrb[0].mxu0
        %v2574 = vadd.f32 %v2533, %v2573
        %v2575 = vpop.f32.mrb[0].mxu0
        %v2576 = vpop.f32.mrb[0].mxu0
        %v2577 = vadd.f32 %v2536, %v2576
        %v2578 = vpop.f32.mrb[0].mxu0
        %2579 = vdwg.mxu0
        %v2580 = vld [vmem:[#allocation8] sm:$0xff]
        %v2581 = vld [vmem:[#allocation8 + $0x8] sm:$0xff]
        %v2582 = vsub.f32 %v2574, %v2580
        %v2583 = vsub.f32 %v2577, %v2581
        %v2584 = vmul.f32 %v2582, 0.5
        %v2585 = vmul.f32 %v2583, 0.5
        %v2586 = vadd.f32 %v2580, %v2584
        %v2587 = vadd.f32 %v2581, %v2585
        %vm2588 = vcmp.ge.f32.partialorder %v2586, 1.0
        %vm2589 = vcmp.ge.f32.partialorder %v2587, 1.0
        %v2590 = vsel %vm2588, 0.0, %v2586
        %v2591 = vsel %vm2589, 0.0, %v2587
        %2592 = vst [vmem:[#allocation8] sm:$0xff] %v2590
        %2593 = vst [vmem:[#allocation8 + $0x8] sm:$0xff] %v2591
        %v2594 = vsel %vm2588, 1, 0
        %v2595 = vsel %vm2589, 1, 0
        %v2596 = vcvt.s32.f32 %v2594
        %v2597 = vcvt.s32.f32 %v2595
        %v2598 = vpack.c.bf16 %v2597, %v2596
        %v2599 = vunpack.c.l.bf16 %v2598
        %v2600 = vunpack.c.h.bf16 %v2598
        %v2601 = vadd.f32 %v1856, %v2599
        %v2602 = vadd.f32 %v1857, %v2600
        %2603 = vst [vmem:[%s476] sm:$0xff] %v2601
        %2604 = vst [vmem:[%s476 + $0x8] sm:$0xff] %v2602
        %s2605 = sand.u32 %s248, 1
        %s2606 = scalar_lea.sflag [#allocation11], %s2605
        %s2607 = sand.u32 %s248, 1
        %s2608 = smul.addr %s2607, 16
        %s2609 = scalar_lea.vmem [#allocation24], %s2608
        // Predicated region
        $region97: #{tpu_custom_call.1} parent=55 // pred_check
          %p2610 = pneg %p258
        $region98: #{tpu_custom_call.1} parent=55 // pred_check_branch
          %2612 = sbr.rel (%p2610) target = $region100
        $region99: #{tpu_custom_call.1} parent=55 // pred_region
          %s2614 = ssub.s32 256, 256
          %2615 = vsyncadd %s2606, %s2614
          %s2616 = smul.addr %s34, 2
          %s2617 = smul.addr %s35, 4
          %s2618 = sadd.s32 %s2616, %s2617
          %s2619 = smul.addr %s2618, 128
          %s2620 = scalar_lea.hbm %s9, %s2619
          %s2621 = sshll.u32 %s2609, 4
          %s2622 = int_to_ptr.vmem [resolvable:$true] %s2621
          %2627 = dma.vmem_to_hbm [thread:$0]  %s2622, 256, %s2620, %s2606, 128, 128, 8
        $region100: #{tpu_custom_call.1} parent=55 // pred_fallthru
          _
      $region56: #{tpu_custom_call.1} parent=5 // pred_fallthru
        _
      %p2628 = scmp.le.s32.totalorder 2, %s25
      // Predicated region
      $region101: #{tpu_custom_call.1} parent=5 // pred_check
        %p2629 = pneg %p2628
      $region102: #{tpu_custom_call.1} parent=5 // pred_check_branch
        %2631 = sbr.rel (%p2629) target = $region104
      $region103: #{tpu_custom_call.1} parent=5 // pred_region
        %s2632 = ssub.s32 %s25, 2
        // Predicated region
        $region105: #{tpu_custom_call.1} parent=103 // pred_check
          %p2633 = pneg %p264
        $region106: #{tpu_custom_call.1} parent=103 // pred_check_branch
          %2635 = sbr.rel (%p2633) target = $region108
        $region107: #{tpu_custom_call.1} parent=103 // pred_region
          %s2636 = sand.u32 %s249, 1
          %s2637 = scalar_lea.sflag [#allocation11], %s2636
          %s2638 = sand.u32 %s249, 1
          %s2639 = smul.addr %s2638, 16
          %s2640 = scalar_lea.vmem [#allocation24], %s2639
          %2641 = dma.done %s2637, 256
        $region108: #{tpu_custom_call.1} parent=103 // pred_fallthru
          _
      $region104: #{tpu_custom_call.1} parent=5 // pred_fallthru
        _
    $region6: #{tpu_custom_call.1} parent=1 // loop_footer
      %s29 = sadd.s32 1, %s25
    $region7: #{tpu_custom_call.1} parent=1 // loop_footer_branch
      %24 = sbr.rel target = $region3
    $region8: #{tpu_custom_call.1} parent=1 // loop_exit
      _
    %2642 = vsyncpa [#allocation10], 1
    %s2643 = scalar_lea.sflag [#allocation10], 1
    %2644 = vsyncpa %s2643, 1
    %2645 = vsyncpa [#allocation13], 1
    %2646 = vsyncpa [#allocation16], 1
    %2647 = vsyncpa [#allocation19], 1
    %2648 = vsyncpa [#allocation22], 1
    %2649 = vsyncpa [#allocation11], 1
    %s2650 = scalar_lea.sflag [#allocation11], 1
    %2651 = vsyncpa %s2650, 1

</llo_original>
